<compile_context>
chip_gen: v7x
topology: tpu7x:2x2x1
jax: 0.10.0
libtpu: 0.0.40
codegen_flags: <defaults>
</compile_context>

<pallas_src>
import functools
import math

import jax
import jax.numpy as jnp
from jax.experimental import pallas as pl
from jax.experimental.pallas import tpu as pltpu


# --------------------------- in-kernel helpers ---------------------------

def _layernorm(z, beta, gamma, eps):
    # Reference quirk: beta*(z-mean)/(std+eps)+gamma, unbiased std (N-1), eps on std.
    n = z.shape[-1]
    mean = jnp.mean(z, axis=-1, keepdims=True)
    d = z - mean
    std = jnp.sqrt(jnp.sum(d * d, axis=-1, keepdims=True) * (1.0 / (n - 1)))
    return beta * d * pl.reciprocal(std + eps, approx=True) + gamma


def _mha(q_full, k_full, v_full, num_heads, scale):
    # q_full: (Lq, D) f32, k_full/v_full: (Lk, D) f32.
    # Per-head attention (static unroll); head outputs are concatenated back into
    # a lane-dense (Lq, D) slab inside VMEM.  No mask: every attention call whose
    # output survives in the reference module passes mask=None.
    D = q_full.shape[-1]
    hd = D // num_heads
    outs = []
    for h in range(num_heads):
        qh = q_full[:, h * hd:(h + 1) * hd].astype(jnp.bfloat16)
        kh = k_full[:, h * hd:(h + 1) * hd].astype(jnp.bfloat16)
        vh = v_full[:, h * hd:(h + 1) * hd].astype(jnp.bfloat16)
        s = jax.lax.dot_general(
            qh, kh, (((1,), (1,)), ((), ())), preferred_element_type=jnp.float32
        ) * scale
        s = s - jnp.max(s, axis=-1, keepdims=True)
        e = jnp.exp(s)
        p = e * pl.reciprocal(jnp.sum(e, axis=-1, keepdims=True), approx=True)
        outs.append(
            jnp.dot(p.astype(jnp.bfloat16), vh, preferred_element_type=jnp.float32)
        )
    return jnp.concatenate(outs, axis=-1)          # (Lq, D), lane-dense


# --------------------------- fused encoder layer ---------------------------

def _encoder_layer_kernel(x_ref, wqkv_ref, bqkv_ref, wo_ref, bo_ref,
                          ln1_b_ref, ln1_g_ref,
                          w1_ref, b1_ref, w2_ref, b2_ref,
                          ln2_b_ref, ln2_g_ref,
                          o_ref, *, num_heads, eps):
    x = x_ref[0]                                   # (L, D) f32
    D = x.shape[-1]
    hd = D // num_heads

    # Fused Q/K/V projection (bf16 MXU operands, f32 accumulation).
    qkv = jnp.dot(x.astype(jnp.bfloat16), wqkv_ref[...],
                  preferred_element_type=jnp.float32) + bqkv_ref[...]
    ctx = _mha(qkv[:, 0:D], qkv[:, D:2 * D], qkv[:, 2 * D:3 * D],
               num_heads, 1.0 / math.sqrt(hd))
    attn = jnp.dot(ctx.astype(jnp.bfloat16), wo_ref[...],
                   preferred_element_type=jnp.float32) + bo_ref[...]

    x1 = _layernorm(x + attn, ln1_b_ref[...], ln1_g_ref[...], eps)

    # Point-wise feed-forward + residual LayerNorm.
    h = jnp.dot(x1.astype(jnp.bfloat16), w1_ref[...],
                preferred_element_type=jnp.float32) + b1_ref[...]
    h = jnp.maximum(h, 0.0)
    ffn = jnp.dot(h.astype(jnp.bfloat16), w2_ref[...],
                  preferred_element_type=jnp.float32) + b2_ref[...]
    o_ref[0] = _layernorm(x1 + ffn, ln2_b_ref[...], ln2_g_ref[...], eps)


def encoder_layer(p, x, *, num_heads, eps=1e-6):
    B, L, D = x.shape
    Dff = p["w1"].shape[1]
    full = lambda shape: pl.BlockSpec(shape, lambda b: (0, 0))
    return pl.pallas_call(
        functools.partial(_encoder_layer_kernel, num_heads=num_heads, eps=eps),
        out_shape=jax.ShapeDtypeStruct((B, L, D), jnp.float32),
        grid=(B,),
        in_specs=[
            pl.BlockSpec((1, L, D), lambda b: (b, 0, 0)),
            full((D, 3 * D)), full((1, 3 * D)),
            full((D, D)), full((1, D)),
            full((1, D)), full((1, D)),
            full((D, Dff)), full((1, Dff)),
            full((Dff, D)), full((1, D)),
            full((1, D)), full((1, D)),
        ],
        out_specs=pl.BlockSpec((1, L, D), lambda b: (b, 0, 0)),
        compiler_params=pltpu.CompilerParams(dimension_semantics=("parallel",)),
    )(x, p["wqkv"], p["bqkv"], p["wo"], p["bo"],
      p["ln1_beta"], p["ln1_gamma"],
      p["w1"], p["b1"], p["w2"], p["b2"],
      p["ln2_beta"], p["ln2_gamma"])


# --------------------------- fused decoder layer ---------------------------

def _decoder_layer_kernel(dec_ref, enc_ref,
                          wq_ref, bq_ref, wkv_ref, bkv_ref, wo_ref, bo_ref,
                          ln1_b_ref, ln1_g_ref, ln2_b_ref, ln2_g_ref,
                          w1_ref, b1_ref, w2_ref, b2_ref,
                          ln3_b_ref, ln3_g_ref,
                          o_ref, *, num_heads, eps):
    dec = dec_ref[0]                               # (Ld, D) f32
    enc = enc_ref[0]                               # (Le, D) f32
    D = dec.shape[-1]
    hd = D // num_heads

    # Reference bug preserved: the masked self-attention result is overwritten by
    # layernorm1(src + dec_input) with src == dec_input, so it is dead work and we
    # skip launching it (output is numerically identical, ~1/3 less decoder work).
    # The causal ShiftRightMask therefore never influences the output.
    x1 = _layernorm(dec + dec, ln1_b_ref[...], ln1_g_ref[...], eps)

    # Cross-attention: Q from decoder stream, fused K/V projection from encoder output.
    q = jnp.dot(x1.astype(jnp.bfloat16), wq_ref[...],
                preferred_element_type=jnp.float32) + bq_ref[...]
    kv = jnp.dot(enc.astype(jnp.bfloat16), wkv_ref[...],
                 preferred_element_type=jnp.float32) + bkv_ref[...]
    ctx = _mha(q, kv[:, 0:D], kv[:, D:2 * D], num_heads, 1.0 / math.sqrt(hd))
    cross = jnp.dot(ctx.astype(jnp.bfloat16), wo_ref[...],
                    preferred_element_type=jnp.float32) + bo_ref[...]

    x2 = _layernorm(x1 + cross, ln2_b_ref[...], ln2_g_ref[...], eps)

    h = jnp.dot(x2.astype(jnp.bfloat16), w1_ref[...],
                preferred_element_type=jnp.float32) + b1_ref[...]
    h = jnp.maximum(h, 0.0)
    ffn = jnp.dot(h.astype(jnp.bfloat16), w2_ref[...],
                  preferred_element_type=jnp.float32) + b2_ref[...]
    o_ref[0] = _layernorm(x2 + ffn, ln3_b_ref[...], ln3_g_ref[...], eps)


def decoder_layer(p, enc_output, dec_input, *, num_heads, eps=1e-6):
    B, Ld, D = dec_input.shape
    Le = enc_output.shape[1]
    Dff = p["w1"].shape[1]
    full = lambda shape: pl.BlockSpec(shape, lambda b: (0, 0))
    return pl.pallas_call(
        functools.partial(_decoder_layer_kernel, num_heads=num_heads, eps=eps),
        out_shape=jax.ShapeDtypeStruct((B, Ld, D), jnp.float32),
        grid=(B,),
        in_specs=[
            pl.BlockSpec((1, Ld, D), lambda b: (b, 0, 0)),
            pl.BlockSpec((1, Le, D), lambda b: (b, 0, 0)),
            full((D, D)), full((1, D)),
            full((D, 2 * D)), full((1, 2 * D)),
            full((D, D)), full((1, D)),
            full((1, D)), full((1, D)),
            full((1, D)), full((1, D)),
            full((D, Dff)), full((1, Dff)),
            full((Dff, D)), full((1, D)),
            full((1, D)), full((1, D)),
        ],
        out_specs=pl.BlockSpec((1, Ld, D), lambda b: (b, 0, 0)),
        compiler_params=pltpu.CompilerParams(dimension_semantics=("parallel",)),
    )(dec_input, enc_output,
      p["wq"], p["bq"], p["wkv"], p["bkv"], p["wo"], p["bo"],
      p["ln1_beta"], p["ln1_gamma"], p["ln2_beta"], p["ln2_gamma"],
      p["w1"], p["b1"], p["w2"], p["b2"],
      p["ln3_beta"], p["ln3_gamma"])


# --------------------------- full forward ---------------------------

def transformer_forward(params, enc_input, dec_input, *, num_heads,
                        num_encoder_layers, num_decoder_layers):
    # All encoder layers share one parameter set, all decoder layers another
    # (reference ModuleList reuses the same layer instance).
    x = enc_input
    for _ in range(num_encoder_layers):
        x = encoder_layer(params["enc"], x, num_heads=num_heads)
    enc_output = x

    dec = dec_input
    for _ in range(num_decoder_layers):
        dec = decoder_layer(params["dec"], enc_output, dec, num_heads=num_heads)
    return dec


# --------------------------- deterministic parameter init ---------------------------

def _init_linear(key, d_in, d_out):
    k1, k2 = jax.random.split(key)
    bound = 1.0 / math.sqrt(d_in)
    w = jax.random.uniform(k1, (d_in, d_out), jnp.float32, -bound, bound)
    b = jax.random.uniform(k2, (1, d_out), jnp.float32, -bound, bound)
    return w, b


def _init_ln(d_model):
    # beta = zeros, gamma = ones (as in the reference LayerNorm.__init__)
    return jnp.zeros((1, d_model), jnp.float32), jnp.ones((1, d_model), jnp.float32)


def init_encoder_layer_params(key, d_model, dim_feedforward):
    ks = jax.random.split(key, 6)
    wq, bq = _init_linear(ks[0], d_model, d_model)
    wk, bk = _init_linear(ks[1], d_model, d_model)
    wv, bv = _init_linear(ks[2], d_model, d_model)
    wo, bo = _init_linear(ks[3], d_model, d_model)
    w1, b1 = _init_linear(ks[4], d_model, dim_feedforward)
    w2, b2 = _init_linear(ks[5], dim_feedforward, d_model)
    ln1_b, ln1_g = _init_ln(d_model)
    ln2_b, ln2_g = _init_ln(d_model)
    return dict(
        wqkv=jnp.concatenate([wq, wk, wv], axis=1).astype(jnp.bfloat16),
        bqkv=jnp.concatenate([bq, bk, bv], axis=1),
        wo=wo.astype(jnp.bfloat16), bo=bo,
        ln1_beta=ln1_b, ln1_gamma=ln1_g,
        w1=w1.astype(jnp.bfloat16), b1=b1,
        w2=w2.astype(jnp.bfloat16), b2=b2,
        ln2_beta=ln2_b, ln2_gamma=ln2_g,
    )


def init_decoder_layer_params(key, d_model, dim_feedforward):
    # Note: the reference decoder's self-attention parameters are NOT initialized
    # here because its output is discarded by the module (it cannot affect the result).
    ks = jax.random.split(key, 6)
    wq, bq = _init_linear(ks[0], d_model, d_model)
    wk, bk = _init_linear(ks[1], d_model, d_model)
    wv, bv = _init_linear(ks[2], d_model, d_model)
    wo, bo = _init_linear(ks[3], d_model, d_model)
    w1, b1 = _init_linear(ks[4], d_model, dim_feedforward)
    w2, b2 = _init_linear(ks[5], dim_feedforward, d_model)
    ln1_b, ln1_g = _init_ln(d_model)
    ln2_b, ln2_g = _init_ln(d_model)
    ln3_b, ln3_g = _init_ln(d_model)
    return dict(
        wq=wq.astype(jnp.bfloat16), bq=bq,
        wkv=jnp.concatenate([wk, wv], axis=1).astype(jnp.bfloat16),
        bkv=jnp.concatenate([bk, bv], axis=1),
        wo=wo.astype(jnp.bfloat16), bo=bo,
        ln1_beta=ln1_b, ln1_gamma=ln1_g,
        ln2_beta=ln2_b, ln2_gamma=ln2_g,
        w1=w1.astype(jnp.bfloat16), b1=b1,
        w2=w2.astype(jnp.bfloat16), b2=b2,
        ln3_beta=ln3_b, ln3_gamma=ln3_g,
    )


def init_transformer_params(key, d_model, dim_feedforward):
    k_enc, k_dec = jax.random.split(key)
    return dict(
        enc=init_encoder_layer_params(k_enc, d_model, dim_feedforward),
        dec=init_decoder_layer_params(k_dec, d_model, dim_feedforward),
    )


# --------------------------- main ---------------------------

if __name__ == "__main__":
    B = 2            # batch
    L = 8            # sequence length (encoder and decoder sides)
    D_MODEL = 32     # d_model
    N_HEAD = 4       # num heads -> head_dim = 8
    D_FF = 64        # dim_feedforward (scaled down from 2048 default for a small run)
    NUM_ENC_LAYERS = 2
    NUM_DEC_LAYERS = 2

    key = jax.random.PRNGKey(0)
    k_enc_in, k_dec_in, k_params = jax.random.split(key, 3)
    enc_input = jax.random.normal(k_enc_in, (B, L, D_MODEL), jnp.float32)
    dec_input = jax.random.normal(k_dec_in, (B, L, D_MODEL), jnp.float32)

    params = init_transformer_params(k_params, D_MODEL, D_FF)

    fwd = jax.jit(
        functools.partial(
            transformer_forward,
            num_heads=N_HEAD,
            num_encoder_layers=NUM_ENC_LAYERS,
            num_decoder_layers=NUM_DEC_LAYERS,
        )
    )
    out = fwd(params, enc_input, dec_input)
    out = jax.block_until_ready(out)

    assert out.shape == (B, L, D_MODEL), out.shape
    assert bool(jnp.all(jnp.isfinite(out)))
    print("KERNEL_OK")
</pallas_src>

<mosaic_0001>
module attributes {stable_mosaic.version = 11 : i64} {
  func.func @_decoder_layer_kernel(%arg0: i32, %arg1: memref<1x8x32xf32, #tpu.memory_space<vmem>>, %arg2: memref<1x8x32xf32, #tpu.memory_space<vmem>>, %arg3: memref<32x32xbf16, #tpu.memory_space<vmem>>, %arg4: memref<1x32xf32, #tpu.memory_space<vmem>>, %arg5: memref<32x64xbf16, #tpu.memory_space<vmem>>, %arg6: memref<1x64xf32, #tpu.memory_space<vmem>>, %arg7: memref<32x32xbf16, #tpu.memory_space<vmem>>, %arg8: memref<1x32xf32, #tpu.memory_space<vmem>>, %arg9: memref<1x32xf32, #tpu.memory_space<vmem>>, %arg10: memref<1x32xf32, #tpu.memory_space<vmem>>, %arg11: memref<1x32xf32, #tpu.memory_space<vmem>>, %arg12: memref<1x32xf32, #tpu.memory_space<vmem>>, %arg13: memref<32x64xbf16, #tpu.memory_space<vmem>>, %arg14: memref<1x64xf32, #tpu.memory_space<vmem>>, %arg15: memref<64x32xbf16, #tpu.memory_space<vmem>>, %arg16: memref<1x32xf32, #tpu.memory_space<vmem>>, %arg17: memref<1x32xf32, #tpu.memory_space<vmem>>, %arg18: memref<1x32xf32, #tpu.memory_space<vmem>>, %arg19: memref<1x8x32xf32, #tpu.memory_space<vmem>>) attributes {dimension_semantics = [#tpu.dimension_semantics<parallel>], iteration_bounds = array<i64: 2>, scalar_prefetch = 0 : i64, scratch_operands = 0 : i64, tpu.core_type = #tpu.core_type<tc>, window_params = [{transform_indices = @transform_0, window_bounds = array<i64: 1, 8, 32>}, {transform_indices = @transform_1, window_bounds = array<i64: 1, 8, 32>}, {pipeline_mode = #tpu.pipeline_mode<synchronous>, transform_indices = @transform_2, window_bounds = array<i64: 32, 32>}, {pipeline_mode = #tpu.pipeline_mode<synchronous>, transform_indices = @transform_3, window_bounds = array<i64: 1, 32>}, {pipeline_mode = #tpu.pipeline_mode<synchronous>, transform_indices = @transform_4, window_bounds = array<i64: 32, 64>}, {pipeline_mode = #tpu.pipeline_mode<synchronous>, transform_indices = @transform_5, window_bounds = array<i64: 1, 64>}, {pipeline_mode = #tpu.pipeline_mode<synchronous>, transform_indices = @transform_6, window_bounds = array<i64: 32, 32>}, {pipeline_mode = #tpu.pipeline_mode<synchronous>, transform_indices = @transform_7, window_bounds = array<i64: 1, 32>}, {pipeline_mode = #tpu.pipeline_mode<synchronous>, transform_indices = @transform_8, window_bounds = array<i64: 1, 32>}, {pipeline_mode = #tpu.pipeline_mode<synchronous>, transform_indices = @transform_9, window_bounds = array<i64: 1, 32>}, {pipeline_mode = #tpu.pipeline_mode<synchronous>, transform_indices = @transform_10, window_bounds = array<i64: 1, 32>}, {pipeline_mode = #tpu.pipeline_mode<synchronous>, transform_indices = @transform_11, window_bounds = array<i64: 1, 32>}, {pipeline_mode = #tpu.pipeline_mode<synchronous>, transform_indices = @transform_12, window_bounds = array<i64: 32, 64>}, {pipeline_mode = #tpu.pipeline_mode<synchronous>, transform_indices = @transform_13, window_bounds = array<i64: 1, 64>}, {pipeline_mode = #tpu.pipeline_mode<synchronous>, transform_indices = @transform_14, window_bounds = array<i64: 64, 32>}, {pipeline_mode = #tpu.pipeline_mode<synchronous>, transform_indices = @transform_15, window_bounds = array<i64: 1, 32>}, {pipeline_mode = #tpu.pipeline_mode<synchronous>, transform_indices = @transform_16, window_bounds = array<i64: 1, 32>}, {pipeline_mode = #tpu.pipeline_mode<synchronous>, transform_indices = @transform_17, window_bounds = array<i64: 1, 32>}, {transform_indices = @transform_18, window_bounds = array<i64: 1, 8, 32>}]} {
    %c0 = arith.constant 0 : index
    %c0_0 = arith.constant 0 : index
    %c0_1 = arith.constant 0 : index
    %0 = vector.load %arg1[%c0, %c0_0, %c0_1] : memref<1x8x32xf32, #tpu.memory_space<vmem>>, vector<1x8x32xf32>
    %1 = vector.shape_cast %0 : vector<1x8x32xf32> to vector<8x32xf32>
    %c0_2 = arith.constant 0 : index
    %c0_3 = arith.constant 0 : index
    %c0_4 = arith.constant 0 : index
    %2 = vector.load %arg2[%c0_2, %c0_3, %c0_4] : memref<1x8x32xf32, #tpu.memory_space<vmem>>, vector<1x8x32xf32>
    %3 = vector.shape_cast %2 : vector<1x8x32xf32> to vector<8x32xf32>
    %4 = arith.addf %1, %1 : vector<8x32xf32>
    %c0_5 = arith.constant 0 : index
    %c0_6 = arith.constant 0 : index
    %5 = vector.load %arg9[%c0_5, %c0_6] : memref<1x32xf32, #tpu.memory_space<vmem>>, vector<1x32xf32>
    %c0_7 = arith.constant 0 : index
    %c0_8 = arith.constant 0 : index
    %6 = vector.load %arg10[%c0_7, %c0_8] : memref<1x32xf32, #tpu.memory_space<vmem>>, vector<1x32xf32>
    %cst = arith.constant dense<0.000000e+00> : vector<8xf32>
    %7 = vector.multi_reduction <add>, %4, %cst [1] : vector<8x32xf32> to vector<8xf32>
    %8 = vector.shape_cast %7 : vector<8xf32> to vector<8x1xf32>
    %cst_9 = arith.constant 3.200000e+01 : f32
    %9 = vector.broadcast %cst_9 : f32 to vector<8x1xf32>
    %10 = arith.divf %8, %9 : vector<8x1xf32>
    %11 = vector.broadcast %10 : vector<8x1xf32> to vector<8x32xf32>
    %12 = arith.subf %4, %11 : vector<8x32xf32>
    %13 = arith.mulf %12, %12 : vector<8x32xf32>
    %cst_10 = arith.constant dense<0.000000e+00> : vector<8xf32>
    %14 = vector.multi_reduction <add>, %13, %cst_10 [1] : vector<8x32xf32> to vector<8xf32>
    %15 = vector.shape_cast %14 : vector<8xf32> to vector<8x1xf32>
    %cst_11 = arith.constant 0.0322580636 : f32
    %16 = vector.broadcast %cst_11 : f32 to vector<8x1xf32>
    %17 = arith.mulf %15, %16 : vector<8x1xf32>
    %18 = math.sqrt %17 : vector<8x1xf32>
    %19 = vector.broadcast %5 : vector<1x32xf32> to vector<8x32xf32>
    %20 = arith.mulf %19, %12 : vector<8x32xf32>
    %cst_12 = arith.constant 9.99999997E-7 : f32
    %21 = vector.broadcast %cst_12 : f32 to vector<8x1xf32>
    %22 = arith.addf %18, %21 : vector<8x1xf32>
    %23 = tpu.reciprocal %22 {approx = true} : vector<8x1xf32> -> vector<8x1xf32>
    %24 = vector.broadcast %23 : vector<8x1xf32> to vector<8x32xf32>
    %25 = arith.mulf %20, %24 : vector<8x32xf32>
    %26 = vector.broadcast %6 : vector<1x32xf32> to vector<8x32xf32>
    %27 = arith.addf %25, %26 : vector<8x32xf32>
    %28 = arith.truncf %27 : vector<8x32xf32> to vector<8x32xbf16>
    %c0_13 = arith.constant 0 : index
    %c0_14 = arith.constant 0 : index
    %29 = vector.load %arg3[%c0_13, %c0_14] : memref<32x32xbf16, #tpu.memory_space<vmem>>, vector<32x32xbf16>
    %cst_15 = arith.constant dense<0.000000e+00> : vector<8x32xf32>
    %30 = tpu.matmul %28, %29, %cst_15 {dimension_numbers = #tpu.dot_dimension_numbers<[1], [0], [0], [1], [0, 0, 1, 1], [], []>} : vector<8x32xbf16>, vector<32x32xbf16>, vector<8x32xf32> -> vector<8x32xf32>
    %c0_16 = arith.constant 0 : index
    %c0_17 = arith.constant 0 : index
    %31 = vector.load %arg4[%c0_16, %c0_17] : memref<1x32xf32, #tpu.memory_space<vmem>>, vector<1x32xf32>
    %32 = vector.broadcast %31 : vector<1x32xf32> to vector<8x32xf32>
    %33 = arith.addf %30, %32 : vector<8x32xf32>
    %34 = arith.truncf %3 : vector<8x32xf32> to vector<8x32xbf16>
    %c0_18 = arith.constant 0 : index
    %c0_19 = arith.constant 0 : index
    %35 = vector.load %arg5[%c0_18, %c0_19] : memref<32x64xbf16, #tpu.memory_space<vmem>>, vector<32x64xbf16>
    %cst_20 = arith.constant dense<0.000000e+00> : vector<8x64xf32>
    %36 = tpu.matmul %34, %35, %cst_20 {dimension_numbers = #tpu.dot_dimension_numbers<[1], [0], [0], [1], [0, 0, 1, 1], [], []>} : vector<8x32xbf16>, vector<32x64xbf16>, vector<8x64xf32> -> vector<8x64xf32>
    %c0_21 = arith.constant 0 : index
    %c0_22 = arith.constant 0 : index
    %37 = vector.load %arg6[%c0_21, %c0_22] : memref<1x64xf32, #tpu.memory_space<vmem>>, vector<1x64xf32>
    %38 = vector.broadcast %37 : vector<1x64xf32> to vector<8x64xf32>
    %39 = arith.addf %36, %38 : vector<8x64xf32>
    %40 = vector.extract_strided_slice %39 {offsets = [0, 0], sizes = [8, 32], strides = [1, 1]} : vector<8x64xf32> to vector<8x32xf32>
    %41 = vector.extract_strided_slice %39 {offsets = [0, 32], sizes = [8, 32], strides = [1, 1]} : vector<8x64xf32> to vector<8x32xf32>
    %42 = vector.extract_strided_slice %33 {offsets = [0, 0], sizes = [8, 8], strides = [1, 1]} : vector<8x32xf32> to vector<8x8xf32>
    %43 = arith.truncf %42 : vector<8x8xf32> to vector<8x8xbf16>
    %44 = vector.extract_strided_slice %40 {offsets = [0, 0], sizes = [8, 8], strides = [1, 1]} : vector<8x32xf32> to vector<8x8xf32>
    %45 = arith.truncf %44 : vector<8x8xf32> to vector<8x8xbf16>
    %46 = vector.extract_strided_slice %41 {offsets = [0, 0], sizes = [8, 8], strides = [1, 1]} : vector<8x32xf32> to vector<8x8xf32>
    %47 = arith.truncf %46 : vector<8x8xf32> to vector<8x8xbf16>
    %cst_23 = arith.constant dense<0.000000e+00> : vector<8x8xf32>
    %48 = tpu.matmul %43, %45, %cst_23 {dimension_numbers = #tpu.dot_dimension_numbers<[1], [1], [0], [0], [0, 0, 1, 0], [], []>} : vector<8x8xbf16>, vector<8x8xbf16>, vector<8x8xf32> -> vector<8x8xf32>
    %cst_24 = arith.constant 0.353553385 : f32
    %49 = vector.broadcast %cst_24 : f32 to vector<8x8xf32>
    %50 = arith.mulf %48, %49 : vector<8x8xf32>
    %cst_25 = arith.constant dense<0xFF800000> : vector<8xf32>
    %51 = vector.multi_reduction <maximumf>, %50, %cst_25 [1] : vector<8x8xf32> to vector<8xf32>
    %52 = vector.shape_cast %51 : vector<8xf32> to vector<8x1xf32>
    %53 = vector.broadcast %52 : vector<8x1xf32> to vector<8x8xf32>
    %54 = arith.subf %50, %53 : vector<8x8xf32>
    %55 = math.exp %54 : vector<8x8xf32>
    %cst_26 = arith.constant dense<0.000000e+00> : vector<8xf32>
    %56 = vector.multi_reduction <add>, %55, %cst_26 [1] : vector<8x8xf32> to vector<8xf32>
    %57 = vector.shape_cast %56 : vector<8xf32> to vector<8x1xf32>
    %58 = tpu.reciprocal %57 {approx = true} : vector<8x1xf32> -> vector<8x1xf32>
    %59 = vector.broadcast %58 : vector<8x1xf32> to vector<8x8xf32>
    %60 = arith.mulf %55, %59 : vector<8x8xf32>
    %61 = arith.truncf %60 : vector<8x8xf32> to vector<8x8xbf16>
    %cst_27 = arith.constant dense<0.000000e+00> : vector<8x8xf32>
    %62 = tpu.matmul %61, %47, %cst_27 {dimension_numbers = #tpu.dot_dimension_numbers<[1], [0], [0], [1], [0, 0, 1, 1], [], []>} : vector<8x8xbf16>, vector<8x8xbf16>, vector<8x8xf32> -> vector<8x8xf32>
    %63 = vector.extract_strided_slice %33 {offsets = [0, 8], sizes = [8, 8], strides = [1, 1]} : vector<8x32xf32> to vector<8x8xf32>
    %64 = arith.truncf %63 : vector<8x8xf32> to vector<8x8xbf16>
    %65 = vector.extract_strided_slice %40 {offsets = [0, 8], sizes = [8, 8], strides = [1, 1]} : vector<8x32xf32> to vector<8x8xf32>
    %66 = arith.truncf %65 : vector<8x8xf32> to vector<8x8xbf16>
    %67 = vector.extract_strided_slice %41 {offsets = [0, 8], sizes = [8, 8], strides = [1, 1]} : vector<8x32xf32> to vector<8x8xf32>
    %68 = arith.truncf %67 : vector<8x8xf32> to vector<8x8xbf16>
    %cst_28 = arith.constant dense<0.000000e+00> : vector<8x8xf32>
    %69 = tpu.matmul %64, %66, %cst_28 {dimension_numbers = #tpu.dot_dimension_numbers<[1], [1], [0], [0], [0, 0, 1, 0], [], []>} : vector<8x8xbf16>, vector<8x8xbf16>, vector<8x8xf32> -> vector<8x8xf32>
    %cst_29 = arith.constant 0.353553385 : f32
    %70 = vector.broadcast %cst_29 : f32 to vector<8x8xf32>
    %71 = arith.mulf %69, %70 : vector<8x8xf32>
    %cst_30 = arith.constant dense<0xFF800000> : vector<8xf32>
    %72 = vector.multi_reduction <maximumf>, %71, %cst_30 [1] : vector<8x8xf32> to vector<8xf32>
    %73 = vector.shape_cast %72 : vector<8xf32> to vector<8x1xf32>
    %74 = vector.broadcast %73 : vector<8x1xf32> to vector<8x8xf32>
    %75 = arith.subf %71, %74 : vector<8x8xf32>
    %76 = math.exp %75 : vector<8x8xf32>
    %cst_31 = arith.constant dense<0.000000e+00> : vector<8xf32>
    %77 = vector.multi_reduction <add>, %76, %cst_31 [1] : vector<8x8xf32> to vector<8xf32>
    %78 = vector.shape_cast %77 : vector<8xf32> to vector<8x1xf32>
    %79 = tpu.reciprocal %78 {approx = true} : vector<8x1xf32> -> vector<8x1xf32>
    %80 = vector.broadcast %79 : vector<8x1xf32> to vector<8x8xf32>
    %81 = arith.mulf %76, %80 : vector<8x8xf32>
    %82 = arith.truncf %81 : vector<8x8xf32> to vector<8x8xbf16>
    %cst_32 = arith.constant dense<0.000000e+00> : vector<8x8xf32>
    %83 = tpu.matmul %82, %68, %cst_32 {dimension_numbers = #tpu.dot_dimension_numbers<[1], [0], [0], [1], [0, 0, 1, 1], [], []>} : vector<8x8xbf16>, vector<8x8xbf16>, vector<8x8xf32> -> vector<8x8xf32>
    %84 = vector.extract_strided_slice %33 {offsets = [0, 16], sizes = [8, 8], strides = [1, 1]} : vector<8x32xf32> to vector<8x8xf32>
    %85 = arith.truncf %84 : vector<8x8xf32> to vector<8x8xbf16>
    %86 = vector.extract_strided_slice %40 {offsets = [0, 16], sizes = [8, 8], strides = [1, 1]} : vector<8x32xf32> to vector<8x8xf32>
    %87 = arith.truncf %86 : vector<8x8xf32> to vector<8x8xbf16>
    %88 = vector.extract_strided_slice %41 {offsets = [0, 16], sizes = [8, 8], strides = [1, 1]} : vector<8x32xf32> to vector<8x8xf32>
    %89 = arith.truncf %88 : vector<8x8xf32> to vector<8x8xbf16>
    %cst_33 = arith.constant dense<0.000000e+00> : vector<8x8xf32>
    %90 = tpu.matmul %85, %87, %cst_33 {dimension_numbers = #tpu.dot_dimension_numbers<[1], [1], [0], [0], [0, 0, 1, 0], [], []>} : vector<8x8xbf16>, vector<8x8xbf16>, vector<8x8xf32> -> vector<8x8xf32>
    %cst_34 = arith.constant 0.353553385 : f32
    %91 = vector.broadcast %cst_34 : f32 to vector<8x8xf32>
    %92 = arith.mulf %90, %91 : vector<8x8xf32>
    %cst_35 = arith.constant dense<0xFF800000> : vector<8xf32>
    %93 = vector.multi_reduction <maximumf>, %92, %cst_35 [1] : vector<8x8xf32> to vector<8xf32>
    %94 = vector.shape_cast %93 : vector<8xf32> to vector<8x1xf32>
    %95 = vector.broadcast %94 : vector<8x1xf32> to vector<8x8xf32>
    %96 = arith.subf %92, %95 : vector<8x8xf32>
    %97 = math.exp %96 : vector<8x8xf32>
    %cst_36 = arith.constant dense<0.000000e+00> : vector<8xf32>
    %98 = vector.multi_reduction <add>, %97, %cst_36 [1] : vector<8x8xf32> to vector<8xf32>
    %99 = vector.shape_cast %98 : vector<8xf32> to vector<8x1xf32>
    %100 = tpu.reciprocal %99 {approx = true} : vector<8x1xf32> -> vector<8x1xf32>
    %101 = vector.broadcast %100 : vector<8x1xf32> to vector<8x8xf32>
    %102 = arith.mulf %97, %101 : vector<8x8xf32>
    %103 = arith.truncf %102 : vector<8x8xf32> to vector<8x8xbf16>
    %cst_37 = arith.constant dense<0.000000e+00> : vector<8x8xf32>
    %104 = tpu.matmul %103, %89, %cst_37 {dimension_numbers = #tpu.dot_dimension_numbers<[1], [0], [0], [1], [0, 0, 1, 1], [], []>} : vector<8x8xbf16>, vector<8x8xbf16>, vector<8x8xf32> -> vector<8x8xf32>
    %105 = vector.extract_strided_slice %33 {offsets = [0, 24], sizes = [8, 8], strides = [1, 1]} : vector<8x32xf32> to vector<8x8xf32>
    %106 = arith.truncf %105 : vector<8x8xf32> to vector<8x8xbf16>
    %107 = vector.extract_strided_slice %40 {offsets = [0, 24], sizes = [8, 8], strides = [1, 1]} : vector<8x32xf32> to vector<8x8xf32>
    %108 = arith.truncf %107 : vector<8x8xf32> to vector<8x8xbf16>
    %109 = vector.extract_strided_slice %41 {offsets = [0, 24], sizes = [8, 8], strides = [1, 1]} : vector<8x32xf32> to vector<8x8xf32>
    %110 = arith.truncf %109 : vector<8x8xf32> to vector<8x8xbf16>
    %cst_38 = arith.constant dense<0.000000e+00> : vector<8x8xf32>
    %111 = tpu.matmul %106, %108, %cst_38 {dimension_numbers = #tpu.dot_dimension_numbers<[1], [1], [0], [0], [0, 0, 1, 0], [], []>} : vector<8x8xbf16>, vector<8x8xbf16>, vector<8x8xf32> -> vector<8x8xf32>
    %cst_39 = arith.constant 0.353553385 : f32
    %112 = vector.broadcast %cst_39 : f32 to vector<8x8xf32>
    %113 = arith.mulf %111, %112 : vector<8x8xf32>
    %cst_40 = arith.constant dense<0xFF800000> : vector<8xf32>
    %114 = vector.multi_reduction <maximumf>, %113, %cst_40 [1] : vector<8x8xf32> to vector<8xf32>
    %115 = vector.shape_cast %114 : vector<8xf32> to vector<8x1xf32>
    %116 = vector.broadcast %115 : vector<8x1xf32> to vector<8x8xf32>
    %117 = arith.subf %113, %116 : vector<8x8xf32>
    %118 = math.exp %117 : vector<8x8xf32>
    %cst_41 = arith.constant dense<0.000000e+00> : vector<8xf32>
    %119 = vector.multi_reduction <add>, %118, %cst_41 [1] : vector<8x8xf32> to vector<8xf32>
    %120 = vector.shape_cast %119 : vector<8xf32> to vector<8x1xf32>
    %121 = tpu.reciprocal %120 {approx = true} : vector<8x1xf32> -> vector<8x1xf32>
    %122 = vector.broadcast %121 : vector<8x1xf32> to vector<8x8xf32>
    %123 = arith.mulf %118, %122 : vector<8x8xf32>
    %124 = arith.truncf %123 : vector<8x8xf32> to vector<8x8xbf16>
    %cst_42 = arith.constant dense<0.000000e+00> : vector<8x8xf32>
    %125 = tpu.matmul %124, %110, %cst_42 {dimension_numbers = #tpu.dot_dimension_numbers<[1], [0], [0], [1], [0, 0, 1, 1], [], []>} : vector<8x8xbf16>, vector<8x8xbf16>, vector<8x8xf32> -> vector<8x8xf32>
    %126 = tpu.concatenate %62, %83, %104, %125 in 1 : vector<8x8xf32>, vector<8x8xf32>, vector<8x8xf32>, vector<8x8xf32> -> vector<8x32xf32>
    %127 = arith.truncf %126 : vector<8x32xf32> to vector<8x32xbf16>
    %c0_43 = arith.constant 0 : index
    %c0_44 = arith.constant 0 : index
    %128 = vector.load %arg7[%c0_43, %c0_44] : memref<32x32xbf16, #tpu.memory_space<vmem>>, vector<32x32xbf16>
    %cst_45 = arith.constant dense<0.000000e+00> : vector<8x32xf32>
    %129 = tpu.matmul %127, %128, %cst_45 {dimension_numbers = #tpu.dot_dimension_numbers<[1], [0], [0], [1], [0, 0, 1, 1], [], []>} : vector<8x32xbf16>, vector<32x32xbf16>, vector<8x32xf32> -> vector<8x32xf32>
    %c0_46 = arith.constant 0 : index
    %c0_47 = arith.constant 0 : index
    %130 = vector.load %arg8[%c0_46, %c0_47] : memref<1x32xf32, #tpu.memory_space<vmem>>, vector<1x32xf32>
    %131 = vector.broadcast %130 : vector<1x32xf32> to vector<8x32xf32>
    %132 = arith.addf %129, %131 : vector<8x32xf32>
    %133 = arith.addf %27, %132 : vector<8x32xf32>
    %c0_48 = arith.constant 0 : index
    %c0_49 = arith.constant 0 : index
    %134 = vector.load %arg11[%c0_48, %c0_49] : memref<1x32xf32, #tpu.memory_space<vmem>>, vector<1x32xf32>
    %c0_50 = arith.constant 0 : index
    %c0_51 = arith.constant 0 : index
    %135 = vector.load %arg12[%c0_50, %c0_51] : memref<1x32xf32, #tpu.memory_space<vmem>>, vector<1x32xf32>
    %cst_52 = arith.constant dense<0.000000e+00> : vector<8xf32>
    %136 = vector.multi_reduction <add>, %133, %cst_52 [1] : vector<8x32xf32> to vector<8xf32>
    %137 = vector.shape_cast %136 : vector<8xf32> to vector<8x1xf32>
    %cst_53 = arith.constant 3.200000e+01 : f32
    %138 = vector.broadcast %cst_53 : f32 to vector<8x1xf32>
    %139 = arith.divf %137, %138 : vector<8x1xf32>
    %140 = vector.broadcast %139 : vector<8x1xf32> to vector<8x32xf32>
    %141 = arith.subf %133, %140 : vector<8x32xf32>
    %142 = arith.mulf %141, %141 : vector<8x32xf32>
    %cst_54 = arith.constant dense<0.000000e+00> : vector<8xf32>
    %143 = vector.multi_reduction <add>, %142, %cst_54 [1] : vector<8x32xf32> to vector<8xf32>
    %144 = vector.shape_cast %143 : vector<8xf32> to vector<8x1xf32>
    %cst_55 = arith.constant 0.0322580636 : f32
    %145 = vector.broadcast %cst_55 : f32 to vector<8x1xf32>
    %146 = arith.mulf %144, %145 : vector<8x1xf32>
    %147 = math.sqrt %146 : vector<8x1xf32>
    %148 = vector.broadcast %134 : vector<1x32xf32> to vector<8x32xf32>
    %149 = arith.mulf %148, %141 : vector<8x32xf32>
    %cst_56 = arith.constant 9.99999997E-7 : f32
    %150 = vector.broadcast %cst_56 : f32 to vector<8x1xf32>
    %151 = arith.addf %147, %150 : vector<8x1xf32>
    %152 = tpu.reciprocal %151 {approx = true} : vector<8x1xf32> -> vector<8x1xf32>
    %153 = vector.broadcast %152 : vector<8x1xf32> to vector<8x32xf32>
    %154 = arith.mulf %149, %153 : vector<8x32xf32>
    %155 = vector.broadcast %135 : vector<1x32xf32> to vector<8x32xf32>
    %156 = arith.addf %154, %155 : vector<8x32xf32>
    %157 = arith.truncf %156 : vector<8x32xf32> to vector<8x32xbf16>
    %c0_57 = arith.constant 0 : index
    %c0_58 = arith.constant 0 : index
    %158 = vector.load %arg13[%c0_57, %c0_58] : memref<32x64xbf16, #tpu.memory_space<vmem>>, vector<32x64xbf16>
    %cst_59 = arith.constant dense<0.000000e+00> : vector<8x64xf32>
    %159 = tpu.matmul %157, %158, %cst_59 {dimension_numbers = #tpu.dot_dimension_numbers<[1], [0], [0], [1], [0, 0, 1, 1], [], []>} : vector<8x32xbf16>, vector<32x64xbf16>, vector<8x64xf32> -> vector<8x64xf32>
    %c0_60 = arith.constant 0 : index
    %c0_61 = arith.constant 0 : index
    %160 = vector.load %arg14[%c0_60, %c0_61] : memref<1x64xf32, #tpu.memory_space<vmem>>, vector<1x64xf32>
    %161 = vector.broadcast %160 : vector<1x64xf32> to vector<8x64xf32>
    %162 = arith.addf %159, %161 : vector<8x64xf32>
    %cst_62 = arith.constant 0.000000e+00 : f32
    %163 = vector.broadcast %cst_62 : f32 to vector<8x64xf32>
    %164 = arith.maximumf %162, %163 : vector<8x64xf32>
    %165 = arith.truncf %164 : vector<8x64xf32> to vector<8x64xbf16>
    %c0_63 = arith.constant 0 : index
    %c0_64 = arith.constant 0 : index
    %166 = vector.load %arg15[%c0_63, %c0_64] : memref<64x32xbf16, #tpu.memory_space<vmem>>, vector<64x32xbf16>
    %cst_65 = arith.constant dense<0.000000e+00> : vector<8x32xf32>
    %167 = tpu.matmul %165, %166, %cst_65 {dimension_numbers = #tpu.dot_dimension_numbers<[1], [0], [0], [1], [0, 0, 1, 1], [], []>} : vector<8x64xbf16>, vector<64x32xbf16>, vector<8x32xf32> -> vector<8x32xf32>
    %c0_66 = arith.constant 0 : index
    %c0_67 = arith.constant 0 : index
    %168 = vector.load %arg16[%c0_66, %c0_67] : memref<1x32xf32, #tpu.memory_space<vmem>>, vector<1x32xf32>
    %169 = vector.broadcast %168 : vector<1x32xf32> to vector<8x32xf32>
    %170 = arith.addf %167, %169 : vector<8x32xf32>
    %171 = arith.addf %156, %170 : vector<8x32xf32>
    %c0_68 = arith.constant 0 : index
    %c0_69 = arith.constant 0 : index
    %172 = vector.load %arg17[%c0_68, %c0_69] : memref<1x32xf32, #tpu.memory_space<vmem>>, vector<1x32xf32>
    %c0_70 = arith.constant 0 : index
    %c0_71 = arith.constant 0 : index
    %173 = vector.load %arg18[%c0_70, %c0_71] : memref<1x32xf32, #tpu.memory_space<vmem>>, vector<1x32xf32>
    %cst_72 = arith.constant dense<0.000000e+00> : vector<8xf32>
    %174 = vector.multi_reduction <add>, %171, %cst_72 [1] : vector<8x32xf32> to vector<8xf32>
    %175 = vector.shape_cast %174 : vector<8xf32> to vector<8x1xf32>
    %cst_73 = arith.constant 3.200000e+01 : f32
    %176 = vector.broadcast %cst_73 : f32 to vector<8x1xf32>
    %177 = arith.divf %175, %176 : vector<8x1xf32>
    %178 = vector.broadcast %177 : vector<8x1xf32> to vector<8x32xf32>
    %179 = arith.subf %171, %178 : vector<8x32xf32>
    %180 = arith.mulf %179, %179 : vector<8x32xf32>
    %cst_74 = arith.constant dense<0.000000e+00> : vector<8xf32>
    %181 = vector.multi_reduction <add>, %180, %cst_74 [1] : vector<8x32xf32> to vector<8xf32>
    %182 = vector.shape_cast %181 : vector<8xf32> to vector<8x1xf32>
    %cst_75 = arith.constant 0.0322580636 : f32
    %183 = vector.broadcast %cst_75 : f32 to vector<8x1xf32>
    %184 = arith.mulf %182, %183 : vector<8x1xf32>
    %185 = math.sqrt %184 : vector<8x1xf32>
    %186 = vector.broadcast %172 : vector<1x32xf32> to vector<8x32xf32>
    %187 = arith.mulf %186, %179 : vector<8x32xf32>
    %cst_76 = arith.constant 9.99999997E-7 : f32
    %188 = vector.broadcast %cst_76 : f32 to vector<8x1xf32>
    %189 = arith.addf %185, %188 : vector<8x1xf32>
    %190 = tpu.reciprocal %189 {approx = true} : vector<8x1xf32> -> vector<8x1xf32>
    %191 = vector.broadcast %190 : vector<8x1xf32> to vector<8x32xf32>
    %192 = arith.mulf %187, %191 : vector<8x32xf32>
    %193 = vector.broadcast %173 : vector<1x32xf32> to vector<8x32xf32>
    %194 = arith.addf %192, %193 : vector<8x32xf32>
    %c0_77 = arith.constant 0 : index
    %c0_78 = arith.constant 0 : index
    %c0_79 = arith.constant 0 : index
    %195 = vector.load %arg19[%c0_77, %c0_78, %c0_79] : memref<1x8x32xf32, #tpu.memory_space<vmem>>, vector<1x8x32xf32>
    %196 = vector.shape_cast %195 : vector<1x8x32xf32> to vector<8x32xf32>
    %197 = vector.shape_cast %194 : vector<8x32xf32> to vector<1x8x32xf32>
    tpu.vector_store %arg19[%c0_77, %c0_78, %c0_79], %197 {strides = array<i32>} : memref<1x8x32xf32, #tpu.memory_space<vmem>>, vector<1x8x32xf32>,
    return
  }
  func.func @transform_0(%arg0: i32) -> (i32, i32, i32) {
    %c0_i32 = arith.constant 0 : i32
    %c0_i32_0 = arith.constant 0 : i32
    %c0_i32_1 = arith.constant 0 : i32
    return %arg0, %c0_i32, %c0_i32_0 : i32, i32, i32
  }
  func.func @transform_1(%arg0: i32) -> (i32, i32, i32) {
    %c0_i32 = arith.constant 0 : i32
    %c0_i32_0 = arith.constant 0 : i32
    %c0_i32_1 = arith.constant 0 : i32
    return %arg0, %c0_i32, %c0_i32_0 : i32, i32, i32
  }
  func.func @transform_2(%arg0: i32) -> (i32, i32) {
    %c0_i32 = arith.constant 0 : i32
    %c0_i32_0 = arith.constant 0 : i32
    %c0_i32_1 = arith.constant 0 : i32
    return %c0_i32, %c0_i32_0 : i32, i32
  }
  func.func @transform_3(%arg0: i32) -> (i32, i32) {
    %c0_i32 = arith.constant 0 : i32
    %c0_i32_0 = arith.constant 0 : i32
    %c0_i32_1 = arith.constant 0 : i32
    return %c0_i32, %c0_i32_0 : i32, i32
  }
  func.func @transform_4(%arg0: i32) -> (i32, i32) {
    %c0_i32 = arith.constant 0 : i32
    %c0_i32_0 = arith.constant 0 : i32
    %c0_i32_1 = arith.constant 0 : i32
    return %c0_i32, %c0_i32_0 : i32, i32
  }
  func.func @transform_5(%arg0: i32) -> (i32, i32) {
    %c0_i32 = arith.constant 0 : i32
    %c0_i32_0 = arith.constant 0 : i32
    %c0_i32_1 = arith.constant 0 : i32
    return %c0_i32, %c0_i32_0 : i32, i32
  }
  func.func @transform_6(%arg0: i32) -> (i32, i32) {
    %c0_i32 = arith.constant 0 : i32
    %c0_i32_0 = arith.constant 0 : i32
    %c0_i32_1 = arith.constant 0 : i32
    return %c0_i32, %c0_i32_0 : i32, i32
  }
  func.func @transform_7(%arg0: i32) -> (i32, i32) {
    %c0_i32 = arith.constant 0 : i32
    %c0_i32_0 = arith.constant 0 : i32
    %c0_i32_1 = arith.constant 0 : i32
    return %c0_i32, %c0_i32_0 : i32, i32
  }
  func.func @transform_8(%arg0: i32) -> (i32, i32) {
    %c0_i32 = arith.constant 0 : i32
    %c0_i32_0 = arith.constant 0 : i32
    %c0_i32_1 = arith.constant 0 : i32
    return %c0_i32, %c0_i32_0 : i32, i32
  }
  func.func @transform_9(%arg0: i32) -> (i32, i32) {
    %c0_i32 = arith.constant 0 : i32
    %c0_i32_0 = arith.constant 0 : i32
    %c0_i32_1 = arith.constant 0 : i32
    return %c0_i32, %c0_i32_0 : i32, i32
  }
  func.func @transform_10(%arg0: i32) -> (i32, i32) {
    %c0_i32 = arith.constant 0 : i32
    %c0_i32_0 = arith.constant 0 : i32
    %c0_i32_1 = arith.constant 0 : i32
    return %c0_i32, %c0_i32_0 : i32, i32
  }
  func.func @transform_11(%arg0: i32) -> (i32, i32) {
    %c0_i32 = arith.constant 0 : i32
    %c0_i32_0 = arith.constant 0 : i32
    %c0_i32_1 = arith.constant 0 : i32
    return %c0_i32, %c0_i32_0 : i32, i32
  }
  func.func @transform_12(%arg0: i32) -> (i32, i32) {
    %c0_i32 = arith.constant 0 : i32
    %c0_i32_0 = arith.constant 0 : i32
    %c0_i32_1 = arith.constant 0 : i32
    return %c0_i32, %c0_i32_0 : i32, i32
  }
  func.func @transform_13(%arg0: i32) -> (i32, i32) {
    %c0_i32 = arith.constant 0 : i32
    %c0_i32_0 = arith.constant 0 : i32
    %c0_i32_1 = arith.constant 0 : i32
    return %c0_i32, %c0_i32_0 : i32, i32
  }
  func.func @transform_14(%arg0: i32) -> (i32, i32) {
    %c0_i32 = arith.constant 0 : i32
    %c0_i32_0 = arith.constant 0 : i32
    %c0_i32_1 = arith.constant 0 : i32
    return %c0_i32, %c0_i32_0 : i32, i32
  }
  func.func @transform_15(%arg0: i32) -> (i32, i32) {
    %c0_i32 = arith.constant 0 : i32
    %c0_i32_0 = arith.constant 0 : i32
    %c0_i32_1 = arith.constant 0 : i32
    return %c0_i32, %c0_i32_0 : i32, i32
  }
  func.func @transform_16(%arg0: i32) -> (i32, i32) {
    %c0_i32 = arith.constant 0 : i32
    %c0_i32_0 = arith.constant 0 : i32
    %c0_i32_1 = arith.constant 0 : i32
    return %c0_i32, %c0_i32_0 : i32, i32
  }
  func.func @transform_17(%arg0: i32) -> (i32, i32) {
    %c0_i32 = arith.constant 0 : i32
    %c0_i32_0 = arith.constant 0 : i32
    %c0_i32_1 = arith.constant 0 : i32
    return %c0_i32, %c0_i32_0 : i32, i32
  }
  func.func @transform_18(%arg0: i32) -> (i32, i32, i32) {
    %c0_i32 = arith.constant 0 : i32
    %c0_i32_0 = arith.constant 0 : i32
    %c0_i32_1 = arith.constant 0 : i32
    return %arg0, %c0_i32, %c0_i32_0 : i32, i32, i32
  }
}

module attributes {stable_mosaic.version = 11 : i64} {
  func.func @_decoder_layer_kernel(%arg0: i32, %arg1: memref<1x8x32xf32, #tpu.memory_space<vmem>>, %arg2: memref<1x8x32xf32, #tpu.memory_space<vmem>>, %arg3: memref<32x32xbf16, #tpu.memory_space<vmem>>, %arg4: memref<1x32xf32, #tpu.memory_space<vmem>>, %arg5: memref<32x64xbf16, #tpu.memory_space<vmem>>, %arg6: memref<1x64xf32, #tpu.memory_space<vmem>>, %arg7: memref<32x32xbf16, #tpu.memory_space<vmem>>, %arg8: memref<1x32xf32, #tpu.memory_space<vmem>>, %arg9: memref<1x32xf32, #tpu.memory_space<vmem>>, %arg10: memref<1x32xf32, #tpu.memory_space<vmem>>, %arg11: memref<1x32xf32, #tpu.memory_space<vmem>>, %arg12: memref<1x32xf32, #tpu.memory_space<vmem>>, %arg13: memref<32x64xbf16, #tpu.memory_space<vmem>>, %arg14: memref<1x64xf32, #tpu.memory_space<vmem>>, %arg15: memref<64x32xbf16, #tpu.memory_space<vmem>>, %arg16: memref<1x32xf32, #tpu.memory_space<vmem>>, %arg17: memref<1x32xf32, #tpu.memory_space<vmem>>, %arg18: memref<1x32xf32, #tpu.memory_space<vmem>>, %arg19: memref<1x8x32xf32, #tpu.memory_space<vmem>>) attributes {dimension_semantics = [#tpu.dimension_semantics<parallel>], iteration_bounds = array<i64: 2>, scalar_prefetch = 0 : i64, scratch_operands = 0 : i64, tpu.core_type = #tpu.core_type<tc>, window_params = [{transform_indices = @transform_0, window_bounds = array<i64: 1, 8, 32>}, {transform_indices = @transform_1, window_bounds = array<i64: 1, 8, 32>}, {pipeline_mode = #tpu.pipeline_mode<synchronous>, transform_indices = @transform_2, window_bounds = array<i64: 32, 32>}, {pipeline_mode = #tpu.pipeline_mode<synchronous>, transform_indices = @transform_3, window_bounds = array<i64: 1, 32>}, {pipeline_mode = #tpu.pipeline_mode<synchronous>, transform_indices = @transform_4, window_bounds = array<i64: 32, 64>}, {pipeline_mode = #tpu.pipeline_mode<synchronous>, transform_indices = @transform_5, window_bounds = array<i64: 1, 64>}, {pipeline_mode = #tpu.pipeline_mode<synchronous>, transform_indices = @transform_6, window_bounds = array<i64: 32, 32>}, {pipeline_mode = #tpu.pipeline_mode<synchronous>, transform_indices = @transform_7, window_bounds = array<i64: 1, 32>}, {pipeline_mode = #tpu.pipeline_mode<synchronous>, transform_indices = @transform_8, window_bounds = array<i64: 1, 32>}, {pipeline_mode = #tpu.pipeline_mode<synchronous>, transform_indices = @transform_9, window_bounds = array<i64: 1, 32>}, {pipeline_mode = #tpu.pipeline_mode<synchronous>, transform_indices = @transform_10, window_bounds = array<i64: 1, 32>}, {pipeline_mode = #tpu.pipeline_mode<synchronous>, transform_indices = @transform_11, window_bounds = array<i64: 1, 32>}, {pipeline_mode = #tpu.pipeline_mode<synchronous>, transform_indices = @transform_12, window_bounds = array<i64: 32, 64>}, {pipeline_mode = #tpu.pipeline_mode<synchronous>, transform_indices = @transform_13, window_bounds = array<i64: 1, 64>}, {pipeline_mode = #tpu.pipeline_mode<synchronous>, transform_indices = @transform_14, window_bounds = array<i64: 64, 32>}, {pipeline_mode = #tpu.pipeline_mode<synchronous>, transform_indices = @transform_15, window_bounds = array<i64: 1, 32>}, {pipeline_mode = #tpu.pipeline_mode<synchronous>, transform_indices = @transform_16, window_bounds = array<i64: 1, 32>}, {pipeline_mode = #tpu.pipeline_mode<synchronous>, transform_indices = @transform_17, window_bounds = array<i64: 1, 32>}, {transform_indices = @transform_18, window_bounds = array<i64: 1, 8, 32>}]} {
    %c0 = arith.constant 0 : index
    %c0_0 = arith.constant 0 : index
    %c0_1 = arith.constant 0 : index
    %0 = vector.load %arg1[%c0, %c0_0, %c0_1] : memref<1x8x32xf32, #tpu.memory_space<vmem>>, vector<1x8x32xf32>
    %1 = vector.shape_cast %0 : vector<1x8x32xf32> to vector<8x32xf32>
    %c0_2 = arith.constant 0 : index
    %c0_3 = arith.constant 0 : index
    %c0_4 = arith.constant 0 : index
    %2 = vector.load %arg2[%c0_2, %c0_3, %c0_4] : memref<1x8x32xf32, #tpu.memory_space<vmem>>, vector<1x8x32xf32>
    %3 = vector.shape_cast %2 : vector<1x8x32xf32> to vector<8x32xf32>
    %4 = arith.addf %1, %1 : vector<8x32xf32>
    %c0_5 = arith.constant 0 : index
    %c0_6 = arith.constant 0 : index
    %5 = vector.load %arg9[%c0_5, %c0_6] : memref<1x32xf32, #tpu.memory_space<vmem>>, vector<1x32xf32>
    %c0_7 = arith.constant 0 : index
    %c0_8 = arith.constant 0 : index
    %6 = vector.load %arg10[%c0_7, %c0_8] : memref<1x32xf32, #tpu.memory_space<vmem>>, vector<1x32xf32>
    %cst = arith.constant dense<0.000000e+00> : vector<8xf32>
    %7 = vector.multi_reduction <add>, %4, %cst [1] : vector<8x32xf32> to vector<8xf32>
    %8 = vector.shape_cast %7 : vector<8xf32> to vector<8x1xf32>
    %cst_9 = arith.constant 3.200000e+01 : f32
    %9 = vector.broadcast %cst_9 : f32 to vector<8x1xf32>
    %10 = arith.divf %8, %9 : vector<8x1xf32>
    %11 = vector.broadcast %10 : vector<8x1xf32> to vector<8x32xf32>
    %12 = arith.subf %4, %11 : vector<8x32xf32>
    %13 = arith.mulf %12, %12 : vector<8x32xf32>
    %cst_10 = arith.constant dense<0.000000e+00> : vector<8xf32>
    %14 = vector.multi_reduction <add>, %13, %cst_10 [1] : vector<8x32xf32> to vector<8xf32>
    %15 = vector.shape_cast %14 : vector<8xf32> to vector<8x1xf32>
    %cst_11 = arith.constant 0.0322580636 : f32
    %16 = vector.broadcast %cst_11 : f32 to vector<8x1xf32>
    %17 = arith.mulf %15, %16 : vector<8x1xf32>
    %18 = math.sqrt %17 : vector<8x1xf32>
    %19 = vector.broadcast %5 : vector<1x32xf32> to vector<8x32xf32>
    %20 = arith.mulf %19, %12 : vector<8x32xf32>
    %cst_12 = arith.constant 9.99999997E-7 : f32
    %21 = vector.broadcast %cst_12 : f32 to vector<8x1xf32>
    %22 = arith.addf %18, %21 : vector<8x1xf32>
    %23 = tpu.reciprocal %22 {approx = true} : vector<8x1xf32> -> vector<8x1xf32>
    %24 = vector.broadcast %23 : vector<8x1xf32> to vector<8x32xf32>
    %25 = arith.mulf %20, %24 : vector<8x32xf32>
    %26 = vector.broadcast %6 : vector<1x32xf32> to vector<8x32xf32>
    %27 = arith.addf %25, %26 : vector<8x32xf32>
    %28 = arith.truncf %27 : vector<8x32xf32> to vector<8x32xbf16>
    %c0_13 = arith.constant 0 : index
    %c0_14 = arith.constant 0 : index
    %29 = vector.load %arg3[%c0_13, %c0_14] : memref<32x32xbf16, #tpu.memory_space<vmem>>, vector<32x32xbf16>
    %cst_15 = arith.constant dense<0.000000e+00> : vector<8x32xf32>
    %30 = tpu.matmul %28, %29, %cst_15 {dimension_numbers = #tpu.dot_dimension_numbers<[1], [0], [0], [1], [0, 0, 1, 1], [], []>} : vector<8x32xbf16>, vector<32x32xbf16>, vector<8x32xf32> -> vector<8x32xf32>
    %c0_16 = arith.constant 0 : index
    %c0_17 = arith.constant 0 : index
    %31 = vector.load %arg4[%c0_16, %c0_17] : memref<1x32xf32, #tpu.memory_space<vmem>>, vector<1x32xf32>
    %32 = vector.broadcast %31 : vector<1x32xf32> to vector<8x32xf32>
    %33 = arith.addf %30, %32 : vector<8x32xf32>
    %34 = arith.truncf %3 : vector<8x32xf32> to vector<8x32xbf16>
    %c0_18 = arith.constant 0 : index
    %c0_19 = arith.constant 0 : index
    %35 = vector.load %arg5[%c0_18, %c0_19] : memref<32x64xbf16, #tpu.memory_space<vmem>>, vector<32x64xbf16>
    %cst_20 = arith.constant dense<0.000000e+00> : vector<8x64xf32>
    %36 = tpu.matmul %34, %35, %cst_20 {dimension_numbers = #tpu.dot_dimension_numbers<[1], [0], [0], [1], [0, 0, 1, 1], [], []>} : vector<8x32xbf16>, vector<32x64xbf16>, vector<8x64xf32> -> vector<8x64xf32>
    %c0_21 = arith.constant 0 : index
    %c0_22 = arith.constant 0 : index
    %37 = vector.load %arg6[%c0_21, %c0_22] : memref<1x64xf32, #tpu.memory_space<vmem>>, vector<1x64xf32>
    %38 = vector.broadcast %37 : vector<1x64xf32> to vector<8x64xf32>
    %39 = arith.addf %36, %38 : vector<8x64xf32>
    %40 = vector.extract_strided_slice %39 {offsets = [0, 0], sizes = [8, 32], strides = [1, 1]} : vector<8x64xf32> to vector<8x32xf32>
    %41 = vector.extract_strided_slice %39 {offsets = [0, 32], sizes = [8, 32], strides = [1, 1]} : vector<8x64xf32> to vector<8x32xf32>
    %42 = vector.extract_strided_slice %33 {offsets = [0, 0], sizes = [8, 8], strides = [1, 1]} : vector<8x32xf32> to vector<8x8xf32>
    %43 = arith.truncf %42 : vector<8x8xf32> to vector<8x8xbf16>
    %44 = vector.extract_strided_slice %40 {offsets = [0, 0], sizes = [8, 8], strides = [1, 1]} : vector<8x32xf32> to vector<8x8xf32>
    %45 = arith.truncf %44 : vector<8x8xf32> to vector<8x8xbf16>
    %46 = vector.extract_strided_slice %41 {offsets = [0, 0], sizes = [8, 8], strides = [1, 1]} : vector<8x32xf32> to vector<8x8xf32>
    %47 = arith.truncf %46 : vector<8x8xf32> to vector<8x8xbf16>
    %cst_23 = arith.constant dense<0.000000e+00> : vector<8x8xf32>
    %48 = tpu.matmul %43, %45, %cst_23 {dimension_numbers = #tpu.dot_dimension_numbers<[1], [1], [0], [0], [0, 0, 1, 0], [], []>} : vector<8x8xbf16>, vector<8x8xbf16>, vector<8x8xf32> -> vector<8x8xf32>
    %cst_24 = arith.constant 0.353553385 : f32
    %49 = vector.broadcast %cst_24 : f32 to vector<8x8xf32>
    %50 = arith.mulf %48, %49 : vector<8x8xf32>
    %cst_25 = arith.constant dense<0xFF800000> : vector<8xf32>
    %51 = vector.multi_reduction <maximumf>, %50, %cst_25 [1] : vector<8x8xf32> to vector<8xf32>
    %52 = vector.shape_cast %51 : vector<8xf32> to vector<8x1xf32>
    %53 = vector.broadcast %52 : vector<8x1xf32> to vector<8x8xf32>
    %54 = arith.subf %50, %53 : vector<8x8xf32>
    %55 = math.exp %54 : vector<8x8xf32>
    %cst_26 = arith.constant dense<0.000000e+00> : vector<8xf32>
    %56 = vector.multi_reduction <add>, %55, %cst_26 [1] : vector<8x8xf32> to vector<8xf32>
    %57 = vector.shape_cast %56 : vector<8xf32> to vector<8x1xf32>
    %58 = tpu.reciprocal %57 {approx = true} : vector<8x1xf32> -> vector<8x1xf32>
    %59 = vector.broadcast %58 : vector<8x1xf32> to vector<8x8xf32>
    %60 = arith.mulf %55, %59 : vector<8x8xf32>
    %61 = arith.truncf %60 : vector<8x8xf32> to vector<8x8xbf16>
    %cst_27 = arith.constant dense<0.000000e+00> : vector<8x8xf32>
    %62 = tpu.matmul %61, %47, %cst_27 {dimension_numbers = #tpu.dot_dimension_numbers<[1], [0], [0], [1], [0, 0, 1, 1], [], []>} : vector<8x8xbf16>, vector<8x8xbf16>, vector<8x8xf32> -> vector<8x8xf32>
    %63 = vector.extract_strided_slice %33 {offsets = [0, 8], sizes = [8, 8], strides = [1, 1]} : vector<8x32xf32> to vector<8x8xf32>
    %64 = arith.truncf %63 : vector<8x8xf32> to vector<8x8xbf16>
    %65 = vector.extract_strided_slice %40 {offsets = [0, 8], sizes = [8, 8], strides = [1, 1]} : vector<8x32xf32> to vector<8x8xf32>
    %66 = arith.truncf %65 : vector<8x8xf32> to vector<8x8xbf16>
    %67 = vector.extract_strided_slice %41 {offsets = [0, 8], sizes = [8, 8], strides = [1, 1]} : vector<8x32xf32> to vector<8x8xf32>
    %68 = arith.truncf %67 : vector<8x8xf32> to vector<8x8xbf16>
    %cst_28 = arith.constant dense<0.000000e+00> : vector<8x8xf32>
    %69 = tpu.matmul %64, %66, %cst_28 {dimension_numbers = #tpu.dot_dimension_numbers<[1], [1], [0], [0], [0, 0, 1, 0], [], []>} : vector<8x8xbf16>, vector<8x8xbf16>, vector<8x8xf32> -> vector<8x8xf32>
    %cst_29 = arith.constant 0.353553385 : f32
    %70 = vector.broadcast %cst_29 : f32 to vector<8x8xf32>
    %71 = arith.mulf %69, %70 : vector<8x8xf32>
    %cst_30 = arith.constant dense<0xFF800000> : vector<8xf32>
    %72 = vector.multi_reduction <maximumf>, %71, %cst_30 [1] : vector<8x8xf32> to vector<8xf32>
    %73 = vector.shape_cast %72 : vector<8xf32> to vector<8x1xf32>
    %74 = vector.broadcast %73 : vector<8x1xf32> to vector<8x8xf32>
    %75 = arith.subf %71, %74 : vector<8x8xf32>
    %76 = math.exp %75 : vector<8x8xf32>
    %cst_31 = arith.constant dense<0.000000e+00> : vector<8xf32>
    %77 = vector.multi_reduction <add>, %76, %cst_31 [1] : vector<8x8xf32> to vector<8xf32>
    %78 = vector.shape_cast %77 : vector<8xf32> to vector<8x1xf32>
    %79 = tpu.reciprocal %78 {approx = true} : vector<8x1xf32> -> vector<8x1xf32>
    %80 = vector.broadcast %79 : vector<8x1xf32> to vector<8x8xf32>
    %81 = arith.mulf %76, %80 : vector<8x8xf32>
    %82 = arith.truncf %81 : vector<8x8xf32> to vector<8x8xbf16>
    %cst_32 = arith.constant dense<0.000000e+00> : vector<8x8xf32>
    %83 = tpu.matmul %82, %68, %cst_32 {dimension_numbers = #tpu.dot_dimension_numbers<[1], [0], [0], [1], [0, 0, 1, 1], [], []>} : vector<8x8xbf16>, vector<8x8xbf16>, vector<8x8xf32> -> vector<8x8xf32>
    %84 = vector.extract_strided_slice %33 {offsets = [0, 16], sizes = [8, 8], strides = [1, 1]} : vector<8x32xf32> to vector<8x8xf32>
    %85 = arith.truncf %84 : vector<8x8xf32> to vector<8x8xbf16>
    %86 = vector.extract_strided_slice %40 {offsets = [0, 16], sizes = [8, 8], strides = [1, 1]} : vector<8x32xf32> to vector<8x8xf32>
    %87 = arith.truncf %86 : vector<8x8xf32> to vector<8x8xbf16>
    %88 = vector.extract_strided_slice %41 {offsets = [0, 16], sizes = [8, 8], strides = [1, 1]} : vector<8x32xf32> to vector<8x8xf32>
    %89 = arith.truncf %88 : vector<8x8xf32> to vector<8x8xbf16>
    %cst_33 = arith.constant dense<0.000000e+00> : vector<8x8xf32>
    %90 = tpu.matmul %85, %87, %cst_33 {dimension_numbers = #tpu.dot_dimension_numbers<[1], [1], [0], [0], [0, 0, 1, 0], [], []>} : vector<8x8xbf16>, vector<8x8xbf16>, vector<8x8xf32> -> vector<8x8xf32>
    %cst_34 = arith.constant 0.353553385 : f32
    %91 = vector.broadcast %cst_34 : f32 to vector<8x8xf32>
    %92 = arith.mulf %90, %91 : vector<8x8xf32>
    %cst_35 = arith.constant dense<0xFF800000> : vector<8xf32>
    %93 = vector.multi_reduction <maximumf>, %92, %cst_35 [1] : vector<8x8xf32> to vector<8xf32>
    %94 = vector.shape_cast %93 : vector<8xf32> to vector<8x1xf32>
    %95 = vector.broadcast %94 : vector<8x1xf32> to vector<8x8xf32>
    %96 = arith.subf %92, %95 : vector<8x8xf32>
    %97 = math.exp %96 : vector<8x8xf32>
    %cst_36 = arith.constant dense<0.000000e+00> : vector<8xf32>
    %98 = vector.multi_reduction <add>, %97, %cst_36 [1] : vector<8x8xf32> to vector<8xf32>
    %99 = vector.shape_cast %98 : vector<8xf32> to vector<8x1xf32>
    %100 = tpu.reciprocal %99 {approx = true} : vector<8x1xf32> -> vector<8x1xf32>
    %101 = vector.broadcast %100 : vector<8x1xf32> to vector<8x8xf32>
    %102 = arith.mulf %97, %101 : vector<8x8xf32>
    %103 = arith.truncf %102 : vector<8x8xf32> to vector<8x8xbf16>
    %cst_37 = arith.constant dense<0.000000e+00> : vector<8x8xf32>
    %104 = tpu.matmul %103, %89, %cst_37 {dimension_numbers = #tpu.dot_dimension_numbers<[1], [0], [0], [1], [0, 0, 1, 1], [], []>} : vector<8x8xbf16>, vector<8x8xbf16>, vector<8x8xf32> -> vector<8x8xf32>
    %105 = vector.extract_strided_slice %33 {offsets = [0, 24], sizes = [8, 8], strides = [1, 1]} : vector<8x32xf32> to vector<8x8xf32>
    %106 = arith.truncf %105 : vector<8x8xf32> to vector<8x8xbf16>
    %107 = vector.extract_strided_slice %40 {offsets = [0, 24], sizes = [8, 8], strides = [1, 1]} : vector<8x32xf32> to vector<8x8xf32>
    %108 = arith.truncf %107 : vector<8x8xf32> to vector<8x8xbf16>
    %109 = vector.extract_strided_slice %41 {offsets = [0, 24], sizes = [8, 8], strides = [1, 1]} : vector<8x32xf32> to vector<8x8xf32>
    %110 = arith.truncf %109 : vector<8x8xf32> to vector<8x8xbf16>
    %cst_38 = arith.constant dense<0.000000e+00> : vector<8x8xf32>
    %111 = tpu.matmul %106, %108, %cst_38 {dimension_numbers = #tpu.dot_dimension_numbers<[1], [1], [0], [0], [0, 0, 1, 0], [], []>} : vector<8x8xbf16>, vector<8x8xbf16>, vector<8x8xf32> -> vector<8x8xf32>
    %cst_39 = arith.constant 0.353553385 : f32
    %112 = vector.broadcast %cst_39 : f32 to vector<8x8xf32>
    %113 = arith.mulf %111, %112 : vector<8x8xf32>
    %cst_40 = arith.constant dense<0xFF800000> : vector<8xf32>
    %114 = vector.multi_reduction <maximumf>, %113, %cst_40 [1] : vector<8x8xf32> to vector<8xf32>
    %115 = vector.shape_cast %114 : vector<8xf32> to vector<8x1xf32>
    %116 = vector.broadcast %115 : vector<8x1xf32> to vector<8x8xf32>
    %117 = arith.subf %113, %116 : vector<8x8xf32>
    %118 = math.exp %117 : vector<8x8xf32>
    %cst_41 = arith.constant dense<0.000000e+00> : vector<8xf32>
    %119 = vector.multi_reduction <add>, %118, %cst_41 [1] : vector<8x8xf32> to vector<8xf32>
    %120 = vector.shape_cast %119 : vector<8xf32> to vector<8x1xf32>
    %121 = tpu.reciprocal %120 {approx = true} : vector<8x1xf32> -> vector<8x1xf32>
    %122 = vector.broadcast %121 : vector<8x1xf32> to vector<8x8xf32>
    %123 = arith.mulf %118, %122 : vector<8x8xf32>
    %124 = arith.truncf %123 : vector<8x8xf32> to vector<8x8xbf16>
    %cst_42 = arith.constant dense<0.000000e+00> : vector<8x8xf32>
    %125 = tpu.matmul %124, %110, %cst_42 {dimension_numbers = #tpu.dot_dimension_numbers<[1], [0], [0], [1], [0, 0, 1, 1], [], []>} : vector<8x8xbf16>, vector<8x8xbf16>, vector<8x8xf32> -> vector<8x8xf32>
    %126 = tpu.concatenate %62, %83, %104, %125 in 1 : vector<8x8xf32>, vector<8x8xf32>, vector<8x8xf32>, vector<8x8xf32> -> vector<8x32xf32>
    %127 = arith.truncf %126 : vector<8x32xf32> to vector<8x32xbf16>
    %c0_43 = arith.constant 0 : index
    %c0_44 = arith.constant 0 : index
    %128 = vector.load %arg7[%c0_43, %c0_44] : memref<32x32xbf16, #tpu.memory_space<vmem>>, vector<32x32xbf16>
    %cst_45 = arith.constant dense<0.000000e+00> : vector<8x32xf32>
    %129 = tpu.matmul %127, %128, %cst_45 {dimension_numbers = #tpu.dot_dimension_numbers<[1], [0], [0], [1], [0, 0, 1, 1], [], []>} : vector<8x32xbf16>, vector<32x32xbf16>, vector<8x32xf32> -> vector<8x32xf32>
    %c0_46 = arith.constant 0 : index
    %c0_47 = arith.constant 0 : index
    %130 = vector.load %arg8[%c0_46, %c0_47] : memref<1x32xf32, #tpu.memory_space<vmem>>, vector<1x32xf32>
    %131 = vector.broadcast %130 : vector<1x32xf32> to vector<8x32xf32>
    %132 = arith.addf %129, %131 : vector<8x32xf32>
    %133 = arith.addf %27, %132 : vector<8x32xf32>
    %c0_48 = arith.constant 0 : index
    %c0_49 = arith.constant 0 : index
    %134 = vector.load %arg11[%c0_48, %c0_49] : memref<1x32xf32, #tpu.memory_space<vmem>>, vector<1x32xf32>
    %c0_50 = arith.constant 0 : index
    %c0_51 = arith.constant 0 : index
    %135 = vector.load %arg12[%c0_50, %c0_51] : memref<1x32xf32, #tpu.memory_space<vmem>>, vector<1x32xf32>
    %cst_52 = arith.constant dense<0.000000e+00> : vector<8xf32>
    %136 = vector.multi_reduction <add>, %133, %cst_52 [1] : vector<8x32xf32> to vector<8xf32>
    %137 = vector.shape_cast %136 : vector<8xf32> to vector<8x1xf32>
    %cst_53 = arith.constant 3.200000e+01 : f32
    %138 = vector.broadcast %cst_53 : f32 to vector<8x1xf32>
    %139 = arith.divf %137, %138 : vector<8x1xf32>
    %140 = vector.broadcast %139 : vector<8x1xf32> to vector<8x32xf32>
    %141 = arith.subf %133, %140 : vector<8x32xf32>
    %142 = arith.mulf %141, %141 : vector<8x32xf32>
    %cst_54 = arith.constant dense<0.000000e+00> : vector<8xf32>
    %143 = vector.multi_reduction <add>, %142, %cst_54 [1] : vector<8x32xf32> to vector<8xf32>
    %144 = vector.shape_cast %143 : vector<8xf32> to vector<8x1xf32>
    %cst_55 = arith.constant 0.0322580636 : f32
    %145 = vector.broadcast %cst_55 : f32 to vector<8x1xf32>
    %146 = arith.mulf %144, %145 : vector<8x1xf32>
    %147 = math.sqrt %146 : vector<8x1xf32>
    %148 = vector.broadcast %134 : vector<1x32xf32> to vector<8x32xf32>
    %149 = arith.mulf %148, %141 : vector<8x32xf32>
    %cst_56 = arith.constant 9.99999997E-7 : f32
    %150 = vector.broadcast %cst_56 : f32 to vector<8x1xf32>
    %151 = arith.addf %147, %150 : vector<8x1xf32>
    %152 = tpu.reciprocal %151 {approx = true} : vector<8x1xf32> -> vector<8x1xf32>
    %153 = vector.broadcast %152 : vector<8x1xf32> to vector<8x32xf32>
    %154 = arith.mulf %149, %153 : vector<8x32xf32>
    %155 = vector.broadcast %135 : vector<1x32xf32> to vector<8x32xf32>
    %156 = arith.addf %154, %155 : vector<8x32xf32>
    %157 = arith.truncf %156 : vector<8x32xf32> to vector<8x32xbf16>
    %c0_57 = arith.constant 0 : index
    %c0_58 = arith.constant 0 : index
    %158 = vector.load %arg13[%c0_57, %c0_58] : memref<32x64xbf16, #tpu.memory_space<vmem>>, vector<32x64xbf16>
    %cst_59 = arith.constant dense<0.000000e+00> : vector<8x64xf32>
    %159 = tpu.matmul %157, %158, %cst_59 {dimension_numbers = #tpu.dot_dimension_numbers<[1], [0], [0], [1], [0, 0, 1, 1], [], []>} : vector<8x32xbf16>, vector<32x64xbf16>, vector<8x64xf32> -> vector<8x64xf32>
    %c0_60 = arith.constant 0 : index
    %c0_61 = arith.constant 0 : index
    %160 = vector.load %arg14[%c0_60, %c0_61] : memref<1x64xf32, #tpu.memory_space<vmem>>, vector<1x64xf32>
    %161 = vector.broadcast %160 : vector<1x64xf32> to vector<8x64xf32>
    %162 = arith.addf %159, %161 : vector<8x64xf32>
    %cst_62 = arith.constant 0.000000e+00 : f32
    %163 = vector.broadcast %cst_62 : f32 to vector<8x64xf32>
    %164 = arith.maximumf %162, %163 : vector<8x64xf32>
    %165 = arith.truncf %164 : vector<8x64xf32> to vector<8x64xbf16>
    %c0_63 = arith.constant 0 : index
    %c0_64 = arith.constant 0 : index
    %166 = vector.load %arg15[%c0_63, %c0_64] : memref<64x32xbf16, #tpu.memory_space<vmem>>, vector<64x32xbf16>
    %cst_65 = arith.constant dense<0.000000e+00> : vector<8x32xf32>
    %167 = tpu.matmul %165, %166, %cst_65 {dimension_numbers = #tpu.dot_dimension_numbers<[1], [0], [0], [1], [0, 0, 1, 1], [], []>} : vector<8x64xbf16>, vector<64x32xbf16>, vector<8x32xf32> -> vector<8x32xf32>
    %c0_66 = arith.constant 0 : index
    %c0_67 = arith.constant 0 : index
    %168 = vector.load %arg16[%c0_66, %c0_67] : memref<1x32xf32, #tpu.memory_space<vmem>>, vector<1x32xf32>
    %169 = vector.broadcast %168 : vector<1x32xf32> to vector<8x32xf32>
    %170 = arith.addf %167, %169 : vector<8x32xf32>
    %171 = arith.addf %156, %170 : vector<8x32xf32>
    %c0_68 = arith.constant 0 : index
    %c0_69 = arith.constant 0 : index
    %172 = vector.load %arg17[%c0_68, %c0_69] : memref<1x32xf32, #tpu.memory_space<vmem>>, vector<1x32xf32>
    %c0_70 = arith.constant 0 : index
    %c0_71 = arith.constant 0 : index
    %173 = vector.load %arg18[%c0_70, %c0_71] : memref<1x32xf32, #tpu.memory_space<vmem>>, vector<1x32xf32>
    %cst_72 = arith.constant dense<0.000000e+00> : vector<8xf32>
    %174 = vector.multi_reduction <add>, %171, %cst_72 [1] : vector<8x32xf32> to vector<8xf32>
    %175 = vector.shape_cast %174 : vector<8xf32> to vector<8x1xf32>
    %cst_73 = arith.constant 3.200000e+01 : f32
    %176 = vector.broadcast %cst_73 : f32 to vector<8x1xf32>
    %177 = arith.divf %175, %176 : vector<8x1xf32>
    %178 = vector.broadcast %177 : vector<8x1xf32> to vector<8x32xf32>
    %179 = arith.subf %171, %178 : vector<8x32xf32>
    %180 = arith.mulf %179, %179 : vector<8x32xf32>
    %cst_74 = arith.constant dense<0.000000e+00> : vector<8xf32>
    %181 = vector.multi_reduction <add>, %180, %cst_74 [1] : vector<8x32xf32> to vector<8xf32>
    %182 = vector.shape_cast %181 : vector<8xf32> to vector<8x1xf32>
    %cst_75 = arith.constant 0.0322580636 : f32
    %183 = vector.broadcast %cst_75 : f32 to vector<8x1xf32>
    %184 = arith.mulf %182, %183 : vector<8x1xf32>
    %185 = math.sqrt %184 : vector<8x1xf32>
    %186 = vector.broadcast %172 : vector<1x32xf32> to vector<8x32xf32>
    %187 = arith.mulf %186, %179 : vector<8x32xf32>
    %cst_76 = arith.constant 9.99999997E-7 : f32
    %188 = vector.broadcast %cst_76 : f32 to vector<8x1xf32>
    %189 = arith.addf %185, %188 : vector<8x1xf32>
    %190 = tpu.reciprocal %189 {approx = true} : vector<8x1xf32> -> vector<8x1xf32>
    %191 = vector.broadcast %190 : vector<8x1xf32> to vector<8x32xf32>
    %192 = arith.mulf %187, %191 : vector<8x32xf32>
    %193 = vector.broadcast %173 : vector<1x32xf32> to vector<8x32xf32>
    %194 = arith.addf %192, %193 : vector<8x32xf32>
    %c0_77 = arith.constant 0 : index
    %c0_78 = arith.constant 0 : index
    %c0_79 = arith.constant 0 : index
    %195 = vector.load %arg19[%c0_77, %c0_78, %c0_79] : memref<1x8x32xf32, #tpu.memory_space<vmem>>, vector<1x8x32xf32>
    %196 = vector.shape_cast %195 : vector<1x8x32xf32> to vector<8x32xf32>
    %197 = vector.shape_cast %194 : vector<8x32xf32> to vector<1x8x32xf32>
    tpu.vector_store %arg19[%c0_77, %c0_78, %c0_79], %197 {strides = array<i32>} : memref<1x8x32xf32, #tpu.memory_space<vmem>>, vector<1x8x32xf32>,
    return
  }
  func.func @transform_0(%arg0: i32) -> (i32, i32, i32) {
    %c0_i32 = arith.constant 0 : i32
    %c0_i32_0 = arith.constant 0 : i32
    %c0_i32_1 = arith.constant 0 : i32
    return %arg0, %c0_i32, %c0_i32_0 : i32, i32, i32
  }
  func.func @transform_1(%arg0: i32) -> (i32, i32, i32) {
    %c0_i32 = arith.constant 0 : i32
    %c0_i32_0 = arith.constant 0 : i32
    %c0_i32_1 = arith.constant 0 : i32
    return %arg0, %c0_i32, %c0_i32_0 : i32, i32, i32
  }
  func.func @transform_2(%arg0: i32) -> (i32, i32) {
    %c0_i32 = arith.constant 0 : i32
    %c0_i32_0 = arith.constant 0 : i32
    %c0_i32_1 = arith.constant 0 : i32
    return %c0_i32, %c0_i32_0 : i32, i32
  }
  func.func @transform_3(%arg0: i32) -> (i32, i32) {
    %c0_i32 = arith.constant 0 : i32
    %c0_i32_0 = arith.constant 0 : i32
    %c0_i32_1 = arith.constant 0 : i32
    return %c0_i32, %c0_i32_0 : i32, i32
  }
  func.func @transform_4(%arg0: i32) -> (i32, i32) {
    %c0_i32 = arith.constant 0 : i32
    %c0_i32_0 = arith.constant 0 : i32
    %c0_i32_1 = arith.constant 0 : i32
    return %c0_i32, %c0_i32_0 : i32, i32
  }
  func.func @transform_5(%arg0: i32) -> (i32, i32) {
    %c0_i32 = arith.constant 0 : i32
    %c0_i32_0 = arith.constant 0 : i32
    %c0_i32_1 = arith.constant 0 : i32
    return %c0_i32, %c0_i32_0 : i32, i32
  }
  func.func @transform_6(%arg0: i32) -> (i32, i32) {
    %c0_i32 = arith.constant 0 : i32
    %c0_i32_0 = arith.constant 0 : i32
    %c0_i32_1 = arith.constant 0 : i32
    return %c0_i32, %c0_i32_0 : i32, i32
  }
  func.func @transform_7(%arg0: i32) -> (i32, i32) {
    %c0_i32 = arith.constant 0 : i32
    %c0_i32_0 = arith.constant 0 : i32
    %c0_i32_1 = arith.constant 0 : i32
    return %c0_i32, %c0_i32_0 : i32, i32
  }
  func.func @transform_8(%arg0: i32) -> (i32, i32) {
    %c0_i32 = arith.constant 0 : i32
    %c0_i32_0 = arith.constant 0 : i32
    %c0_i32_1 = arith.constant 0 : i32
    return %c0_i32, %c0_i32_0 : i32, i32
  }
  func.func @transform_9(%arg0: i32) -> (i32, i32) {
    %c0_i32 = arith.constant 0 : i32
    %c0_i32_0 = arith.constant 0 : i32
    %c0_i32_1 = arith.constant 0 : i32
    return %c0_i32, %c0_i32_0 : i32, i32
  }
  func.func @transform_10(%arg0: i32) -> (i32, i32) {
    %c0_i32 = arith.constant 0 : i32
    %c0_i32_0 = arith.constant 0 : i32
    %c0_i32_1 = arith.constant 0 : i32
    return %c0_i32, %c0_i32_0 : i32, i32
  }
  func.func @transform_11(%arg0: i32) -> (i32, i32) {
    %c0_i32 = arith.constant 0 : i32
    %c0_i32_0 = arith.constant 0 : i32
    %c0_i32_1 = arith.constant 0 : i32
    return %c0_i32, %c0_i32_0 : i32, i32
  }
  func.func @transform_12(%arg0: i32) -> (i32, i32) {
    %c0_i32 = arith.constant 0 : i32
    %c0_i32_0 = arith.constant 0 : i32
    %c0_i32_1 = arith.constant 0 : i32
    return %c0_i32, %c0_i32_0 : i32, i32
  }
  func.func @transform_13(%arg0: i32) -> (i32, i32) {
    %c0_i32 = arith.constant 0 : i32
    %c0_i32_0 = arith.constant 0 : i32
    %c0_i32_1 = arith.constant 0 : i32
    return %c0_i32, %c0_i32_0 : i32, i32
  }
  func.func @transform_14(%arg0: i32) -> (i32, i32) {
    %c0_i32 = arith.constant 0 : i32
    %c0_i32_0 = arith.constant 0 : i32
    %c0_i32_1 = arith.constant 0 : i32
    return %c0_i32, %c0_i32_0 : i32, i32
  }
  func.func @transform_15(%arg0: i32) -> (i32, i32) {
    %c0_i32 = arith.constant 0 : i32
    %c0_i32_0 = arith.constant 0 : i32
    %c0_i32_1 = arith.constant 0 : i32
    return %c0_i32, %c0_i32_0 : i32, i32
  }
  func.func @transform_16(%arg0: i32) -> (i32, i32) {
    %c0_i32 = arith.constant 0 : i32
    %c0_i32_0 = arith.constant 0 : i32
    %c0_i32_1 = arith.constant 0 : i32
    return %c0_i32, %c0_i32_0 : i32, i32
  }
  func.func @transform_17(%arg0: i32) -> (i32, i32) {
    %c0_i32 = arith.constant 0 : i32
    %c0_i32_0 = arith.constant 0 : i32
    %c0_i32_1 = arith.constant 0 : i32
    return %c0_i32, %c0_i32_0 : i32, i32
  }
  func.func @transform_18(%arg0: i32) -> (i32, i32, i32) {
    %c0_i32 = arith.constant 0 : i32
    %c0_i32_0 = arith.constant 0 : i32
    %c0_i32_1 = arith.constant 0 : i32
    return %arg0, %c0_i32, %c0_i32_0 : i32, i32, i32
  }
}

module attributes {stable_mosaic.version = 11 : i64} {
  func.func @_encoder_layer_kernel(%arg0: i32, %arg1: memref<1x8x32xf32, #tpu.memory_space<vmem>>, %arg2: memref<32x96xbf16, #tpu.memory_space<vmem>>, %arg3: memref<1x96xf32, #tpu.memory_space<vmem>>, %arg4: memref<32x32xbf16, #tpu.memory_space<vmem>>, %arg5: memref<1x32xf32, #tpu.memory_space<vmem>>, %arg6: memref<1x32xf32, #tpu.memory_space<vmem>>, %arg7: memref<1x32xf32, #tpu.memory_space<vmem>>, %arg8: memref<32x64xbf16, #tpu.memory_space<vmem>>, %arg9: memref<1x64xf32, #tpu.memory_space<vmem>>, %arg10: memref<64x32xbf16, #tpu.memory_space<vmem>>, %arg11: memref<1x32xf32, #tpu.memory_space<vmem>>, %arg12: memref<1x32xf32, #tpu.memory_space<vmem>>, %arg13: memref<1x32xf32, #tpu.memory_space<vmem>>, %arg14: memref<1x8x32xf32, #tpu.memory_space<vmem>>) attributes {dimension_semantics = [#tpu.dimension_semantics<parallel>], iteration_bounds = array<i64: 2>, scalar_prefetch = 0 : i64, scratch_operands = 0 : i64, tpu.core_type = #tpu.core_type<tc>, window_params = [{transform_indices = @transform_0, window_bounds = array<i64: 1, 8, 32>}, {pipeline_mode = #tpu.pipeline_mode<synchronous>, transform_indices = @transform_1, window_bounds = array<i64: 32, 96>}, {pipeline_mode = #tpu.pipeline_mode<synchronous>, transform_indices = @transform_2, window_bounds = array<i64: 1, 96>}, {pipeline_mode = #tpu.pipeline_mode<synchronous>, transform_indices = @transform_3, window_bounds = array<i64: 32, 32>}, {pipeline_mode = #tpu.pipeline_mode<synchronous>, transform_indices = @transform_4, window_bounds = array<i64: 1, 32>}, {pipeline_mode = #tpu.pipeline_mode<synchronous>, transform_indices = @transform_5, window_bounds = array<i64: 1, 32>}, {pipeline_mode = #tpu.pipeline_mode<synchronous>, transform_indices = @transform_6, window_bounds = array<i64: 1, 32>}, {pipeline_mode = #tpu.pipeline_mode<synchronous>, transform_indices = @transform_7, window_bounds = array<i64: 32, 64>}, {pipeline_mode = #tpu.pipeline_mode<synchronous>, transform_indices = @transform_8, window_bounds = array<i64: 1, 64>}, {pipeline_mode = #tpu.pipeline_mode<synchronous>, transform_indices = @transform_9, window_bounds = array<i64: 64, 32>}, {pipeline_mode = #tpu.pipeline_mode<synchronous>, transform_indices = @transform_10, window_bounds = array<i64: 1, 32>}, {pipeline_mode = #tpu.pipeline_mode<synchronous>, transform_indices = @transform_11, window_bounds = array<i64: 1, 32>}, {pipeline_mode = #tpu.pipeline_mode<synchronous>, transform_indices = @transform_12, window_bounds = array<i64: 1, 32>}, {transform_indices = @transform_13, window_bounds = array<i64: 1, 8, 32>}]} {
    %c0 = arith.constant 0 : index
    %c0_0 = arith.constant 0 : index
    %c0_1 = arith.constant 0 : index
    %0 = vector.load %arg1[%c0, %c0_0, %c0_1] : memref<1x8x32xf32, #tpu.memory_space<vmem>>, vector<1x8x32xf32>
    %1 = vector.shape_cast %0 : vector<1x8x32xf32> to vector<8x32xf32>
    %2 = arith.truncf %1 : vector<8x32xf32> to vector<8x32xbf16>
    %c0_2 = arith.constant 0 : index
    %c0_3 = arith.constant 0 : index
    %3 = vector.load %arg2[%c0_2, %c0_3] : memref<32x96xbf16, #tpu.memory_space<vmem>>, vector<32x96xbf16>
    %cst = arith.constant dense<0.000000e+00> : vector<8x96xf32>
    %4 = tpu.matmul %2, %3, %cst {dimension_numbers = #tpu.dot_dimension_numbers<[1], [0], [0], [1], [0, 0, 1, 1], [], []>} : vector<8x32xbf16>, vector<32x96xbf16>, vector<8x96xf32> -> vector<8x96xf32>
    %c0_4 = arith.constant 0 : index
    %c0_5 = arith.constant 0 : index
    %5 = vector.load %arg3[%c0_4, %c0_5] : memref<1x96xf32, #tpu.memory_space<vmem>>, vector<1x96xf32>
    %6 = vector.broadcast %5 : vector<1x96xf32> to vector<8x96xf32>
    %7 = arith.addf %4, %6 : vector<8x96xf32>
    %8 = vector.extract_strided_slice %7 {offsets = [0, 0], sizes = [8, 32], strides = [1, 1]} : vector<8x96xf32> to vector<8x32xf32>
    %9 = vector.extract_strided_slice %7 {offsets = [0, 32], sizes = [8, 32], strides = [1, 1]} : vector<8x96xf32> to vector<8x32xf32>
    %10 = vector.extract_strided_slice %7 {offsets = [0, 64], sizes = [8, 32], strides = [1, 1]} : vector<8x96xf32> to vector<8x32xf32>
    %11 = vector.extract_strided_slice %8 {offsets = [0, 0], sizes = [8, 8], strides = [1, 1]} : vector<8x32xf32> to vector<8x8xf32>
    %12 = arith.truncf %11 : vector<8x8xf32> to vector<8x8xbf16>
    %13 = vector.extract_strided_slice %9 {offsets = [0, 0], sizes = [8, 8], strides = [1, 1]} : vector<8x32xf32> to vector<8x8xf32>
    %14 = arith.truncf %13 : vector<8x8xf32> to vector<8x8xbf16>
    %15 = vector.extract_strided_slice %10 {offsets = [0, 0], sizes = [8, 8], strides = [1, 1]} : vector<8x32xf32> to vector<8x8xf32>
    %16 = arith.truncf %15 : vector<8x8xf32> to vector<8x8xbf16>
    %cst_6 = arith.constant dense<0.000000e+00> : vector<8x8xf32>
    %17 = tpu.matmul %12, %14, %cst_6 {dimension_numbers = #tpu.dot_dimension_numbers<[1], [1], [0], [0], [0, 0, 1, 0], [], []>} : vector<8x8xbf16>, vector<8x8xbf16>, vector<8x8xf32> -> vector<8x8xf32>
    %cst_7 = arith.constant 0.353553385 : f32
    %18 = vector.broadcast %cst_7 : f32 to vector<8x8xf32>
    %19 = arith.mulf %17, %18 : vector<8x8xf32>
    %cst_8 = arith.constant dense<0xFF800000> : vector<8xf32>
    %20 = vector.multi_reduction <maximumf>, %19, %cst_8 [1] : vector<8x8xf32> to vector<8xf32>
    %21 = vector.shape_cast %20 : vector<8xf32> to vector<8x1xf32>
    %22 = vector.broadcast %21 : vector<8x1xf32> to vector<8x8xf32>
    %23 = arith.subf %19, %22 : vector<8x8xf32>
    %24 = math.exp %23 : vector<8x8xf32>
    %cst_9 = arith.constant dense<0.000000e+00> : vector<8xf32>
    %25 = vector.multi_reduction <add>, %24, %cst_9 [1] : vector<8x8xf32> to vector<8xf32>
    %26 = vector.shape_cast %25 : vector<8xf32> to vector<8x1xf32>
    %27 = tpu.reciprocal %26 {approx = true} : vector<8x1xf32> -> vector<8x1xf32>
    %28 = vector.broadcast %27 : vector<8x1xf32> to vector<8x8xf32>
    %29 = arith.mulf %24, %28 : vector<8x8xf32>
    %30 = arith.truncf %29 : vector<8x8xf32> to vector<8x8xbf16>
    %cst_10 = arith.constant dense<0.000000e+00> : vector<8x8xf32>
    %31 = tpu.matmul %30, %16, %cst_10 {dimension_numbers = #tpu.dot_dimension_numbers<[1], [0], [0], [1], [0, 0, 1, 1], [], []>} : vector<8x8xbf16>, vector<8x8xbf16>, vector<8x8xf32> -> vector<8x8xf32>
    %32 = vector.extract_strided_slice %8 {offsets = [0, 8], sizes = [8, 8], strides = [1, 1]} : vector<8x32xf32> to vector<8x8xf32>
    %33 = arith.truncf %32 : vector<8x8xf32> to vector<8x8xbf16>
    %34 = vector.extract_strided_slice %9 {offsets = [0, 8], sizes = [8, 8], strides = [1, 1]} : vector<8x32xf32> to vector<8x8xf32>
    %35 = arith.truncf %34 : vector<8x8xf32> to vector<8x8xbf16>
    %36 = vector.extract_strided_slice %10 {offsets = [0, 8], sizes = [8, 8], strides = [1, 1]} : vector<8x32xf32> to vector<8x8xf32>
    %37 = arith.truncf %36 : vector<8x8xf32> to vector<8x8xbf16>
    %cst_11 = arith.constant dense<0.000000e+00> : vector<8x8xf32>
    %38 = tpu.matmul %33, %35, %cst_11 {dimension_numbers = #tpu.dot_dimension_numbers<[1], [1], [0], [0], [0, 0, 1, 0], [], []>} : vector<8x8xbf16>, vector<8x8xbf16>, vector<8x8xf32> -> vector<8x8xf32>
    %cst_12 = arith.constant 0.353553385 : f32
    %39 = vector.broadcast %cst_12 : f32 to vector<8x8xf32>
    %40 = arith.mulf %38, %39 : vector<8x8xf32>
    %cst_13 = arith.constant dense<0xFF800000> : vector<8xf32>
    %41 = vector.multi_reduction <maximumf>, %40, %cst_13 [1] : vector<8x8xf32> to vector<8xf32>
    %42 = vector.shape_cast %41 : vector<8xf32> to vector<8x1xf32>
    %43 = vector.broadcast %42 : vector<8x1xf32> to vector<8x8xf32>
    %44 = arith.subf %40, %43 : vector<8x8xf32>
    %45 = math.exp %44 : vector<8x8xf32>
    %cst_14 = arith.constant dense<0.000000e+00> : vector<8xf32>
    %46 = vector.multi_reduction <add>, %45, %cst_14 [1] : vector<8x8xf32> to vector<8xf32>
    %47 = vector.shape_cast %46 : vector<8xf32> to vector<8x1xf32>
    %48 = tpu.reciprocal %47 {approx = true} : vector<8x1xf32> -> vector<8x1xf32>
    %49 = vector.broadcast %48 : vector<8x1xf32> to vector<8x8xf32>
    %50 = arith.mulf %45, %49 : vector<8x8xf32>
    %51 = arith.truncf %50 : vector<8x8xf32> to vector<8x8xbf16>
    %cst_15 = arith.constant dense<0.000000e+00> : vector<8x8xf32>
    %52 = tpu.matmul %51, %37, %cst_15 {dimension_numbers = #tpu.dot_dimension_numbers<[1], [0], [0], [1], [0, 0, 1, 1], [], []>} : vector<8x8xbf16>, vector<8x8xbf16>, vector<8x8xf32> -> vector<8x8xf32>
    %53 = vector.extract_strided_slice %8 {offsets = [0, 16], sizes = [8, 8], strides = [1, 1]} : vector<8x32xf32> to vector<8x8xf32>
    %54 = arith.truncf %53 : vector<8x8xf32> to vector<8x8xbf16>
    %55 = vector.extract_strided_slice %9 {offsets = [0, 16], sizes = [8, 8], strides = [1, 1]} : vector<8x32xf32> to vector<8x8xf32>
    %56 = arith.truncf %55 : vector<8x8xf32> to vector<8x8xbf16>
    %57 = vector.extract_strided_slice %10 {offsets = [0, 16], sizes = [8, 8], strides = [1, 1]} : vector<8x32xf32> to vector<8x8xf32>
    %58 = arith.truncf %57 : vector<8x8xf32> to vector<8x8xbf16>
    %cst_16 = arith.constant dense<0.000000e+00> : vector<8x8xf32>
    %59 = tpu.matmul %54, %56, %cst_16 {dimension_numbers = #tpu.dot_dimension_numbers<[1], [1], [0], [0], [0, 0, 1, 0], [], []>} : vector<8x8xbf16>, vector<8x8xbf16>, vector<8x8xf32> -> vector<8x8xf32>
    %cst_17 = arith.constant 0.353553385 : f32
    %60 = vector.broadcast %cst_17 : f32 to vector<8x8xf32>
    %61 = arith.mulf %59, %60 : vector<8x8xf32>
    %cst_18 = arith.constant dense<0xFF800000> : vector<8xf32>
    %62 = vector.multi_reduction <maximumf>, %61, %cst_18 [1] : vector<8x8xf32> to vector<8xf32>
    %63 = vector.shape_cast %62 : vector<8xf32> to vector<8x1xf32>
    %64 = vector.broadcast %63 : vector<8x1xf32> to vector<8x8xf32>
    %65 = arith.subf %61, %64 : vector<8x8xf32>
    %66 = math.exp %65 : vector<8x8xf32>
    %cst_19 = arith.constant dense<0.000000e+00> : vector<8xf32>
    %67 = vector.multi_reduction <add>, %66, %cst_19 [1] : vector<8x8xf32> to vector<8xf32>
    %68 = vector.shape_cast %67 : vector<8xf32> to vector<8x1xf32>
    %69 = tpu.reciprocal %68 {approx = true} : vector<8x1xf32> -> vector<8x1xf32>
    %70 = vector.broadcast %69 : vector<8x1xf32> to vector<8x8xf32>
    %71 = arith.mulf %66, %70 : vector<8x8xf32>
    %72 = arith.truncf %71 : vector<8x8xf32> to vector<8x8xbf16>
    %cst_20 = arith.constant dense<0.000000e+00> : vector<8x8xf32>
    %73 = tpu.matmul %72, %58, %cst_20 {dimension_numbers = #tpu.dot_dimension_numbers<[1], [0], [0], [1], [0, 0, 1, 1], [], []>} : vector<8x8xbf16>, vector<8x8xbf16>, vector<8x8xf32> -> vector<8x8xf32>
    %74 = vector.extract_strided_slice %8 {offsets = [0, 24], sizes = [8, 8], strides = [1, 1]} : vector<8x32xf32> to vector<8x8xf32>
    %75 = arith.truncf %74 : vector<8x8xf32> to vector<8x8xbf16>
    %76 = vector.extract_strided_slice %9 {offsets = [0, 24], sizes = [8, 8], strides = [1, 1]} : vector<8x32xf32> to vector<8x8xf32>
    %77 = arith.truncf %76 : vector<8x8xf32> to vector<8x8xbf16>
    %78 = vector.extract_strided_slice %10 {offsets = [0, 24], sizes = [8, 8], strides = [1, 1]} : vector<8x32xf32> to vector<8x8xf32>
    %79 = arith.truncf %78 : vector<8x8xf32> to vector<8x8xbf16>
    %cst_21 = arith.constant dense<0.000000e+00> : vector<8x8xf32>
    %80 = tpu.matmul %75, %77, %cst_21 {dimension_numbers = #tpu.dot_dimension_numbers<[1], [1], [0], [0], [0, 0, 1, 0], [], []>} : vector<8x8xbf16>, vector<8x8xbf16>, vector<8x8xf32> -> vector<8x8xf32>
    %cst_22 = arith.constant 0.353553385 : f32
    %81 = vector.broadcast %cst_22 : f32 to vector<8x8xf32>
    %82 = arith.mulf %80, %81 : vector<8x8xf32>
    %cst_23 = arith.constant dense<0xFF800000> : vector<8xf32>
    %83 = vector.multi_reduction <maximumf>, %82, %cst_23 [1] : vector<8x8xf32> to vector<8xf32>
    %84 = vector.shape_cast %83 : vector<8xf32> to vector<8x1xf32>
    %85 = vector.broadcast %84 : vector<8x1xf32> to vector<8x8xf32>
    %86 = arith.subf %82, %85 : vector<8x8xf32>
    %87 = math.exp %86 : vector<8x8xf32>
    %cst_24 = arith.constant dense<0.000000e+00> : vector<8xf32>
    %88 = vector.multi_reduction <add>, %87, %cst_24 [1] : vector<8x8xf32> to vector<8xf32>
    %89 = vector.shape_cast %88 : vector<8xf32> to vector<8x1xf32>
    %90 = tpu.reciprocal %89 {approx = true} : vector<8x1xf32> -> vector<8x1xf32>
    %91 = vector.broadcast %90 : vector<8x1xf32> to vector<8x8xf32>
    %92 = arith.mulf %87, %91 : vector<8x8xf32>
    %93 = arith.truncf %92 : vector<8x8xf32> to vector<8x8xbf16>
    %cst_25 = arith.constant dense<0.000000e+00> : vector<8x8xf32>
    %94 = tpu.matmul %93, %79, %cst_25 {dimension_numbers = #tpu.dot_dimension_numbers<[1], [0], [0], [1], [0, 0, 1, 1], [], []>} : vector<8x8xbf16>, vector<8x8xbf16>, vector<8x8xf32> -> vector<8x8xf32>
    %95 = tpu.concatenate %31, %52, %73, %94 in 1 : vector<8x8xf32>, vector<8x8xf32>, vector<8x8xf32>, vector<8x8xf32> -> vector<8x32xf32>
    %96 = arith.truncf %95 : vector<8x32xf32> to vector<8x32xbf16>
    %c0_26 = arith.constant 0 : index
    %c0_27 = arith.constant 0 : index
    %97 = vector.load %arg4[%c0_26, %c0_27] : memref<32x32xbf16, #tpu.memory_space<vmem>>, vector<32x32xbf16>
    %cst_28 = arith.constant dense<0.000000e+00> : vector<8x32xf32>
    %98 = tpu.matmul %96, %97, %cst_28 {dimension_numbers = #tpu.dot_dimension_numbers<[1], [0], [0], [1], [0, 0, 1, 1], [], []>} : vector<8x32xbf16>, vector<32x32xbf16>, vector<8x32xf32> -> vector<8x32xf32>
    %c0_29 = arith.constant 0 : index
    %c0_30 = arith.constant 0 : index
    %99 = vector.load %arg5[%c0_29, %c0_30] : memref<1x32xf32, #tpu.memory_space<vmem>>, vector<1x32xf32>
    %100 = vector.broadcast %99 : vector<1x32xf32> to vector<8x32xf32>
    %101 = arith.addf %98, %100 : vector<8x32xf32>
    %102 = arith.addf %1, %101 : vector<8x32xf32>
    %c0_31 = arith.constant 0 : index
    %c0_32 = arith.constant 0 : index
    %103 = vector.load %arg6[%c0_31, %c0_32] : memref<1x32xf32, #tpu.memory_space<vmem>>, vector<1x32xf32>
    %c0_33 = arith.constant 0 : index
    %c0_34 = arith.constant 0 : index
    %104 = vector.load %arg7[%c0_33, %c0_34] : memref<1x32xf32, #tpu.memory_space<vmem>>, vector<1x32xf32>
    %cst_35 = arith.constant dense<0.000000e+00> : vector<8xf32>
    %105 = vector.multi_reduction <add>, %102, %cst_35 [1] : vector<8x32xf32> to vector<8xf32>
    %106 = vector.shape_cast %105 : vector<8xf32> to vector<8x1xf32>
    %cst_36 = arith.constant 3.200000e+01 : f32
    %107 = vector.broadcast %cst_36 : f32 to vector<8x1xf32>
    %108 = arith.divf %106, %107 : vector<8x1xf32>
    %109 = vector.broadcast %108 : vector<8x1xf32> to vector<8x32xf32>
    %110 = arith.subf %102, %109 : vector<8x32xf32>
    %111 = arith.mulf %110, %110 : vector<8x32xf32>
    %cst_37 = arith.constant dense<0.000000e+00> : vector<8xf32>
    %112 = vector.multi_reduction <add>, %111, %cst_37 [1] : vector<8x32xf32> to vector<8xf32>
    %113 = vector.shape_cast %112 : vector<8xf32> to vector<8x1xf32>
    %cst_38 = arith.constant 0.0322580636 : f32
    %114 = vector.broadcast %cst_38 : f32 to vector<8x1xf32>
    %115 = arith.mulf %113, %114 : vector<8x1xf32>
    %116 = math.sqrt %115 : vector<8x1xf32>
    %117 = vector.broadcast %103 : vector<1x32xf32> to vector<8x32xf32>
    %118 = arith.mulf %117, %110 : vector<8x32xf32>
    %cst_39 = arith.constant 9.99999997E-7 : f32
    %119 = vector.broadcast %cst_39 : f32 to vector<8x1xf32>
    %120 = arith.addf %116, %119 : vector<8x1xf32>
    %121 = tpu.reciprocal %120 {approx = true} : vector<8x1xf32> -> vector<8x1xf32>
    %122 = vector.broadcast %121 : vector<8x1xf32> to vector<8x32xf32>
    %123 = arith.mulf %118, %122 : vector<8x32xf32>
    %124 = vector.broadcast %104 : vector<1x32xf32> to vector<8x32xf32>
    %125 = arith.addf %123, %124 : vector<8x32xf32>
    %126 = arith.truncf %125 : vector<8x32xf32> to vector<8x32xbf16>
    %c0_40 = arith.constant 0 : index
    %c0_41 = arith.constant 0 : index
    %127 = vector.load %arg8[%c0_40, %c0_41] : memref<32x64xbf16, #tpu.memory_space<vmem>>, vector<32x64xbf16>
    %cst_42 = arith.constant dense<0.000000e+00> : vector<8x64xf32>
    %128 = tpu.matmul %126, %127, %cst_42 {dimension_numbers = #tpu.dot_dimension_numbers<[1], [0], [0], [1], [0, 0, 1, 1], [], []>} : vector<8x32xbf16>, vector<32x64xbf16>, vector<8x64xf32> -> vector<8x64xf32>
    %c0_43 = arith.constant 0 : index
    %c0_44 = arith.constant 0 : index
    %129 = vector.load %arg9[%c0_43, %c0_44] : memref<1x64xf32, #tpu.memory_space<vmem>>, vector<1x64xf32>
    %130 = vector.broadcast %129 : vector<1x64xf32> to vector<8x64xf32>
    %131 = arith.addf %128, %130 : vector<8x64xf32>
    %cst_45 = arith.constant 0.000000e+00 : f32
    %132 = vector.broadcast %cst_45 : f32 to vector<8x64xf32>
    %133 = arith.maximumf %131, %132 : vector<8x64xf32>
    %134 = arith.truncf %133 : vector<8x64xf32> to vector<8x64xbf16>
    %c0_46 = arith.constant 0 : index
    %c0_47 = arith.constant 0 : index
    %135 = vector.load %arg10[%c0_46, %c0_47] : memref<64x32xbf16, #tpu.memory_space<vmem>>, vector<64x32xbf16>
    %cst_48 = arith.constant dense<0.000000e+00> : vector<8x32xf32>
    %136 = tpu.matmul %134, %135, %cst_48 {dimension_numbers = #tpu.dot_dimension_numbers<[1], [0], [0], [1], [0, 0, 1, 1], [], []>} : vector<8x64xbf16>, vector<64x32xbf16>, vector<8x32xf32> -> vector<8x32xf32>
    %c0_49 = arith.constant 0 : index
    %c0_50 = arith.constant 0 : index
    %137 = vector.load %arg11[%c0_49, %c0_50] : memref<1x32xf32, #tpu.memory_space<vmem>>, vector<1x32xf32>
    %138 = vector.broadcast %137 : vector<1x32xf32> to vector<8x32xf32>
    %139 = arith.addf %136, %138 : vector<8x32xf32>
    %140 = arith.addf %125, %139 : vector<8x32xf32>
    %c0_51 = arith.constant 0 : index
    %c0_52 = arith.constant 0 : index
    %141 = vector.load %arg12[%c0_51, %c0_52] : memref<1x32xf32, #tpu.memory_space<vmem>>, vector<1x32xf32>
    %c0_53 = arith.constant 0 : index
    %c0_54 = arith.constant 0 : index
    %142 = vector.load %arg13[%c0_53, %c0_54] : memref<1x32xf32, #tpu.memory_space<vmem>>, vector<1x32xf32>
    %cst_55 = arith.constant dense<0.000000e+00> : vector<8xf32>
    %143 = vector.multi_reduction <add>, %140, %cst_55 [1] : vector<8x32xf32> to vector<8xf32>
    %144 = vector.shape_cast %143 : vector<8xf32> to vector<8x1xf32>
    %cst_56 = arith.constant 3.200000e+01 : f32
    %145 = vector.broadcast %cst_56 : f32 to vector<8x1xf32>
    %146 = arith.divf %144, %145 : vector<8x1xf32>
    %147 = vector.broadcast %146 : vector<8x1xf32> to vector<8x32xf32>
    %148 = arith.subf %140, %147 : vector<8x32xf32>
    %149 = arith.mulf %148, %148 : vector<8x32xf32>
    %cst_57 = arith.constant dense<0.000000e+00> : vector<8xf32>
    %150 = vector.multi_reduction <add>, %149, %cst_57 [1] : vector<8x32xf32> to vector<8xf32>
    %151 = vector.shape_cast %150 : vector<8xf32> to vector<8x1xf32>
    %cst_58 = arith.constant 0.0322580636 : f32
    %152 = vector.broadcast %cst_58 : f32 to vector<8x1xf32>
    %153 = arith.mulf %151, %152 : vector<8x1xf32>
    %154 = math.sqrt %153 : vector<8x1xf32>
    %155 = vector.broadcast %141 : vector<1x32xf32> to vector<8x32xf32>
    %156 = arith.mulf %155, %148 : vector<8x32xf32>
    %cst_59 = arith.constant 9.99999997E-7 : f32
    %157 = vector.broadcast %cst_59 : f32 to vector<8x1xf32>
    %158 = arith.addf %154, %157 : vector<8x1xf32>
    %159 = tpu.reciprocal %158 {approx = true} : vector<8x1xf32> -> vector<8x1xf32>
    %160 = vector.broadcast %159 : vector<8x1xf32> to vector<8x32xf32>
    %161 = arith.mulf %156, %160 : vector<8x32xf32>
    %162 = vector.broadcast %142 : vector<1x32xf32> to vector<8x32xf32>
    %163 = arith.addf %161, %162 : vector<8x32xf32>
    %c0_60 = arith.constant 0 : index
    %c0_61 = arith.constant 0 : index
    %c0_62 = arith.constant 0 : index
    %164 = vector.load %arg14[%c0_60, %c0_61, %c0_62] : memref<1x8x32xf32, #tpu.memory_space<vmem>>, vector<1x8x32xf32>
    %165 = vector.shape_cast %164 : vector<1x8x32xf32> to vector<8x32xf32>
    %166 = vector.shape_cast %163 : vector<8x32xf32> to vector<1x8x32xf32>
    tpu.vector_store %arg14[%c0_60, %c0_61, %c0_62], %166 {strides = array<i32>} : memref<1x8x32xf32, #tpu.memory_space<vmem>>, vector<1x8x32xf32>,
    return
  }
  func.func @transform_0(%arg0: i32) -> (i32, i32, i32) {
    %c0_i32 = arith.constant 0 : i32
    %c0_i32_0 = arith.constant 0 : i32
    %c0_i32_1 = arith.constant 0 : i32
    return %arg0, %c0_i32, %c0_i32_0 : i32, i32, i32
  }
  func.func @transform_1(%arg0: i32) -> (i32, i32) {
    %c0_i32 = arith.constant 0 : i32
    %c0_i32_0 = arith.constant 0 : i32
    %c0_i32_1 = arith.constant 0 : i32
    return %c0_i32, %c0_i32_0 : i32, i32
  }
  func.func @transform_2(%arg0: i32) -> (i32, i32) {
    %c0_i32 = arith.constant 0 : i32
    %c0_i32_0 = arith.constant 0 : i32
    %c0_i32_1 = arith.constant 0 : i32
    return %c0_i32, %c0_i32_0 : i32, i32
  }
  func.func @transform_3(%arg0: i32) -> (i32, i32) {
    %c0_i32 = arith.constant 0 : i32
    %c0_i32_0 = arith.constant 0 : i32
    %c0_i32_1 = arith.constant 0 : i32
    return %c0_i32, %c0_i32_0 : i32, i32
  }
  func.func @transform_4(%arg0: i32) -> (i32, i32) {
    %c0_i32 = arith.constant 0 : i32
    %c0_i32_0 = arith.constant 0 : i32
    %c0_i32_1 = arith.constant 0 : i32
    return %c0_i32, %c0_i32_0 : i32, i32
  }
  func.func @transform_5(%arg0: i32) -> (i32, i32) {
    %c0_i32 = arith.constant 0 : i32
    %c0_i32_0 = arith.constant 0 : i32
    %c0_i32_1 = arith.constant 0 : i32
    return %c0_i32, %c0_i32_0 : i32, i32
  }
  func.func @transform_6(%arg0: i32) -> (i32, i32) {
    %c0_i32 = arith.constant 0 : i32
    %c0_i32_0 = arith.constant 0 : i32
    %c0_i32_1 = arith.constant 0 : i32
    return %c0_i32, %c0_i32_0 : i32, i32
  }
  func.func @transform_7(%arg0: i32) -> (i32, i32) {
    %c0_i32 = arith.constant 0 : i32
    %c0_i32_0 = arith.constant 0 : i32
    %c0_i32_1 = arith.constant 0 : i32
    return %c0_i32, %c0_i32_0 : i32, i32
  }
  func.func @transform_8(%arg0: i32) -> (i32, i32) {
    %c0_i32 = arith.constant 0 : i32
    %c0_i32_0 = arith.constant 0 : i32
    %c0_i32_1 = arith.constant 0 : i32
    return %c0_i32, %c0_i32_0 : i32, i32
  }
  func.func @transform_9(%arg0: i32) -> (i32, i32) {
    %c0_i32 = arith.constant 0 : i32
    %c0_i32_0 = arith.constant 0 : i32
    %c0_i32_1 = arith.constant 0 : i32
    return %c0_i32, %c0_i32_0 : i32, i32
  }
  func.func @transform_10(%arg0: i32) -> (i32, i32) {
    %c0_i32 = arith.constant 0 : i32
    %c0_i32_0 = arith.constant 0 : i32
    %c0_i32_1 = arith.constant 0 : i32
    return %c0_i32, %c0_i32_0 : i32, i32
  }
  func.func @transform_11(%arg0: i32) -> (i32, i32) {
    %c0_i32 = arith.constant 0 : i32
    %c0_i32_0 = arith.constant 0 : i32
    %c0_i32_1 = arith.constant 0 : i32
    return %c0_i32, %c0_i32_0 : i32, i32
  }
  func.func @transform_12(%arg0: i32) -> (i32, i32) {
    %c0_i32 = arith.constant 0 : i32
    %c0_i32_0 = arith.constant 0 : i32
    %c0_i32_1 = arith.constant 0 : i32
    return %c0_i32, %c0_i32_0 : i32, i32
  }
  func.func @transform_13(%arg0: i32) -> (i32, i32, i32) {
    %c0_i32 = arith.constant 0 : i32
    %c0_i32_0 = arith.constant 0 : i32
    %c0_i32_1 = arith.constant 0 : i32
    return %arg0, %c0_i32, %c0_i32_0 : i32, i32, i32
  }
}

</mosaic_0001>

<llo_original>
// kernel: transformer_forward.7
$region0: #{transformer_forward.7}
  #allocation0 [shape = 'u32[]', space=smem, size = 0x4, offset = 0x4, fixed_abs, tag = 'smem constant byte address 0x4 - core index']
  #allocation1 [shape = 'u32[144,128]{1,0:T(1,128)}', space=vmem, size = 0x12000, scoped, tag = 'internal scratch']
  %s0 = inlined_call_operand.vmem [shape: f32[2,8,32], index: 0, kind: input, shape index: {}]
  %s1 = inlined_call_operand.vmem [shape: f32[2,8,32], index: 1, kind: input, shape index: {}]
  %s2 = inlined_call_operand.vmem [shape: bf16[32,32], index: 2, kind: input, shape index: {}]
  %s3 = inlined_call_operand.vmem [shape: f32[1,32], index: 3, kind: input, shape index: {}]
  %s4 = inlined_call_operand.vmem [shape: bf16[32,64], index: 4, kind: input, shape index: {}]
  %s5 = inlined_call_operand.vmem [shape: f32[1,64], index: 5, kind: input, shape index: {}]
  %s6 = inlined_call_operand.vmem [shape: bf16[32,32], index: 6, kind: input, shape index: {}]
  %s7 = inlined_call_operand.vmem [shape: f32[1,32], index: 7, kind: input, shape index: {}]
  %s8 = inlined_call_operand.vmem [shape: f32[1,32], index: 8, kind: input, shape index: {}]
  %s9 = inlined_call_operand.vmem [shape: f32[1,32], index: 9, kind: input, shape index: {}]
  %s10 = inlined_call_operand.vmem [shape: f32[1,32], index: 10, kind: input, shape index: {}]
  %s11 = inlined_call_operand.vmem [shape: f32[1,32], index: 11, kind: input, shape index: {}]
  %s12 = inlined_call_operand.vmem [shape: bf16[32,64], index: 12, kind: input, shape index: {}]
  %s13 = inlined_call_operand.vmem [shape: f32[1,64], index: 13, kind: input, shape index: {}]
  %s14 = inlined_call_operand.vmem [shape: bf16[64,32], index: 14, kind: input, shape index: {}]
  %s15 = inlined_call_operand.vmem [shape: f32[1,32], index: 15, kind: input, shape index: {}]
  %s16 = inlined_call_operand.vmem [shape: f32[1,32], index: 16, kind: input, shape index: {}]
  %s17 = inlined_call_operand.vmem [shape: f32[1,32], index: 17, kind: input, shape index: {}]
  %s18 = inlined_call_operand.hbm [shape: f32[2,8,32], index: 18, kind: output, shape index: {}]
  %s19 = sld [smem:[#allocation0]]
  $region105: #{transformer_forward.7} parent=0
    _
  %s21 = ssub.s32 1, %s19
  %s22 = scalar_select 0, %s21, %s19
  $region1: #{transformer_forward.7} parent=0
    #allocation2 [shape = 'u8[8192]{0}', space=vmem, size = 0x2000, scoped, tag = 'output window, operand 0']
    #allocation3 [shape = 's32[2]{0}', space=sflag, size = 0x8, scoped, tag = 'scoped memory for transformer_forward.7']
    %23 = vsyncpa [#allocation3], 0
    %s24 = scalar_lea.sflag [#allocation3], 1
    %25 = vsyncpa %s24, 0
    loop: start=0, step=1, limit=4
    $region2: #{transformer_forward.7} parent=1 // loop_pre_header
      _
    $region3: #{transformer_forward.7} parent=1 // loop_header
      %s27 = sphi 0, %s31
      %p28 = scmp.ge.s32.totalorder %s27, 4
      %s37 = sphi 0, %s39
      %s40 = sphi 0, %s37
      %s41 = sphi 0, %s40
      %s57 = sphi 0, %s41
      %s63 = sphi 0, %s65
      %s66 = sphi 0, %s63
      %s67 = sphi 0, %s66
      %s83 = sphi 0, %s67
      %s87 = sphi 0, %s87
      %s89 = sphi 0, %s87
      %s90 = sphi 0, %s89
      %s104 = sphi 0, %s90
      %s108 = sphi 0, %s108
      %s110 = sphi 0, %s108
      %s111 = sphi 0, %s110
      %s125 = sphi 0, %s111
      %s129 = sphi 0, %s129
      %s131 = sphi 0, %s129
      %s132 = sphi 0, %s131
      %s146 = sphi 0, %s132
      %s150 = sphi 0, %s150
      %s152 = sphi 0, %s150
      %s153 = sphi 0, %s152
      %s167 = sphi 0, %s153
      %s171 = sphi 0, %s171
      %s173 = sphi 0, %s171
      %s174 = sphi 0, %s173
      %s188 = sphi 0, %s174
      %s192 = sphi 0, %s192
      %s194 = sphi 0, %s192
      %s195 = sphi 0, %s194
      %s209 = sphi 0, %s195
      %s213 = sphi 0, %s213
      %s215 = sphi 0, %s213
      %s216 = sphi 0, %s215
      %s230 = sphi 0, %s216
      %s234 = sphi 0, %s234
      %s236 = sphi 0, %s234
      %s237 = sphi 0, %s236
      %s251 = sphi 0, %s237
      %s255 = sphi 0, %s255
      %s257 = sphi 0, %s255
      %s258 = sphi 0, %s257
      %s272 = sphi 0, %s258
      %s276 = sphi 0, %s276
      %s278 = sphi 0, %s276
      %s279 = sphi 0, %s278
      %s293 = sphi 0, %s279
      %s297 = sphi 0, %s297
      %s299 = sphi 0, %s297
      %s300 = sphi 0, %s299
      %s314 = sphi 0, %s300
      %s318 = sphi 0, %s318
      %s320 = sphi 0, %s318
      %s321 = sphi 0, %s320
      %s335 = sphi 0, %s321
      %s339 = sphi 0, %s339
      %s341 = sphi 0, %s339
      %s342 = sphi 0, %s341
      %s356 = sphi 0, %s342
      %s360 = sphi 0, %s360
      %s362 = sphi 0, %s360
      %s363 = sphi 0, %s362
      %s377 = sphi 0, %s363
      %s381 = sphi 0, %s381
      %s383 = sphi 0, %s381
      %s384 = sphi 0, %s383
      %s398 = sphi 0, %s384
      %s402 = sphi 0, %s402
      %s404 = sphi 0, %s402
      %s405 = sphi 0, %s404
      %s419 = sphi 0, %s405
      %s425 = sphi 0, %s427
      %s428 = sphi 0, %s425
      %s429 = sphi 0, %s428
      %s445 = sphi 0, %s429
    $region4: #{transformer_forward.7} parent=1 // loop_header_branch
      %30 = sbr.rel (%p28) target = $region8
    $region5: #{transformer_forward.7} parent=1 // loop_body
      %s32 = ssub.s32 %s27, 1
      %s33 = ssub.s32 %s27, 2
      %s34 = sadd.s32 %s27, 1
      %s35 = ssub.s32 %s27, %s34
      %p36 = scmp.eq.s32.totalorder %s35, 0
      %s38 = sadd.s32 %s37, 1
      %s39 = scalar_select %p36, %s37, %s38
      %p42 = pneg %p36
      %p43 = scmp.eq.s32.totalorder %s27, 1
      %p44 = por %p42, %p43
      %p45 = scmp.ne.s32.totalorder %s37, %s40
      %p46 = scmp.eq.s32.totalorder %s27, 0
      %p47 = por %p45, %p46
      %p48 = scmp.ne.s32.totalorder %s37, %s40
      %p49 = scmp.eq.s32.totalorder %s32, 1
      %p50 = por %p48, %p49
      %p51 = scmp.ne.s32.totalorder %s40, %s41
      %p52 = scmp.eq.s32.totalorder %s32, 0
      %p53 = por %p51, %p52
      %p54 = scmp.ne.s32.totalorder %s40, %s41
      %p55 = scmp.eq.s32.totalorder %s33, 1
      %p56 = por %p54, %p55
      %p58 = scmp.ne.s32.totalorder %s41, %s57
      %p59 = scmp.eq.s32.totalorder %s33, 0
      %p60 = por %p58, %p59
      %s61 = ssub.s32 %s27, %s34
      %p62 = scmp.eq.s32.totalorder %s61, 0
      %s64 = sadd.s32 %s63, 1
      %s65 = scalar_select %p62, %s63, %s64
      %p68 = pneg %p62
      %p69 = scmp.eq.s32.totalorder %s27, 1
      %p70 = por %p68, %p69
      %p71 = scmp.ne.s32.totalorder %s63, %s66
      %p72 = scmp.eq.s32.totalorder %s27, 0
      %p73 = por %p71, %p72
      %p74 = scmp.ne.s32.totalorder %s63, %s66
      %p75 = scmp.eq.s32.totalorder %s32, 1
      %p76 = por %p74, %p75
      %p77 = scmp.ne.s32.totalorder %s66, %s67
      %p78 = scmp.eq.s32.totalorder %s32, 0
      %p79 = por %p77, %p78
      %p80 = scmp.ne.s32.totalorder %s66, %s67
      %p81 = scmp.eq.s32.totalorder %s33, 1
      %p82 = por %p80, %p81
      %p84 = scmp.ne.s32.totalorder %s67, %s83
      %p85 = scmp.eq.s32.totalorder %s33, 0
      %p86 = por %p84, %p85
      %s88 = sadd.s32 %s87, 1
      %p91 = scmp.eq.s32.totalorder %s27, 1
      %p92 = scmp.ne.s32.totalorder %s87, %s89
      %p93 = scmp.eq.s32.totalorder %s27, 0
      %p94 = por %p92, %p93
      %p95 = scmp.ne.s32.totalorder %s87, %s89
      %p96 = scmp.eq.s32.totalorder %s32, 1
      %p97 = por %p95, %p96
      %p98 = scmp.ne.s32.totalorder %s89, %s90
      %p99 = scmp.eq.s32.totalorder %s32, 0
      %p100 = por %p98, %p99
      %p101 = scmp.ne.s32.totalorder %s89, %s90
      %p102 = scmp.eq.s32.totalorder %s33, 1
      %p103 = por %p101, %p102
      %p105 = scmp.ne.s32.totalorder %s90, %s104
      %p106 = scmp.eq.s32.totalorder %s33, 0
      %p107 = por %p105, %p106
      %s109 = sadd.s32 %s108, 1
      %p112 = scmp.eq.s32.totalorder %s27, 1
      %p113 = scmp.ne.s32.totalorder %s108, %s110
      %p114 = scmp.eq.s32.totalorder %s27, 0
      %p115 = por %p113, %p114
      %p116 = scmp.ne.s32.totalorder %s108, %s110
      %p117 = scmp.eq.s32.totalorder %s32, 1
      %p118 = por %p116, %p117
      %p119 = scmp.ne.s32.totalorder %s110, %s111
      %p120 = scmp.eq.s32.totalorder %s32, 0
      %p121 = por %p119, %p120
      %p122 = scmp.ne.s32.totalorder %s110, %s111
      %p123 = scmp.eq.s32.totalorder %s33, 1
      %p124 = por %p122, %p123
      %p126 = scmp.ne.s32.totalorder %s111, %s125
      %p127 = scmp.eq.s32.totalorder %s33, 0
      %p128 = por %p126, %p127
      %s130 = sadd.s32 %s129, 1
      %p133 = scmp.eq.s32.totalorder %s27, 1
      %p134 = scmp.ne.s32.totalorder %s129, %s131
      %p135 = scmp.eq.s32.totalorder %s27, 0
      %p136 = por %p134, %p135
      %p137 = scmp.ne.s32.totalorder %s129, %s131
      %p138 = scmp.eq.s32.totalorder %s32, 1
      %p139 = por %p137, %p138
      %p140 = scmp.ne.s32.totalorder %s131, %s132
      %p141 = scmp.eq.s32.totalorder %s32, 0
      %p142 = por %p140, %p141
      %p143 = scmp.ne.s32.totalorder %s131, %s132
      %p144 = scmp.eq.s32.totalorder %s33, 1
      %p145 = por %p143, %p144
      %p147 = scmp.ne.s32.totalorder %s132, %s146
      %p148 = scmp.eq.s32.totalorder %s33, 0
      %p149 = por %p147, %p148
      %s151 = sadd.s32 %s150, 1
      %p154 = scmp.eq.s32.totalorder %s27, 1
      %p155 = scmp.ne.s32.totalorder %s150, %s152
      %p156 = scmp.eq.s32.totalorder %s27, 0
      %p157 = por %p155, %p156
      %p158 = scmp.ne.s32.totalorder %s150, %s152
      %p159 = scmp.eq.s32.totalorder %s32, 1
      %p160 = por %p158, %p159
      %p161 = scmp.ne.s32.totalorder %s152, %s153
      %p162 = scmp.eq.s32.totalorder %s32, 0
      %p163 = por %p161, %p162
      %p164 = scmp.ne.s32.totalorder %s152, %s153
      %p165 = scmp.eq.s32.totalorder %s33, 1
      %p166 = por %p164, %p165
      %p168 = scmp.ne.s32.totalorder %s153, %s167
      %p169 = scmp.eq.s32.totalorder %s33, 0
      %p170 = por %p168, %p169
      %s172 = sadd.s32 %s171, 1
      %p175 = scmp.eq.s32.totalorder %s27, 1
      %p176 = scmp.ne.s32.totalorder %s171, %s173
      %p177 = scmp.eq.s32.totalorder %s27, 0
      %p178 = por %p176, %p177
      %p179 = scmp.ne.s32.totalorder %s171, %s173
      %p180 = scmp.eq.s32.totalorder %s32, 1
      %p181 = por %p179, %p180
      %p182 = scmp.ne.s32.totalorder %s173, %s174
      %p183 = scmp.eq.s32.totalorder %s32, 0
      %p184 = por %p182, %p183
      %p185 = scmp.ne.s32.totalorder %s173, %s174
      %p186 = scmp.eq.s32.totalorder %s33, 1
      %p187 = por %p185, %p186
      %p189 = scmp.ne.s32.totalorder %s174, %s188
      %p190 = scmp.eq.s32.totalorder %s33, 0
      %p191 = por %p189, %p190
      %s193 = sadd.s32 %s192, 1
      %p196 = scmp.eq.s32.totalorder %s27, 1
      %p197 = scmp.ne.s32.totalorder %s192, %s194
      %p198 = scmp.eq.s32.totalorder %s27, 0
      %p199 = por %p197, %p198
      %p200 = scmp.ne.s32.totalorder %s192, %s194
      %p201 = scmp.eq.s32.totalorder %s32, 1
      %p202 = por %p200, %p201
      %p203 = scmp.ne.s32.totalorder %s194, %s195
      %p204 = scmp.eq.s32.totalorder %s32, 0
      %p205 = por %p203, %p204
      %p206 = scmp.ne.s32.totalorder %s194, %s195
      %p207 = scmp.eq.s32.totalorder %s33, 1
      %p208 = por %p206, %p207
      %p210 = scmp.ne.s32.totalorder %s195, %s209
      %p211 = scmp.eq.s32.totalorder %s33, 0
      %p212 = por %p210, %p211
      %s214 = sadd.s32 %s213, 1
      %p217 = scmp.eq.s32.totalorder %s27, 1
      %p218 = scmp.ne.s32.totalorder %s213, %s215
      %p219 = scmp.eq.s32.totalorder %s27, 0
      %p220 = por %p218, %p219
      %p221 = scmp.ne.s32.totalorder %s213, %s215
      %p222 = scmp.eq.s32.totalorder %s32, 1
      %p223 = por %p221, %p222
      %p224 = scmp.ne.s32.totalorder %s215, %s216
      %p225 = scmp.eq.s32.totalorder %s32, 0
      %p226 = por %p224, %p225
      %p227 = scmp.ne.s32.totalorder %s215, %s216
      %p228 = scmp.eq.s32.totalorder %s33, 1
      %p229 = por %p227, %p228
      %p231 = scmp.ne.s32.totalorder %s216, %s230
      %p232 = scmp.eq.s32.totalorder %s33, 0
      %p233 = por %p231, %p232
      %s235 = sadd.s32 %s234, 1
      %p238 = scmp.eq.s32.totalorder %s27, 1
      %p239 = scmp.ne.s32.totalorder %s234, %s236
      %p240 = scmp.eq.s32.totalorder %s27, 0
      %p241 = por %p239, %p240
      %p242 = scmp.ne.s32.totalorder %s234, %s236
      %p243 = scmp.eq.s32.totalorder %s32, 1
      %p244 = por %p242, %p243
      %p245 = scmp.ne.s32.totalorder %s236, %s237
      %p246 = scmp.eq.s32.totalorder %s32, 0
      %p247 = por %p245, %p246
      %p248 = scmp.ne.s32.totalorder %s236, %s237
      %p249 = scmp.eq.s32.totalorder %s33, 1
      %p250 = por %p248, %p249
      %p252 = scmp.ne.s32.totalorder %s237, %s251
      %p253 = scmp.eq.s32.totalorder %s33, 0
      %p254 = por %p252, %p253
      %s256 = sadd.s32 %s255, 1
      %p259 = scmp.eq.s32.totalorder %s27, 1
      %p260 = scmp.ne.s32.totalorder %s255, %s257
      %p261 = scmp.eq.s32.totalorder %s27, 0
      %p262 = por %p260, %p261
      %p263 = scmp.ne.s32.totalorder %s255, %s257
      %p264 = scmp.eq.s32.totalorder %s32, 1
      %p265 = por %p263, %p264
      %p266 = scmp.ne.s32.totalorder %s257, %s258
      %p267 = scmp.eq.s32.totalorder %s32, 0
      %p268 = por %p266, %p267
      %p269 = scmp.ne.s32.totalorder %s257, %s258
      %p270 = scmp.eq.s32.totalorder %s33, 1
      %p271 = por %p269, %p270
      %p273 = scmp.ne.s32.totalorder %s258, %s272
      %p274 = scmp.eq.s32.totalorder %s33, 0
      %p275 = por %p273, %p274
      %s277 = sadd.s32 %s276, 1
      %p280 = scmp.eq.s32.totalorder %s27, 1
      %p281 = scmp.ne.s32.totalorder %s276, %s278
      %p282 = scmp.eq.s32.totalorder %s27, 0
      %p283 = por %p281, %p282
      %p284 = scmp.ne.s32.totalorder %s276, %s278
      %p285 = scmp.eq.s32.totalorder %s32, 1
      %p286 = por %p284, %p285
      %p287 = scmp.ne.s32.totalorder %s278, %s279
      %p288 = scmp.eq.s32.totalorder %s32, 0
      %p289 = por %p287, %p288
      %p290 = scmp.ne.s32.totalorder %s278, %s279
      %p291 = scmp.eq.s32.totalorder %s33, 1
      %p292 = por %p290, %p291
      %p294 = scmp.ne.s32.totalorder %s279, %s293
      %p295 = scmp.eq.s32.totalorder %s33, 0
      %p296 = por %p294, %p295
      %s298 = sadd.s32 %s297, 1
      %p301 = scmp.eq.s32.totalorder %s27, 1
      %p302 = scmp.ne.s32.totalorder %s297, %s299
      %p303 = scmp.eq.s32.totalorder %s27, 0
      %p304 = por %p302, %p303
      %p305 = scmp.ne.s32.totalorder %s297, %s299
      %p306 = scmp.eq.s32.totalorder %s32, 1
      %p307 = por %p305, %p306
      %p308 = scmp.ne.s32.totalorder %s299, %s300
      %p309 = scmp.eq.s32.totalorder %s32, 0
      %p310 = por %p308, %p309
      %p311 = scmp.ne.s32.totalorder %s299, %s300
      %p312 = scmp.eq.s32.totalorder %s33, 1
      %p313 = por %p311, %p312
      %p315 = scmp.ne.s32.totalorder %s300, %s314
      %p316 = scmp.eq.s32.totalorder %s33, 0
      %p317 = por %p315, %p316
      %s319 = sadd.s32 %s318, 1
      %p322 = scmp.eq.s32.totalorder %s27, 1
      %p323 = scmp.ne.s32.totalorder %s318, %s320
      %p324 = scmp.eq.s32.totalorder %s27, 0
      %p325 = por %p323, %p324
      %p326 = scmp.ne.s32.totalorder %s318, %s320
      %p327 = scmp.eq.s32.totalorder %s32, 1
      %p328 = por %p326, %p327
      %p329 = scmp.ne.s32.totalorder %s320, %s321
      %p330 = scmp.eq.s32.totalorder %s32, 0
      %p331 = por %p329, %p330
      %p332 = scmp.ne.s32.totalorder %s320, %s321
      %p333 = scmp.eq.s32.totalorder %s33, 1
      %p334 = por %p332, %p333
      %p336 = scmp.ne.s32.totalorder %s321, %s335
      %p337 = scmp.eq.s32.totalorder %s33, 0
      %p338 = por %p336, %p337
      %s340 = sadd.s32 %s339, 1
      %p343 = scmp.eq.s32.totalorder %s27, 1
      %p344 = scmp.ne.s32.totalorder %s339, %s341
      %p345 = scmp.eq.s32.totalorder %s27, 0
      %p346 = por %p344, %p345
      %p347 = scmp.ne.s32.totalorder %s339, %s341
      %p348 = scmp.eq.s32.totalorder %s32, 1
      %p349 = por %p347, %p348
      %p350 = scmp.ne.s32.totalorder %s341, %s342
      %p351 = scmp.eq.s32.totalorder %s32, 0
      %p352 = por %p350, %p351
      %p353 = scmp.ne.s32.totalorder %s341, %s342
      %p354 = scmp.eq.s32.totalorder %s33, 1
      %p355 = por %p353, %p354
      %p357 = scmp.ne.s32.totalorder %s342, %s356
      %p358 = scmp.eq.s32.totalorder %s33, 0
      %p359 = por %p357, %p358
      %s361 = sadd.s32 %s360, 1
      %p364 = scmp.eq.s32.totalorder %s27, 1
      %p365 = scmp.ne.s32.totalorder %s360, %s362
      %p366 = scmp.eq.s32.totalorder %s27, 0
      %p367 = por %p365, %p366
      %p368 = scmp.ne.s32.totalorder %s360, %s362
      %p369 = scmp.eq.s32.totalorder %s32, 1
      %p370 = por %p368, %p369
      %p371 = scmp.ne.s32.totalorder %s362, %s363
      %p372 = scmp.eq.s32.totalorder %s32, 0
      %p373 = por %p371, %p372
      %p374 = scmp.ne.s32.totalorder %s362, %s363
      %p375 = scmp.eq.s32.totalorder %s33, 1
      %p376 = por %p374, %p375
      %p378 = scmp.ne.s32.totalorder %s363, %s377
      %p379 = scmp.eq.s32.totalorder %s33, 0
      %p380 = por %p378, %p379
      %s382 = sadd.s32 %s381, 1
      %p385 = scmp.eq.s32.totalorder %s27, 1
      %p386 = scmp.ne.s32.totalorder %s381, %s383
      %p387 = scmp.eq.s32.totalorder %s27, 0
      %p388 = por %p386, %p387
      %p389 = scmp.ne.s32.totalorder %s381, %s383
      %p390 = scmp.eq.s32.totalorder %s32, 1
      %p391 = por %p389, %p390
      %p392 = scmp.ne.s32.totalorder %s383, %s384
      %p393 = scmp.eq.s32.totalorder %s32, 0
      %p394 = por %p392, %p393
      %p395 = scmp.ne.s32.totalorder %s383, %s384
      %p396 = scmp.eq.s32.totalorder %s33, 1
      %p397 = por %p395, %p396
      %p399 = scmp.ne.s32.totalorder %s384, %s398
      %p400 = scmp.eq.s32.totalorder %s33, 0
      %p401 = por %p399, %p400
      %s403 = sadd.s32 %s402, 1
      %p406 = scmp.eq.s32.totalorder %s27, 1
      %p407 = scmp.ne.s32.totalorder %s402, %s404
      %p408 = scmp.eq.s32.totalorder %s27, 0
      %p409 = por %p407, %p408
      %p410 = scmp.ne.s32.totalorder %s402, %s404
      %p411 = scmp.eq.s32.totalorder %s32, 1
      %p412 = por %p410, %p411
      %p413 = scmp.ne.s32.totalorder %s404, %s405
      %p414 = scmp.eq.s32.totalorder %s32, 0
      %p415 = por %p413, %p414
      %p416 = scmp.ne.s32.totalorder %s404, %s405
      %p417 = scmp.eq.s32.totalorder %s33, 1
      %p418 = por %p416, %p417
      %p420 = scmp.ne.s32.totalorder %s405, %s419
      %p421 = scmp.eq.s32.totalorder %s33, 0
      %p422 = por %p420, %p421
      %s423 = ssub.s32 %s27, %s34
      %p424 = scmp.eq.s32.totalorder %s423, 0
      %s426 = sadd.s32 %s425, 1
      %s427 = scalar_select %p424, %s425, %s426
      %p430 = pneg %p424
      %p431 = scmp.eq.s32.totalorder %s27, 1
      %p432 = por %p430, %p431
      %p433 = scmp.ne.s32.totalorder %s425, %s428
      %p434 = scmp.eq.s32.totalorder %s27, 0
      %p435 = por %p433, %p434
      %p436 = scmp.ne.s32.totalorder %s425, %s428
      %p437 = scmp.eq.s32.totalorder %s32, 1
      %p438 = por %p436, %p437
      %p439 = scmp.ne.s32.totalorder %s428, %s429
      %p440 = scmp.eq.s32.totalorder %s32, 0
      %p441 = por %p439, %p440
      %p442 = scmp.ne.s32.totalorder %s428, %s429
      %p443 = scmp.eq.s32.totalorder %s33, 1
      %p444 = por %p442, %p443
      %p446 = scmp.ne.s32.totalorder %s429, %s445
      %p447 = scmp.eq.s32.totalorder %s33, 0
      %p448 = por %p446, %p447
      %p449 = scmp.le.s32.totalorder 1, %s27
      %p450 = scmp.lt.s32.totalorder %s27, 3
      %p451 = pnand %p449, %p450
      %p452 = pneg %p451
      // Predicated region
      $region9: #{transformer_forward.7} parent=5 // pred_check
        _
      $region10: #{transformer_forward.7} parent=5 // pred_check_branch
        %454 = sbr.rel (%p451) target = $region12
      $region11: #{transformer_forward.7} parent=5 // pred_region
        %s455 = ssub.s32 %s27, 1
        // Predicated region
        $region13: #{transformer_forward.7} parent=11 // pred_check
          %p456 = pneg %p100
        $region14: #{transformer_forward.7} parent=11 // pred_check_branch
          %458 = sbr.rel (%p456) target = $region16
        $region15: #{transformer_forward.7} parent=11 // pred_region
          _
        $region16: #{transformer_forward.7} parent=11 // pred_fallthru
          _
        // Predicated region
        $region17: #{transformer_forward.7} parent=11 // pred_check
          %p459 = pneg %p121
        $region18: #{transformer_forward.7} parent=11 // pred_check_branch
          %461 = sbr.rel (%p459) target = $region20
        $region19: #{transformer_forward.7} parent=11 // pred_region
          _
        $region20: #{transformer_forward.7} parent=11 // pred_fallthru
          _
        // Predicated region
        $region21: #{transformer_forward.7} parent=11 // pred_check
          %p462 = pneg %p142
        $region22: #{transformer_forward.7} parent=11 // pred_check_branch
          %464 = sbr.rel (%p462) target = $region24
        $region23: #{transformer_forward.7} parent=11 // pred_region
          _
        $region24: #{transformer_forward.7} parent=11 // pred_fallthru
          _
        // Predicated region
        $region25: #{transformer_forward.7} parent=11 // pred_check
          %p465 = pneg %p163
        $region26: #{transformer_forward.7} parent=11 // pred_check_branch
          %467 = sbr.rel (%p465) target = $region28
        $region27: #{transformer_forward.7} parent=11 // pred_region
          _
        $region28: #{transformer_forward.7} parent=11 // pred_fallthru
          _
        // Predicated region
        $region29: #{transformer_forward.7} parent=11 // pred_check
          %p468 = pneg %p184
        $region30: #{transformer_forward.7} parent=11 // pred_check_branch
          %470 = sbr.rel (%p468) target = $region32
        $region31: #{transformer_forward.7} parent=11 // pred_region
          _
        $region32: #{transformer_forward.7} parent=11 // pred_fallthru
          _
        // Predicated region
        $region33: #{transformer_forward.7} parent=11 // pred_check
          %p471 = pneg %p205
        $region34: #{transformer_forward.7} parent=11 // pred_check_branch
          %473 = sbr.rel (%p471) target = $region36
        $region35: #{transformer_forward.7} parent=11 // pred_region
          _
        $region36: #{transformer_forward.7} parent=11 // pred_fallthru
          _
        // Predicated region
        $region37: #{transformer_forward.7} parent=11 // pred_check
          %p474 = pneg %p226
        $region38: #{transformer_forward.7} parent=11 // pred_check_branch
          %476 = sbr.rel (%p474) target = $region40
        $region39: #{transformer_forward.7} parent=11 // pred_region
          _
        $region40: #{transformer_forward.7} parent=11 // pred_fallthru
          _
        // Predicated region
        $region41: #{transformer_forward.7} parent=11 // pred_check
          %p477 = pneg %p247
        $region42: #{transformer_forward.7} parent=11 // pred_check_branch
          %479 = sbr.rel (%p477) target = $region44
        $region43: #{transformer_forward.7} parent=11 // pred_region
          _
        $region44: #{transformer_forward.7} parent=11 // pred_fallthru
          _
        // Predicated region
        $region45: #{transformer_forward.7} parent=11 // pred_check
          %p480 = pneg %p268
        $region46: #{transformer_forward.7} parent=11 // pred_check_branch
          %482 = sbr.rel (%p480) target = $region48
        $region47: #{transformer_forward.7} parent=11 // pred_region
          _
        $region48: #{transformer_forward.7} parent=11 // pred_fallthru
          _
        // Predicated region
        $region49: #{transformer_forward.7} parent=11 // pred_check
          %p483 = pneg %p289
        $region50: #{transformer_forward.7} parent=11 // pred_check_branch
          %485 = sbr.rel (%p483) target = $region52
        $region51: #{transformer_forward.7} parent=11 // pred_region
          _
        $region52: #{transformer_forward.7} parent=11 // pred_fallthru
          _
        // Predicated region
        $region53: #{transformer_forward.7} parent=11 // pred_check
          %p486 = pneg %p310
        $region54: #{transformer_forward.7} parent=11 // pred_check_branch
          %488 = sbr.rel (%p486) target = $region56
        $region55: #{transformer_forward.7} parent=11 // pred_region
          _
        $region56: #{transformer_forward.7} parent=11 // pred_fallthru
          _
        // Predicated region
        $region57: #{transformer_forward.7} parent=11 // pred_check
          %p489 = pneg %p331
        $region58: #{transformer_forward.7} parent=11 // pred_check_branch
          %491 = sbr.rel (%p489) target = $region60
        $region59: #{transformer_forward.7} parent=11 // pred_region
          _
        $region60: #{transformer_forward.7} parent=11 // pred_fallthru
          _
        // Predicated region
        $region61: #{transformer_forward.7} parent=11 // pred_check
          %p492 = pneg %p352
        $region62: #{transformer_forward.7} parent=11 // pred_check_branch
          %494 = sbr.rel (%p492) target = $region64
        $region63: #{transformer_forward.7} parent=11 // pred_region
          _
        $region64: #{transformer_forward.7} parent=11 // pred_fallthru
          _
        // Predicated region
        $region65: #{transformer_forward.7} parent=11 // pred_check
          %p495 = pneg %p373
        $region66: #{transformer_forward.7} parent=11 // pred_check_branch
          %497 = sbr.rel (%p495) target = $region68
        $region67: #{transformer_forward.7} parent=11 // pred_region
          _
        $region68: #{transformer_forward.7} parent=11 // pred_fallthru
          _
        // Predicated region
        $region69: #{transformer_forward.7} parent=11 // pred_check
          %p498 = pneg %p394
        $region70: #{transformer_forward.7} parent=11 // pred_check_branch
          %500 = sbr.rel (%p498) target = $region72
        $region71: #{transformer_forward.7} parent=11 // pred_region
          _
        $region72: #{transformer_forward.7} parent=11 // pred_fallthru
          _
        // Predicated region
        $region73: #{transformer_forward.7} parent=11 // pred_check
          %p501 = pneg %p415
        $region74: #{transformer_forward.7} parent=11 // pred_check_branch
          %503 = sbr.rel (%p501) target = $region76
        $region75: #{transformer_forward.7} parent=11 // pred_region
          _
        $region76: #{transformer_forward.7} parent=11 // pred_fallthru
          _
      $region12: #{transformer_forward.7} parent=5 // pred_fallthru
        _
      %p504 = scmp.lt.s32.totalorder %s27, 2
      // Predicated region
      $region77: #{transformer_forward.7} parent=5 // pred_check
        %p505 = pneg %p504
      $region78: #{transformer_forward.7} parent=5 // pred_check_branch
        %507 = sbr.rel (%p505) target = $region80
      $region79: #{transformer_forward.7} parent=5 // pred_region
        // Predicated region
        $region81: #{transformer_forward.7} parent=79 // pred_check
          %p508 = pneg %p47
        $region82: #{transformer_forward.7} parent=79 // pred_check_branch
          %510 = sbr.rel (%p508) target = $region84
        $region83: #{transformer_forward.7} parent=79 // pred_region
          %p511 = scmp.lt.s32.totalorder %s27, 1
          %s512 = scalar_select %p511, %s27, 1
          %s513 = smul.addr %s512, 8
          %s514 = scalar_lea.vmem %s0, %s513
        $region84: #{transformer_forward.7} parent=79 // pred_fallthru
          _
        // Predicated region
        $region85: #{transformer_forward.7} parent=79 // pred_check
          %p515 = pneg %p73
        $region86: #{transformer_forward.7} parent=79 // pred_check_branch
          %517 = sbr.rel (%p515) target = $region88
        $region87: #{transformer_forward.7} parent=79 // pred_region
          %p518 = scmp.lt.s32.totalorder %s27, 1
          %s519 = scalar_select %p518, %s27, 1
          %s520 = smul.addr %s519, 8
          %s521 = scalar_lea.vmem %s1, %s520
        $region88: #{transformer_forward.7} parent=79 // pred_fallthru
          _
      $region80: #{transformer_forward.7} parent=5 // pred_fallthru
        _
      %p522 = scmp.le.s32.totalorder 1, %s27
      %p523 = scmp.lt.s32.totalorder %s27, 3
      %p524 = pnand %p522, %p523
      %p525 = pneg %p524
      // Predicated region
      $region89: #{transformer_forward.7} parent=5 // pred_check
        _
      $region90: #{transformer_forward.7} parent=5 // pred_check_branch
        %527 = sbr.rel (%p524) target = $region92
      $region91: #{transformer_forward.7} parent=5 // pred_region
        %s528 = ssub.s32 %s27, 1
        %p529 = scmp.lt.s32.totalorder %s32, 1
        %s530 = scalar_select %p529, %s32, 1
        %s531 = smul.addr %s530, 8
        %s532 = scalar_lea.vmem %s0, %s531
        %p533 = pneg %p53
        %p534 = pneg %p50
        %p535 = scmp.lt.s32.totalorder %s32, 1
        %s536 = scalar_select %p535, %s32, 1
        %s537 = smul.addr %s536, 8
        %s538 = scalar_lea.vmem %s1, %s537
        %p539 = pneg %p79
        %p540 = pneg %p76
        %p541 = pneg %p100
        %p542 = pneg %p97
        %p543 = pneg %p121
        %p544 = pneg %p118
        %p545 = pneg %p142
        %p546 = pneg %p139
        %p547 = pneg %p163
        %p548 = pneg %p160
        %p549 = pneg %p184
        %p550 = pneg %p181
        %p551 = pneg %p205
        %p552 = pneg %p202
        %p553 = pneg %p226
        %p554 = pneg %p223
        %p555 = pneg %p247
        %p556 = pneg %p244
        %p557 = pneg %p268
        %p558 = pneg %p265
        %p559 = pneg %p289
        %p560 = pneg %p286
        %p561 = pneg %p310
        %p562 = pneg %p307
        %p563 = pneg %p331
        %p564 = pneg %p328
        %p565 = pneg %p352
        %p566 = pneg %p349
        %p567 = pneg %p373
        %p568 = pneg %p370
        %p569 = pneg %p394
        %p570 = pneg %p391
        %p571 = pneg %p415
        %p572 = pneg %p412
        %p573 = pneg %p441
        %p574 = pneg %p438
        %s575 = sand.u32 %s428, 1
        %s576 = scalar_lea.sflag [#allocation3], %s575
        %s577 = sand.u32 %s428, 1
        %s578 = smul.addr %s577, 8
        %s579 = scalar_lea.vmem [#allocation2], %s578
        %p580 = scmp.lt.s32.totalorder %s32, 1
        %s581 = scalar_select %p580, %s32, 1
        %s582 = smul.addr %s581, 8
        %s583 = scalar_lea.vmem %s0, %s582
        %p584 = scmp.lt.s32.totalorder %s32, 1
        %s585 = scalar_select %p584, %s32, 1
        %s586 = smul.addr %s585, 8
        %s587 = scalar_lea.vmem %s1, %s586
        %v589 = vld [vmem:[%s583] sm:$0xff]
        %v590 = vld [vmem:[%s587] sm:$0xff]
        %v591 = vadd.f32 %v589, %v589
        %v592 = vld [vmem:[%s8] sm:$0x1]
        %v593 = vld [vmem:[%s9] sm:$0x1]
        %vm594 = vcmask 261120
        %v595 = vsel %vm594, %v591, 0.0
        %596 = vadd.xlane.f32.xlu0 %v595
        %v597 = vpop.xlane.xlu0 %596
        %v598 = vrcp.pop 32.0
        %v599 = vmul.f32 %v597, %v598
        %v600 = vsub.f32 %v591, %v599
        %v601 = vmul.f32 %v600, %v600
        %v602 = vsel %vm594, %v601, 0.0
        %603 = vadd.xlane.f32.xlu0 %v602
        %v604 = vpop.xlane.xlu0 %603
        %v605 = vmul.f32 %v604, 0.032258064
        %v606 = vrsqrt.pop %v605
        %v607 = vmul.f32 %v605, %v606
        %vm608 = vcmp.eq.f32.partialorder %v605, inf
        %v609 = vsel %vm608, %v605, %v607
        %vm610 = vcmp.eq.f32.partialorder %v605, 0.0
        %v611 = vand.u32 %v605, 2147483648
        %v612 = vsel %vm610, %v611, %v609
        %v614 = vlaneseq
        %v615 = vshrl.u32 %v614, 7
        %v616 = vsub.s32 0, %v615
        %v617 = vrot.slane %v592, %v616
        %v619 = vmul.f32 %v617, %v600
        %v620 = vadd.f32 %v612, 1e-06
        %v621 = vrcp.pop %v620
        %v622 = vmul.f32 %v619, %v621
        %v624 = vlaneseq
        %v625 = vshrl.u32 %v624, 7
        %v626 = vsub.s32 0, %v625
        %v627 = vrot.slane %v593, %v626
        %v629 = vadd.f32 %v622, %v627
        %v630 = vpack.c.bf16 %v629, %v629
        %v631 = vld [vmem:[%s2] sm:$0xf]
        %v632 = vld [vmem:[%s2 + $0x4] sm:$0xf]
        %v633 = vld [vmem:[%s2 + $0x8] sm:$0xf]
        %v634 = vld [vmem:[%s2 + $0xc] sm:$0xf]
        %v635 = vld [vmem:[%s3] sm:$0x1]
        %v637 = vlaneseq
        %v638 = vshrl.u32 %v637, 7
        %v639 = vsub.s32 0, %v638
        %v640 = vrot.slane %v635, %v639
        %v646 = vunpack.c.l.b16 %v631
        %v647 = vunpack.c.l.b16 %v632
        %v648 = vunpack.c.l.b16 %v633
        %v649 = vunpack.c.l.b16 %v634
        %v650 = vpack.c.b16 %v647, %v646
        %v651 = vpack.c.b16 %v649, %v648
        %v655 = vsel %vm594, %v630, 0
        %657 = vmatprep.subr.bf16.mxu0 0
        %658 = vmatpush1.bf16.msra.mxu0 %v650
        %659 = vmatprep.subr.bf16.mxu0 0
        %660 = vmatpush1.bf16.msra.mxu0 %v651
        %661 = vmatprep.subr.bf16.mxu0 0
        %662 = vmatpush1.bf16.msra.mxu0 0
        %663 = vmatprep.subr.bf16.mxu0 0
        %664 = vmatpush1.bf16.msra.mxu0 0
        %665 = vmatprep.subr.bf16.mxu0 0
        %666 = vmatpush1.bf16.msra.mxu0 0
        %667 = vmatprep.subr.bf16.mxu0 0
        %668 = vmatpush1.bf16.msra.mxu0 0
        %669 = vmatprep.subr.bf16.mxu0 0
        %670 = vmatpush1.bf16.msra.mxu0 0
        %671 = vmatprep.subr.bf16.mxu0 0
        %672 = vmatpush1.bf16.msra.mxu0 0
        %673 = vmatprep.subr.bf16.mxu0 0
        %674 = vmatpush1.bf16.msra.mxu0 0
        %675 = vmatprep.subr.bf16.mxu0 0
        %676 = vmatpush1.bf16.msra.mxu0 0
        %677 = vmatprep.subr.bf16.mxu0 0
        %678 = vmatpush1.bf16.msra.mxu0 0
        %679 = vmatprep.subr.bf16.mxu0 0
        %680 = vmatpush1.bf16.msra.mxu0 0
        %681 = vmatprep.subr.bf16.mxu0 0
        %682 = vmatpush1.bf16.msra.mxu0 0
        %683 = vmatprep.subr.bf16.mxu0 0
        %684 = vmatpush1.bf16.msra.mxu0 0
        %685 = vmatprep.subr.bf16.mxu0 0
        %686 = vmatpush1.bf16.msra.mxu0 0
        %687 = vmatprep.subr.bf16.mxu0 0
        %688 = vmatpush1.bf16.msra.mxu0 0
        %689 = vmatprep.mubr.bf16.mxu0 0
        %690 = vmatmul.mubr.bf16.gmra.mrb[0].mxu0 %v655
        %v691 = vpop.f32.mrb[0].mxu0
        %v692 = vadd.f32 %v640, %v691
        %v693 = vpop.f32.mrb[0].mxu0
        %v694 = vpop.f32.mrb[0].mxu0
        %v695 = vpop.f32.mrb[0].mxu0
        %696 = vdwg.mxu0
        %v697 = vpack.c.bf16 %v590, %v590
        %v698 = vld [vmem:[%s4] sm:$0xf]
        %v699 = vld [vmem:[%s4 + $0x4] sm:$0xf]
        %v700 = vld [vmem:[%s4 + $0x8] sm:$0xf]
        %v701 = vld [vmem:[%s4 + $0xc] sm:$0xf]
        %v702 = vld [vmem:[%s5] sm:$0x1]
        %v704 = vlaneseq
        %v705 = vshrl.u32 %v704, 7
        %v706 = vsub.s32 0, %v705
        %v707 = vrot.slane %v702, %v706
        %v713 = vunpack.c.l.b16 %v698
        %v714 = vunpack.c.l.b16 %v699
        %v715 = vunpack.c.l.b16 %v700
        %v716 = vunpack.c.l.b16 %v701
        %v717 = vpack.c.b16 %v714, %v713
        %v718 = vpack.c.b16 %v716, %v715
        %v722 = vsel %vm594, %v697, 0
        %724 = vmatprep.subr.bf16.mxu0 0
        %725 = vmatpush1.bf16.msra.mxu0 %v717
        %726 = vmatprep.subr.bf16.mxu0 0
        %727 = vmatpush1.bf16.msra.mxu0 %v718
        %728 = vmatprep.subr.bf16.mxu0 0
        %729 = vmatpush1.bf16.msra.mxu0 0
        %730 = vmatprep.subr.bf16.mxu0 0
        %731 = vmatpush1.bf16.msra.mxu0 0
        %732 = vmatprep.subr.bf16.mxu0 0
        %733 = vmatpush1.bf16.msra.mxu0 0
        %734 = vmatprep.subr.bf16.mxu0 0
        %735 = vmatpush1.bf16.msra.mxu0 0
        %736 = vmatprep.subr.bf16.mxu0 0
        %737 = vmatpush1.bf16.msra.mxu0 0
        %738 = vmatprep.subr.bf16.mxu0 0
        %739 = vmatpush1.bf16.msra.mxu0 0
        %740 = vmatprep.subr.bf16.mxu0 0
        %741 = vmatpush1.bf16.msra.mxu0 0
        %742 = vmatprep.subr.bf16.mxu0 0
        %743 = vmatpush1.bf16.msra.mxu0 0
        %744 = vmatprep.subr.bf16.mxu0 0
        %745 = vmatpush1.bf16.msra.mxu0 0
        %746 = vmatprep.subr.bf16.mxu0 0
        %747 = vmatpush1.bf16.msra.mxu0 0
        %748 = vmatprep.subr.bf16.mxu0 0
        %749 = vmatpush1.bf16.msra.mxu0 0
        %750 = vmatprep.subr.bf16.mxu0 0
        %751 = vmatpush1.bf16.msra.mxu0 0
        %752 = vmatprep.subr.bf16.mxu0 0
        %753 = vmatpush1.bf16.msra.mxu0 0
        %754 = vmatprep.subr.bf16.mxu0 0
        %755 = vmatpush1.bf16.msra.mxu0 0
        %756 = vmatprep.mubr.bf16.mxu0 0
        %757 = vmatmul.mubr.bf16.gmra.mrb[0].mxu0 %v722
        %v758 = vpop.f32.mrb[0].mxu0
        %v759 = vadd.f32 %v707, %v758
        %v760 = vpop.f32.mrb[0].mxu0
        %v761 = vpop.f32.mrb[0].mxu0
        %v762 = vpop.f32.mrb[0].mxu0
        %763 = vdwg.mxu0
        %v764 = vpack.c.bf16 %v692, %v692
        %v765 = vpack.c.bf16 %v759, %v759
        %vm766 = vcmask 64512
        %v768 = vsel %vm766, %v764, 0
        %v771 = vsel %vm766, %v765, 0
        %773 = vmatprep.subr.bf16.mxu0 0
        %774 = vmatpush1.bf16.xpose.msra.mxu0 %v771
        %775 = vmatprep.subr.bf16.mxu0 0
        %776 = vmatpush1.bf16.xpose.msra.mxu0 0
        %777 = vmatprep.subr.bf16.mxu0 0
        %778 = vmatpush1.bf16.xpose.msra.mxu0 0
        %779 = vmatprep.subr.bf16.mxu0 0
        %780 = vmatpush1.bf16.xpose.msra.mxu0 0
        %781 = vmatprep.subr.bf16.mxu0 0
        %782 = vmatpush1.bf16.xpose.msra.mxu0 0
        %783 = vmatprep.subr.bf16.mxu0 0
        %784 = vmatpush1.bf16.xpose.msra.mxu0 0
        %785 = vmatprep.subr.bf16.mxu0 0
        %786 = vmatpush1.bf16.xpose.msra.mxu0 0
        %787 = vmatprep.subr.bf16.mxu0 0
        %788 = vmatpush1.bf16.xpose.msra.mxu0 0
        %789 = vmatprep.subr.bf16.mxu0 0
        %790 = vmatpush1.bf16.xpose.msra.mxu0 0
        %791 = vmatprep.subr.bf16.mxu0 0
        %792 = vmatpush1.bf16.xpose.msra.mxu0 0
        %793 = vmatprep.subr.bf16.mxu0 0
        %794 = vmatpush1.bf16.xpose.msra.mxu0 0
        %795 = vmatprep.subr.bf16.mxu0 0
        %796 = vmatpush1.bf16.xpose.msra.mxu0 0
        %797 = vmatprep.subr.bf16.mxu0 0
        %798 = vmatpush1.bf16.xpose.msra.mxu0 0
        %799 = vmatprep.subr.bf16.mxu0 0
        %800 = vmatpush1.bf16.xpose.msra.mxu0 0
        %801 = vmatprep.subr.bf16.mxu0 0
        %802 = vmatpush1.bf16.xpose.msra.mxu0 0
        %803 = vmatprep.subr.bf16.mxu0 0
        %804 = vmatpush1.bf16.xpose.msra.mxu0 0
        %805 = vmatprep.mubr.bf16.mxu0 0
        %806 = vmatmul.mubr.bf16.gmra.mrb[0].mxu0 %v768
        %v807 = vpop.f32.mrb[0].mxu0
        %v808 = vadd.f32 0.0, %v807
        %v809 = vpop.f32.mrb[0].mxu0
        %v810 = vpop.f32.mrb[0].mxu0
        %v811 = vpop.f32.mrb[0].mxu0
        %812 = vdwg.mxu0
        %v813 = vmul.f32 %v808, 0.35355338
        %v814 = vsel %vm766, %v813, -inf
        %815 = vmax.xlane.f32.xlu0 %v814
        %v816 = vpop.xlane.xlu0 %815
        %v817 = vsub.f32 %v813, %v816
        %v818 = vmul.f32 %v817, 1.442695
        %v819 = vpow.pop %v818
        %v820 = vsel %vm766, %v819, 0.0
        %821 = vadd.xlane.f32.xlu0 %v820
        %v822 = vpop.xlane.xlu0 %821
        %v823 = vrcp.pop %v822
        %v824 = vmul.f32 %v819, %v823
        %v825 = vpack.c.bf16 %v824, %v824
        %827 = vrot.lane.b32.xlu0 %v765, 96
        %v828 = vpop.permute.xlu0 %827
        %v830 = vsel %vm766, %v825, 0
        %vm832 = vcmask 1043456
        %v834 = vsel %vm832, %v828, 0
        %836 = vmatprep.subr.bf16.mxu0 0
        %837 = vmatpush1.bf16.msra.mxu0 %v834
        %838 = vmatprep.subr.bf16.mxu0 0
        %839 = vmatpush1.bf16.msra.mxu0 0
        %840 = vmatprep.subr.bf16.mxu0 0
        %841 = vmatpush1.bf16.msra.mxu0 0
        %842 = vmatprep.subr.bf16.mxu0 0
        %843 = vmatpush1.bf16.msra.mxu0 0
        %844 = vmatprep.subr.bf16.mxu0 0
        %845 = vmatpush1.bf16.msra.mxu0 0
        %846 = vmatprep.subr.bf16.mxu0 0
        %847 = vmatpush1.bf16.msra.mxu0 0
        %848 = vmatprep.subr.bf16.mxu0 0
        %849 = vmatpush1.bf16.msra.mxu0 0
        %850 = vmatprep.subr.bf16.mxu0 0
        %851 = vmatpush1.bf16.msra.mxu0 0
        %852 = vmatprep.subr.bf16.mxu0 0
        %853 = vmatpush1.bf16.msra.mxu0 0
        %854 = vmatprep.subr.bf16.mxu0 0
        %855 = vmatpush1.bf16.msra.mxu0 0
        %856 = vmatprep.subr.bf16.mxu0 0
        %857 = vmatpush1.bf16.msra.mxu0 0
        %858 = vmatprep.subr.bf16.mxu0 0
        %859 = vmatpush1.bf16.msra.mxu0 0
        %860 = vmatprep.subr.bf16.mxu0 0
        %861 = vmatpush1.bf16.msra.mxu0 0
        %862 = vmatprep.subr.bf16.mxu0 0
        %863 = vmatpush1.bf16.msra.mxu0 0
        %864 = vmatprep.subr.bf16.mxu0 0
        %865 = vmatpush1.bf16.msra.mxu0 0
        %866 = vmatprep.subr.bf16.mxu0 0
        %867 = vmatpush1.bf16.msra.mxu0 0
        %868 = vmatprep.mubr.bf16.mxu0 0
        %869 = vmatmul.mubr.bf16.gmra.mrb[0].mxu0 %v830
        %v870 = vpop.f32.mrb[0].mxu0
        %v871 = vadd.f32 0.0, %v870
        %v872 = vpop.f32.mrb[0].mxu0
        %v873 = vpop.f32.mrb[0].mxu0
        %v874 = vpop.f32.mrb[0].mxu0
        %875 = vdwg.mxu0
        %877 = vrot.lane.b32.xlu0 %v764, 120
        %v878 = vpop.permute.xlu0 %877
        %879 = vrot.lane.b32.xlu0 %v765, 120
        %v880 = vpop.permute.xlu0 %879
        %v882 = vsel %vm766, %v878, 0
        %v885 = vsel %vm766, %v880, 0
        %887 = vmatprep.subr.bf16.mxu0 0
        %888 = vmatpush1.bf16.xpose.msra.mxu0 %v885
        %889 = vmatprep.subr.bf16.mxu0 0
        %890 = vmatpush1.bf16.xpose.msra.mxu0 0
        %891 = vmatprep.subr.bf16.mxu0 0
        %892 = vmatpush1.bf16.xpose.msra.mxu0 0
        %893 = vmatprep.subr.bf16.mxu0 0
        %894 = vmatpush1.bf16.xpose.msra.mxu0 0
        %895 = vmatprep.subr.bf16.mxu0 0
        %896 = vmatpush1.bf16.xpose.msra.mxu0 0
        %897 = vmatprep.subr.bf16.mxu0 0
        %898 = vmatpush1.bf16.xpose.msra.mxu0 0
        %899 = vmatprep.subr.bf16.mxu0 0
        %900 = vmatpush1.bf16.xpose.msra.mxu0 0
        %901 = vmatprep.subr.bf16.mxu0 0
        %902 = vmatpush1.bf16.xpose.msra.mxu0 0
        %903 = vmatprep.subr.bf16.mxu0 0
        %904 = vmatpush1.bf16.xpose.msra.mxu0 0
        %905 = vmatprep.subr.bf16.mxu0 0
        %906 = vmatpush1.bf16.xpose.msra.mxu0 0
        %907 = vmatprep.subr.bf16.mxu0 0
        %908 = vmatpush1.bf16.xpose.msra.mxu0 0
        %909 = vmatprep.subr.bf16.mxu0 0
        %910 = vmatpush1.bf16.xpose.msra.mxu0 0
        %911 = vmatprep.subr.bf16.mxu0 0
        %912 = vmatpush1.bf16.xpose.msra.mxu0 0
        %913 = vmatprep.subr.bf16.mxu0 0
        %914 = vmatpush1.bf16.xpose.msra.mxu0 0
        %915 = vmatprep.subr.bf16.mxu0 0
        %916 = vmatpush1.bf16.xpose.msra.mxu0 0
        %917 = vmatprep.subr.bf16.mxu0 0
        %918 = vmatpush1.bf16.xpose.msra.mxu0 0
        %919 = vmatprep.mubr.bf16.mxu0 0
        %920 = vmatmul.mubr.bf16.gmra.mrb[0].mxu0 %v882
        %v921 = vpop.f32.mrb[0].mxu0
        %v922 = vadd.f32 0.0, %v921
        %v923 = vpop.f32.mrb[0].mxu0
        %v924 = vpop.f32.mrb[0].mxu0
        %v925 = vpop.f32.mrb[0].mxu0
        %926 = vdwg.mxu0
        %v927 = vmul.f32 %v922, 0.35355338
        %v928 = vsel %vm766, %v927, -inf
        %929 = vmax.xlane.f32.xlu0 %v928
        %v930 = vpop.xlane.xlu0 %929
        %v931 = vsub.f32 %v927, %v930
        %v932 = vmul.f32 %v931, 1.442695
        %v933 = vpow.pop %v932
        %v934 = vsel %vm766, %v933, 0.0
        %935 = vadd.xlane.f32.xlu0 %v934
        %v936 = vpop.xlane.xlu0 %935
        %v937 = vrcp.pop %v936
        %v938 = vmul.f32 %v933, %v937
        %v939 = vpack.c.bf16 %v938, %v938
        %940 = vrot.lane.b32.xlu0 %v765, 88
        %v941 = vpop.permute.xlu0 %940
        %v943 = vsel %vm766, %v939, 0
        %v946 = vsel %vm832, %v941, 0
        %948 = vmatprep.subr.bf16.mxu0 0
        %949 = vmatpush1.bf16.msra.mxu0 %v946
        %950 = vmatprep.subr.bf16.mxu0 0
        %951 = vmatpush1.bf16.msra.mxu0 0
        %952 = vmatprep.subr.bf16.mxu0 0
        %953 = vmatpush1.bf16.msra.mxu0 0
        %954 = vmatprep.subr.bf16.mxu0 0
        %955 = vmatpush1.bf16.msra.mxu0 0
        %956 = vmatprep.subr.bf16.mxu0 0
        %957 = vmatpush1.bf16.msra.mxu0 0
        %958 = vmatprep.subr.bf16.mxu0 0
        %959 = vmatpush1.bf16.msra.mxu0 0
        %960 = vmatprep.subr.bf16.mxu0 0
        %961 = vmatpush1.bf16.msra.mxu0 0
        %962 = vmatprep.subr.bf16.mxu0 0
        %963 = vmatpush1.bf16.msra.mxu0 0
        %964 = vmatprep.subr.bf16.mxu0 0
        %965 = vmatpush1.bf16.msra.mxu0 0
        %966 = vmatprep.subr.bf16.mxu0 0
        %967 = vmatpush1.bf16.msra.mxu0 0
        %968 = vmatprep.subr.bf16.mxu0 0
        %969 = vmatpush1.bf16.msra.mxu0 0
        %970 = vmatprep.subr.bf16.mxu0 0
        %971 = vmatpush1.bf16.msra.mxu0 0
        %972 = vmatprep.subr.bf16.mxu0 0
        %973 = vmatpush1.bf16.msra.mxu0 0
        %974 = vmatprep.subr.bf16.mxu0 0
        %975 = vmatpush1.bf16.msra.mxu0 0
        %976 = vmatprep.subr.bf16.mxu0 0
        %977 = vmatpush1.bf16.msra.mxu0 0
        %978 = vmatprep.subr.bf16.mxu0 0
        %979 = vmatpush1.bf16.msra.mxu0 0
        %980 = vmatprep.mubr.bf16.mxu0 0
        %981 = vmatmul.mubr.bf16.gmra.mrb[0].mxu0 %v943
        %v982 = vpop.f32.mrb[0].mxu0
        %v983 = vadd.f32 0.0, %v982
        %v984 = vpop.f32.mrb[0].mxu0
        %v985 = vpop.f32.mrb[0].mxu0
        %v986 = vpop.f32.mrb[0].mxu0
        %987 = vdwg.mxu0
        %988 = vrot.lane.b32.xlu0 %v764, 112
        %v989 = vpop.permute.xlu0 %988
        %990 = vrot.lane.b32.xlu0 %v765, 112
        %v991 = vpop.permute.xlu0 %990
        %v993 = vsel %vm766, %v989, 0
        %v996 = vsel %vm766, %v991, 0
        %998 = vmatprep.subr.bf16.mxu0 0
        %999 = vmatpush1.bf16.xpose.msra.mxu0 %v996
        %1000 = vmatprep.subr.bf16.mxu0 0
        %1001 = vmatpush1.bf16.xpose.msra.mxu0 0
        %1002 = vmatprep.subr.bf16.mxu0 0
        %1003 = vmatpush1.bf16.xpose.msra.mxu0 0
        %1004 = vmatprep.subr.bf16.mxu0 0
        %1005 = vmatpush1.bf16.xpose.msra.mxu0 0
        %1006 = vmatprep.subr.bf16.mxu0 0
        %1007 = vmatpush1.bf16.xpose.msra.mxu0 0
        %1008 = vmatprep.subr.bf16.mxu0 0
        %1009 = vmatpush1.bf16.xpose.msra.mxu0 0
        %1010 = vmatprep.subr.bf16.mxu0 0
        %1011 = vmatpush1.bf16.xpose.msra.mxu0 0
        %1012 = vmatprep.subr.bf16.mxu0 0
        %1013 = vmatpush1.bf16.xpose.msra.mxu0 0
        %1014 = vmatprep.subr.bf16.mxu0 0
        %1015 = vmatpush1.bf16.xpose.msra.mxu0 0
        %1016 = vmatprep.subr.bf16.mxu0 0
        %1017 = vmatpush1.bf16.xpose.msra.mxu0 0
        %1018 = vmatprep.subr.bf16.mxu0 0
        %1019 = vmatpush1.bf16.xpose.msra.mxu0 0
        %1020 = vmatprep.subr.bf16.mxu0 0
        %1021 = vmatpush1.bf16.xpose.msra.mxu0 0
        %1022 = vmatprep.subr.bf16.mxu0 0
        %1023 = vmatpush1.bf16.xpose.msra.mxu0 0
        %1024 = vmatprep.subr.bf16.mxu0 0
        %1025 = vmatpush1.bf16.xpose.msra.mxu0 0
        %1026 = vmatprep.subr.bf16.mxu0 0
        %1027 = vmatpush1.bf16.xpose.msra.mxu0 0
        %1028 = vmatprep.subr.bf16.mxu0 0
        %1029 = vmatpush1.bf16.xpose.msra.mxu0 0
        %1030 = vmatprep.mubr.bf16.mxu0 0
        %1031 = vmatmul.mubr.bf16.gmra.mrb[0].mxu0 %v993
        %v1032 = vpop.f32.mrb[0].mxu0
        %v1033 = vadd.f32 0.0, %v1032
        %v1034 = vpop.f32.mrb[0].mxu0
        %v1035 = vpop.f32.mrb[0].mxu0
        %v1036 = vpop.f32.mrb[0].mxu0
        %1037 = vdwg.mxu0
        %v1038 = vmul.f32 %v1033, 0.35355338
        %v1039 = vsel %vm766, %v1038, -inf
        %1040 = vmax.xlane.f32.xlu0 %v1039
        %v1041 = vpop.xlane.xlu0 %1040
        %v1042 = vsub.f32 %v1038, %v1041
        %v1043 = vmul.f32 %v1042, 1.442695
        %v1044 = vpow.pop %v1043
        %v1045 = vsel %vm766, %v1044, 0.0
        %1046 = vadd.xlane.f32.xlu0 %v1045
        %v1047 = vpop.xlane.xlu0 %1046
        %v1048 = vrcp.pop %v1047
        %v1049 = vmul.f32 %v1044, %v1048
        %v1050 = vpack.c.bf16 %v1049, %v1049
        %1051 = vrot.lane.b32.xlu0 %v765, 80
        %v1052 = vpop.permute.xlu0 %1051
        %v1054 = vsel %vm766, %v1050, 0
        %v1057 = vsel %vm832, %v1052, 0
        %1059 = vmatprep.subr.bf16.mxu0 0
        %1060 = vmatpush1.bf16.msra.mxu0 %v1057
        %1061 = vmatprep.subr.bf16.mxu0 0
        %1062 = vmatpush1.bf16.msra.mxu0 0
        %1063 = vmatprep.subr.bf16.mxu0 0
        %1064 = vmatpush1.bf16.msra.mxu0 0
        %1065 = vmatprep.subr.bf16.mxu0 0
        %1066 = vmatpush1.bf16.msra.mxu0 0
        %1067 = vmatprep.subr.bf16.mxu0 0
        %1068 = vmatpush1.bf16.msra.mxu0 0
        %1069 = vmatprep.subr.bf16.mxu0 0
        %1070 = vmatpush1.bf16.msra.mxu0 0
        %1071 = vmatprep.subr.bf16.mxu0 0
        %1072 = vmatpush1.bf16.msra.mxu0 0
        %1073 = vmatprep.subr.bf16.mxu0 0
        %1074 = vmatpush1.bf16.msra.mxu0 0
        %1075 = vmatprep.subr.bf16.mxu0 0
        %1076 = vmatpush1.bf16.msra.mxu0 0
        %1077 = vmatprep.subr.bf16.mxu0 0
        %1078 = vmatpush1.bf16.msra.mxu0 0
        %1079 = vmatprep.subr.bf16.mxu0 0
        %1080 = vmatpush1.bf16.msra.mxu0 0
        %1081 = vmatprep.subr.bf16.mxu0 0
        %1082 = vmatpush1.bf16.msra.mxu0 0
        %1083 = vmatprep.subr.bf16.mxu0 0
        %1084 = vmatpush1.bf16.msra.mxu0 0
        %1085 = vmatprep.subr.bf16.mxu0 0
        %1086 = vmatpush1.bf16.msra.mxu0 0
        %1087 = vmatprep.subr.bf16.mxu0 0
        %1088 = vmatpush1.bf16.msra.mxu0 0
        %1089 = vmatprep.subr.bf16.mxu0 0
        %1090 = vmatpush1.bf16.msra.mxu0 0
        %1091 = vmatprep.mubr.bf16.mxu0 0
        %1092 = vmatmul.mubr.bf16.gmra.mrb[0].mxu0 %v1054
        %v1093 = vpop.f32.mrb[0].mxu0
        %v1094 = vadd.f32 0.0, %v1093
        %v1095 = vpop.f32.mrb[0].mxu0
        %v1096 = vpop.f32.mrb[0].mxu0
        %v1097 = vpop.f32.mrb[0].mxu0
        %1098 = vdwg.mxu0
        %1099 = vrot.lane.b32.xlu0 %v764, 104
        %v1100 = vpop.permute.xlu0 %1099
        %1101 = vrot.lane.b32.xlu0 %v765, 104
        %v1102 = vpop.permute.xlu0 %1101
        %v1104 = vsel %vm766, %v1100, 0
        %v1107 = vsel %vm766, %v1102, 0
        %1109 = vmatprep.subr.bf16.mxu0 0
        %1110 = vmatpush1.bf16.xpose.msra.mxu0 %v1107
        %1111 = vmatprep.subr.bf16.mxu0 0
        %1112 = vmatpush1.bf16.xpose.msra.mxu0 0
        %1113 = vmatprep.subr.bf16.mxu0 0
        %1114 = vmatpush1.bf16.xpose.msra.mxu0 0
        %1115 = vmatprep.subr.bf16.mxu0 0
        %1116 = vmatpush1.bf16.xpose.msra.mxu0 0
        %1117 = vmatprep.subr.bf16.mxu0 0
        %1118 = vmatpush1.bf16.xpose.msra.mxu0 0
        %1119 = vmatprep.subr.bf16.mxu0 0
        %1120 = vmatpush1.bf16.xpose.msra.mxu0 0
        %1121 = vmatprep.subr.bf16.mxu0 0
        %1122 = vmatpush1.bf16.xpose.msra.mxu0 0
        %1123 = vmatprep.subr.bf16.mxu0 0
        %1124 = vmatpush1.bf16.xpose.msra.mxu0 0
        %1125 = vmatprep.subr.bf16.mxu0 0
        %1126 = vmatpush1.bf16.xpose.msra.mxu0 0
        %1127 = vmatprep.subr.bf16.mxu0 0
        %1128 = vmatpush1.bf16.xpose.msra.mxu0 0
        %1129 = vmatprep.subr.bf16.mxu0 0
        %1130 = vmatpush1.bf16.xpose.msra.mxu0 0
        %1131 = vmatprep.subr.bf16.mxu0 0
        %1132 = vmatpush1.bf16.xpose.msra.mxu0 0
        %1133 = vmatprep.subr.bf16.mxu0 0
        %1134 = vmatpush1.bf16.xpose.msra.mxu0 0
        %1135 = vmatprep.subr.bf16.mxu0 0
        %1136 = vmatpush1.bf16.xpose.msra.mxu0 0
        %1137 = vmatprep.subr.bf16.mxu0 0
        %1138 = vmatpush1.bf16.xpose.msra.mxu0 0
        %1139 = vmatprep.subr.bf16.mxu0 0
        %1140 = vmatpush1.bf16.xpose.msra.mxu0 0
        %1141 = vmatprep.mubr.bf16.mxu0 0
        %1142 = vmatmul.mubr.bf16.gmra.mrb[0].mxu0 %v1104
        %v1143 = vpop.f32.mrb[0].mxu0
        %v1144 = vadd.f32 0.0, %v1143
        %v1145 = vpop.f32.mrb[0].mxu0
        %v1146 = vpop.f32.mrb[0].mxu0
        %v1147 = vpop.f32.mrb[0].mxu0
        %1148 = vdwg.mxu0
        %v1149 = vmul.f32 %v1144, 0.35355338
        %v1150 = vsel %vm766, %v1149, -inf
        %1151 = vmax.xlane.f32.xlu0 %v1150
        %v1152 = vpop.xlane.xlu0 %1151
        %v1153 = vsub.f32 %v1149, %v1152
        %v1154 = vmul.f32 %v1153, 1.442695
        %v1155 = vpow.pop %v1154
        %v1156 = vsel %vm766, %v1155, 0.0
        %1157 = vadd.xlane.f32.xlu0 %v1156
        %v1158 = vpop.xlane.xlu0 %1157
        %v1159 = vrcp.pop %v1158
        %v1160 = vmul.f32 %v1155, %v1159
        %v1161 = vpack.c.bf16 %v1160, %v1160
        %1162 = vrot.lane.b32.xlu0 %v765, 72
        %v1163 = vpop.permute.xlu0 %1162
        %v1165 = vsel %vm766, %v1161, 0
        %v1168 = vsel %vm832, %v1163, 0
        %1170 = vmatprep.subr.bf16.mxu0 0
        %1171 = vmatpush1.bf16.msra.mxu0 %v1168
        %1172 = vmatprep.subr.bf16.mxu0 0
        %1173 = vmatpush1.bf16.msra.mxu0 0
        %1174 = vmatprep.subr.bf16.mxu0 0
        %1175 = vmatpush1.bf16.msra.mxu0 0
        %1176 = vmatprep.subr.bf16.mxu0 0
        %1177 = vmatpush1.bf16.msra.mxu0 0
        %1178 = vmatprep.subr.bf16.mxu0 0
        %1179 = vmatpush1.bf16.msra.mxu0 0
        %1180 = vmatprep.subr.bf16.mxu0 0
        %1181 = vmatpush1.bf16.msra.mxu0 0
        %1182 = vmatprep.subr.bf16.mxu0 0
        %1183 = vmatpush1.bf16.msra.mxu0 0
        %1184 = vmatprep.subr.bf16.mxu0 0
        %1185 = vmatpush1.bf16.msra.mxu0 0
        %1186 = vmatprep.subr.bf16.mxu0 0
        %1187 = vmatpush1.bf16.msra.mxu0 0
        %1188 = vmatprep.subr.bf16.mxu0 0
        %1189 = vmatpush1.bf16.msra.mxu0 0
        %1190 = vmatprep.subr.bf16.mxu0 0
        %1191 = vmatpush1.bf16.msra.mxu0 0
        %1192 = vmatprep.subr.bf16.mxu0 0
        %1193 = vmatpush1.bf16.msra.mxu0 0
        %1194 = vmatprep.subr.bf16.mxu0 0
        %1195 = vmatpush1.bf16.msra.mxu0 0
        %1196 = vmatprep.subr.bf16.mxu0 0
        %1197 = vmatpush1.bf16.msra.mxu0 0
        %1198 = vmatprep.subr.bf16.mxu0 0
        %1199 = vmatpush1.bf16.msra.mxu0 0
        %1200 = vmatprep.subr.bf16.mxu0 0
        %1201 = vmatpush1.bf16.msra.mxu0 0
        %1202 = vmatprep.mubr.bf16.mxu0 0
        %1203 = vmatmul.mubr.bf16.gmra.mrb[0].mxu0 %v1165
        %v1204 = vpop.f32.mrb[0].mxu0
        %v1205 = vadd.f32 0.0, %v1204
        %v1206 = vpop.f32.mrb[0].mxu0
        %v1207 = vpop.f32.mrb[0].mxu0
        %v1208 = vpop.f32.mrb[0].mxu0
        %1209 = vdwg.mxu0
        %1211 = vrot.lane.b32.xlu0 %v983, 8
        %v1212 = vpop.permute.xlu0 %1211
        %1215 = vrot.lane.b32.xlu0 %v1094, 16
        %v1216 = vpop.permute.xlu0 %1215
        %1219 = vrot.lane.b32.xlu0 %v1205, 24
        %v1220 = vpop.permute.xlu0 %1219
        %v1222 = vsel %vm766, %v871, %v1212
        %vm1223 = vcmask 130048
        %v1224 = vsel %vm1223, %v1222, %v1216
        %vm1225 = vcmask 195584
        %v1226 = vsel %vm1225, %v1224, %v1220
        %v1227 = vpack.c.bf16 %v1226, %v1226
        %v1228 = vld [vmem:[%s6] sm:$0xf]
        %v1229 = vld [vmem:[%s6 + $0x4] sm:$0xf]
        %v1230 = vld [vmem:[%s6 + $0x8] sm:$0xf]
        %v1231 = vld [vmem:[%s6 + $0xc] sm:$0xf]
        %v1232 = vld [vmem:[%s7] sm:$0x1]
        %v1234 = vlaneseq
        %v1235 = vshrl.u32 %v1234, 7
        %v1236 = vsub.s32 0, %v1235
        %v1237 = vrot.slane %v1232, %v1236
        %v1243 = vunpack.c.l.b16 %v1228
        %v1244 = vunpack.c.l.b16 %v1229
        %v1245 = vunpack.c.l.b16 %v1230
        %v1246 = vunpack.c.l.b16 %v1231
        %v1247 = vpack.c.b16 %v1244, %v1243
        %v1248 = vpack.c.b16 %v1246, %v1245
        %v1252 = vsel %vm594, %v1227, 0
        %1254 = vmatprep.subr.bf16.mxu0 0
        %1255 = vmatpush1.bf16.msra.mxu0 %v1247
        %1256 = vmatprep.subr.bf16.mxu0 0
        %1257 = vmatpush1.bf16.msra.mxu0 %v1248
        %1258 = vmatprep.subr.bf16.mxu0 0
        %1259 = vmatpush1.bf16.msra.mxu0 0
        %1260 = vmatprep.subr.bf16.mxu0 0
        %1261 = vmatpush1.bf16.msra.mxu0 0
        %1262 = vmatprep.subr.bf16.mxu0 0
        %1263 = vmatpush1.bf16.msra.mxu0 0
        %1264 = vmatprep.subr.bf16.mxu0 0
        %1265 = vmatpush1.bf16.msra.mxu0 0
        %1266 = vmatprep.subr.bf16.mxu0 0
        %1267 = vmatpush1.bf16.msra.mxu0 0
        %1268 = vmatprep.subr.bf16.mxu0 0
        %1269 = vmatpush1.bf16.msra.mxu0 0
        %1270 = vmatprep.subr.bf16.mxu0 0
        %1271 = vmatpush1.bf16.msra.mxu0 0
        %1272 = vmatprep.subr.bf16.mxu0 0
        %1273 = vmatpush1.bf16.msra.mxu0 0
        %1274 = vmatprep.subr.bf16.mxu0 0
        %1275 = vmatpush1.bf16.msra.mxu0 0
        %1276 = vmatprep.subr.bf16.mxu0 0
        %1277 = vmatpush1.bf16.msra.mxu0 0
        %1278 = vmatprep.subr.bf16.mxu0 0
        %1279 = vmatpush1.bf16.msra.mxu0 0
        %1280 = vmatprep.subr.bf16.mxu0 0
        %1281 = vmatpush1.bf16.msra.mxu0 0
        %1282 = vmatprep.subr.bf16.mxu0 0
        %1283 = vmatpush1.bf16.msra.mxu0 0
        %1284 = vmatprep.subr.bf16.mxu0 0
        %1285 = vmatpush1.bf16.msra.mxu0 0
        %1286 = vmatprep.mubr.bf16.mxu0 0
        %1287 = vmatmul.mubr.bf16.gmra.mrb[0].mxu0 %v1252
        %v1288 = vpop.f32.mrb[0].mxu0
        %v1289 = vadd.f32 %v1237, %v1288
        %v1290 = vpop.f32.mrb[0].mxu0
        %v1291 = vpop.f32.mrb[0].mxu0
        %v1292 = vpop.f32.mrb[0].mxu0
        %1293 = vdwg.mxu0
        %v1294 = vadd.f32 %v629, %v1289
        %v1295 = vld [vmem:[%s10] sm:$0x1]
        %v1296 = vld [vmem:[%s11] sm:$0x1]
        %v1297 = vsel %vm594, %v1294, 0.0
        %1298 = vadd.xlane.f32.xlu0 %v1297
        %v1299 = vpop.xlane.xlu0 %1298
        %v1300 = vmul.f32 %v1299, %v598
        %v1301 = vsub.f32 %v1294, %v1300
        %v1302 = vmul.f32 %v1301, %v1301
        %v1303 = vsel %vm594, %v1302, 0.0
        %1304 = vadd.xlane.f32.xlu0 %v1303
        %v1305 = vpop.xlane.xlu0 %1304
        %v1306 = vmul.f32 %v1305, 0.032258064
        %v1307 = vrsqrt.pop %v1306
        %v1308 = vmul.f32 %v1306, %v1307
        %vm1309 = vcmp.eq.f32.partialorder %v1306, inf
        %v1310 = vsel %vm1309, %v1306, %v1308
        %vm1311 = vcmp.eq.f32.partialorder %v1306, 0.0
        %v1312 = vand.u32 %v1306, 2147483648
        %v1313 = vsel %vm1311, %v1312, %v1310
        %v1315 = vlaneseq
        %v1316 = vshrl.u32 %v1315, 7
        %v1317 = vsub.s32 0, %v1316
        %v1318 = vrot.slane %v1295, %v1317
        %v1320 = vmul.f32 %v1318, %v1301
        %v1321 = vadd.f32 %v1313, 1e-06
        %v1322 = vrcp.pop %v1321
        %v1323 = vmul.f32 %v1320, %v1322
        %v1325 = vlaneseq
        %v1326 = vshrl.u32 %v1325, 7
        %v1327 = vsub.s32 0, %v1326
        %v1328 = vrot.slane %v1296, %v1327
        %v1330 = vadd.f32 %v1323, %v1328
        %v1331 = vpack.c.bf16 %v1330, %v1330
        %v1332 = vld [vmem:[%s12] sm:$0xf]
        %v1333 = vld [vmem:[%s12 + $0x4] sm:$0xf]
        %v1334 = vld [vmem:[%s12 + $0x8] sm:$0xf]
        %v1335 = vld [vmem:[%s12 + $0xc] sm:$0xf]
        %v1336 = vld [vmem:[%s13] sm:$0x1]
        %v1338 = vlaneseq
        %v1339 = vshrl.u32 %v1338, 7
        %v1340 = vsub.s32 0, %v1339
        %v1341 = vrot.slane %v1336, %v1340
        %v1347 = vunpack.c.l.b16 %v1332
        %v1348 = vunpack.c.l.b16 %v1333
        %v1349 = vunpack.c.l.b16 %v1334
        %v1350 = vunpack.c.l.b16 %v1335
        %v1351 = vpack.c.b16 %v1348, %v1347
        %v1352 = vpack.c.b16 %v1350, %v1349
        %v1356 = vsel %vm594, %v1331, 0
        %1358 = vmatprep.subr.bf16.mxu0 0
        %1359 = vmatpush1.bf16.msra.mxu0 %v1351
        %1360 = vmatprep.subr.bf16.mxu0 0
        %1361 = vmatpush1.bf16.msra.mxu0 %v1352
        %1362 = vmatprep.subr.bf16.mxu0 0
        %1363 = vmatpush1.bf16.msra.mxu0 0
        %1364 = vmatprep.subr.bf16.mxu0 0
        %1365 = vmatpush1.bf16.msra.mxu0 0
        %1366 = vmatprep.subr.bf16.mxu0 0
        %1367 = vmatpush1.bf16.msra.mxu0 0
        %1368 = vmatprep.subr.bf16.mxu0 0
        %1369 = vmatpush1.bf16.msra.mxu0 0
        %1370 = vmatprep.subr.bf16.mxu0 0
        %1371 = vmatpush1.bf16.msra.mxu0 0
        %1372 = vmatprep.subr.bf16.mxu0 0
        %1373 = vmatpush1.bf16.msra.mxu0 0
        %1374 = vmatprep.subr.bf16.mxu0 0
        %1375 = vmatpush1.bf16.msra.mxu0 0
        %1376 = vmatprep.subr.bf16.mxu0 0
        %1377 = vmatpush1.bf16.msra.mxu0 0
        %1378 = vmatprep.subr.bf16.mxu0 0
        %1379 = vmatpush1.bf16.msra.mxu0 0
        %1380 = vmatprep.subr.bf16.mxu0 0
        %1381 = vmatpush1.bf16.msra.mxu0 0
        %1382 = vmatprep.subr.bf16.mxu0 0
        %1383 = vmatpush1.bf16.msra.mxu0 0
        %1384 = vmatprep.subr.bf16.mxu0 0
        %1385 = vmatpush1.bf16.msra.mxu0 0
        %1386 = vmatprep.subr.bf16.mxu0 0
        %1387 = vmatpush1.bf16.msra.mxu0 0
        %1388 = vmatprep.subr.bf16.mxu0 0
        %1389 = vmatpush1.bf16.msra.mxu0 0
        %1390 = vmatprep.mubr.bf16.mxu0 0
        %1391 = vmatmul.mubr.bf16.gmra.mrb[0].mxu0 %v1356
        %v1392 = vpop.f32.mrb[0].mxu0
        %v1393 = vadd.f32 %v1341, %v1392
        %v1394 = vpop.f32.mrb[0].mxu0
        %v1395 = vpop.f32.mrb[0].mxu0
        %v1396 = vpop.f32.mrb[0].mxu0
        %1397 = vdwg.mxu0
        %v1398 = vmax.f32 %v1393, 0.0
        %v1399 = vpack.c.bf16 %v1398, %v1398
        %v1400 = vld [vmem:[%s14] sm:$0xf]
        %v1401 = vld [vmem:[%s14 + $0x4] sm:$0xf]
        %v1402 = vld [vmem:[%s14 + $0x8] sm:$0xf]
        %v1403 = vld [vmem:[%s14 + $0xc] sm:$0xf]
        %v1404 = vld [vmem:[%s14 + $0x10] sm:$0xf]
        %v1405 = vld [vmem:[%s14 + $0x14] sm:$0xf]
        %v1406 = vld [vmem:[%s14 + $0x18] sm:$0xf]
        %v1407 = vld [vmem:[%s14 + $0x1c] sm:$0xf]
        %v1408 = vld [vmem:[%s15] sm:$0x1]
        %v1410 = vlaneseq
        %v1411 = vshrl.u32 %v1410, 7
        %v1412 = vsub.s32 0, %v1411
        %v1413 = vrot.slane %v1408, %v1412
        %v1423 = vunpack.c.l.b16 %v1400
        %v1424 = vunpack.c.l.b16 %v1401
        %v1425 = vunpack.c.l.b16 %v1402
        %v1426 = vunpack.c.l.b16 %v1403
        %v1427 = vunpack.c.l.b16 %v1404
        %v1428 = vunpack.c.l.b16 %v1405
        %v1429 = vunpack.c.l.b16 %v1406
        %v1430 = vunpack.c.l.b16 %v1407
        %v1431 = vpack.c.b16 %v1424, %v1423
        %v1432 = vpack.c.b16 %v1426, %v1425
        %v1433 = vpack.c.b16 %v1428, %v1427
        %v1434 = vpack.c.b16 %v1430, %v1429
        %vm1439 = vcmask 523264
        %v1441 = vsel %vm1439, %v1399, 0
        %1443 = vmatprep.subr.bf16.mxu0 0
        %1444 = vmatpush1.bf16.msra.mxu0 %v1431
        %1445 = vmatprep.subr.bf16.mxu0 0
        %1446 = vmatpush1.bf16.msra.mxu0 %v1432
        %1447 = vmatprep.subr.bf16.mxu0 0
        %1448 = vmatpush1.bf16.msra.mxu0 %v1433
        %1449 = vmatprep.subr.bf16.mxu0 0
        %1450 = vmatpush1.bf16.msra.mxu0 %v1434
        %1451 = vmatprep.subr.bf16.mxu0 0
        %1452 = vmatpush1.bf16.msra.mxu0 0
        %1453 = vmatprep.subr.bf16.mxu0 0
        %1454 = vmatpush1.bf16.msra.mxu0 0
        %1455 = vmatprep.subr.bf16.mxu0 0
        %1456 = vmatpush1.bf16.msra.mxu0 0
        %1457 = vmatprep.subr.bf16.mxu0 0
        %1458 = vmatpush1.bf16.msra.mxu0 0
        %1459 = vmatprep.subr.bf16.mxu0 0
        %1460 = vmatpush1.bf16.msra.mxu0 0
        %1461 = vmatprep.subr.bf16.mxu0 0
        %1462 = vmatpush1.bf16.msra.mxu0 0
        %1463 = vmatprep.subr.bf16.mxu0 0
        %1464 = vmatpush1.bf16.msra.mxu0 0
        %1465 = vmatprep.subr.bf16.mxu0 0
        %1466 = vmatpush1.bf16.msra.mxu0 0
        %1467 = vmatprep.subr.bf16.mxu0 0
        %1468 = vmatpush1.bf16.msra.mxu0 0
        %1469 = vmatprep.subr.bf16.mxu0 0
        %1470 = vmatpush1.bf16.msra.mxu0 0
        %1471 = vmatprep.subr.bf16.mxu0 0
        %1472 = vmatpush1.bf16.msra.mxu0 0
        %1473 = vmatprep.subr.bf16.mxu0 0
        %1474 = vmatpush1.bf16.msra.mxu0 0
        %1475 = vmatprep.mubr.bf16.mxu0 0
        %1476 = vmatmul.mubr.bf16.gmra.mrb[0].mxu0 %v1441
        %v1477 = vpop.f32.mrb[0].mxu0
        %v1478 = vadd.f32 %v1413, %v1477
        %v1479 = vpop.f32.mrb[0].mxu0
        %v1480 = vpop.f32.mrb[0].mxu0
        %v1481 = vpop.f32.mrb[0].mxu0
        %1482 = vdwg.mxu0
        %v1483 = vadd.f32 %v1330, %v1478
        %v1484 = vld [vmem:[%s16] sm:$0x1]
        %v1485 = vld [vmem:[%s17] sm:$0x1]
        %v1486 = vsel %vm594, %v1483, 0.0
        %1487 = vadd.xlane.f32.xlu0 %v1486
        %v1488 = vpop.xlane.xlu0 %1487
        %v1489 = vmul.f32 %v1488, %v598
        %v1490 = vsub.f32 %v1483, %v1489
        %v1491 = vmul.f32 %v1490, %v1490
        %v1492 = vsel %vm594, %v1491, 0.0
        %1493 = vadd.xlane.f32.xlu0 %v1492
        %v1494 = vpop.xlane.xlu0 %1493
        %v1495 = vmul.f32 %v1494, 0.032258064
        %v1496 = vrsqrt.pop %v1495
        %v1497 = vmul.f32 %v1495, %v1496
        %vm1498 = vcmp.eq.f32.partialorder %v1495, inf
        %v1499 = vsel %vm1498, %v1495, %v1497
        %vm1500 = vcmp.eq.f32.partialorder %v1495, 0.0
        %v1501 = vand.u32 %v1495, 2147483648
        %v1502 = vsel %vm1500, %v1501, %v1499
        %v1504 = vlaneseq
        %v1505 = vshrl.u32 %v1504, 7
        %v1506 = vsub.s32 0, %v1505
        %v1507 = vrot.slane %v1484, %v1506
        %v1509 = vmul.f32 %v1507, %v1490
        %v1510 = vadd.f32 %v1502, 1e-06
        %v1511 = vrcp.pop %v1510
        %v1512 = vmul.f32 %v1509, %v1511
        %v1514 = vlaneseq
        %v1515 = vshrl.u32 %v1514, 7
        %v1516 = vsub.s32 0, %v1515
        %v1517 = vrot.slane %v1485, %v1516
        %v1519 = vadd.f32 %v1512, %v1517
        %1520 = vst.msk [vmem:[%s579] sm:$0xff] %vm594, %v1519
        %s1521 = sand.u32 %s428, 1
        %s1522 = scalar_lea.sflag [#allocation3], %s1521
        %s1523 = sand.u32 %s428, 1
        %s1524 = smul.addr %s1523, 8
        %s1525 = scalar_lea.vmem [#allocation2], %s1524
        // Predicated region
        $region93: #{transformer_forward.7} parent=91 // pred_check
          %p1526 = pneg %p438
        $region94: #{transformer_forward.7} parent=91 // pred_check_branch
          %1528 = sbr.rel (%p1526) target = $region96
        $region95: #{transformer_forward.7} parent=91 // pred_region
          %s1530 = ssub.s32 128, 128
          %1531 = vsyncadd %s1522, %s1530
          %s1532 = smul.addr %s32, 128
          %s1533 = scalar_lea.hbm %s18, %s1532
          %s1535 = sshll.u32 %s1525, 4
          %s1536 = int_to_ptr.vmem [resolvable:$true] %s1535
          %1538 = dma.vmem_to_hbm [thread:$0]  %s1536, 128, %s1533, %s1522
        $region96: #{transformer_forward.7} parent=91 // pred_fallthru
          _
      $region92: #{transformer_forward.7} parent=5 // pred_fallthru
        _
      %p1539 = scmp.le.s32.totalorder 2, %s27
      // Predicated region
      $region97: #{transformer_forward.7} parent=5 // pred_check
        %p1540 = pneg %p1539
      $region98: #{transformer_forward.7} parent=5 // pred_check_branch
        %1542 = sbr.rel (%p1540) target = $region100
      $region99: #{transformer_forward.7} parent=5 // pred_region
        %s1543 = ssub.s32 %s27, 2
        // Predicated region
        $region101: #{transformer_forward.7} parent=99 // pred_check
          %p1544 = pneg %p444
        $region102: #{transformer_forward.7} parent=99 // pred_check_branch
          %1546 = sbr.rel (%p1544) target = $region104
        $region103: #{transformer_forward.7} parent=99 // pred_region
          %s1547 = sand.u32 %s429, 1
          %s1548 = scalar_lea.sflag [#allocation3], %s1547
          %s1549 = sand.u32 %s429, 1
          %s1550 = smul.addr %s1549, 8
          %s1551 = scalar_lea.vmem [#allocation2], %s1550
          %1552 = dma.done %s1548, 128
        $region104: #{transformer_forward.7} parent=99 // pred_fallthru
          _
      $region100: #{transformer_forward.7} parent=5 // pred_fallthru
        _
    $region6: #{transformer_forward.7} parent=1 // loop_footer
      %s31 = sadd.s32 1, %s27
    $region7: #{transformer_forward.7} parent=1 // loop_footer_branch
      %26 = sbr.rel target = $region3
    $region8: #{transformer_forward.7} parent=1 // loop_exit
      _
    %1553 = vsyncpa [#allocation3], 1
    %s1554 = scalar_lea.sflag [#allocation3], 1
    %1555 = vsyncpa %s1554, 1

// kernel: transformer_forward.4
$region0: #{transformer_forward.4}
  #allocation0 [shape = 'u32[]', space=smem, size = 0x4, offset = 0x4, fixed_abs, tag = 'smem constant byte address 0x4 - core index']
  #allocation1 [shape = 'u32[144,128]{1,0:T(1,128)}', space=vmem, size = 0x12000, scoped, tag = 'internal scratch']
  %s0 = inlined_call_operand.vmem [shape: f32[2,8,32], index: 0, kind: input, shape index: {}]
  %s1 = inlined_call_operand.vmem [shape: bf16[32,96], index: 1, kind: input, shape index: {}]
  %s2 = inlined_call_operand.vmem [shape: f32[1,96], index: 2, kind: input, shape index: {}]
  %s3 = inlined_call_operand.vmem [shape: bf16[32,32], index: 3, kind: input, shape index: {}]
  %s4 = inlined_call_operand.vmem [shape: f32[1,32], index: 4, kind: input, shape index: {}]
  %s5 = inlined_call_operand.vmem [shape: f32[1,32], index: 5, kind: input, shape index: {}]
  %s6 = inlined_call_operand.vmem [shape: f32[1,32], index: 6, kind: input, shape index: {}]
  %s7 = inlined_call_operand.vmem [shape: bf16[32,64], index: 7, kind: input, shape index: {}]
  %s8 = inlined_call_operand.vmem [shape: f32[1,64], index: 8, kind: input, shape index: {}]
  %s9 = inlined_call_operand.vmem [shape: bf16[64,32], index: 9, kind: input, shape index: {}]
  %s10 = inlined_call_operand.vmem [shape: f32[1,32], index: 10, kind: input, shape index: {}]
  %s11 = inlined_call_operand.vmem [shape: f32[1,32], index: 11, kind: input, shape index: {}]
  %s12 = inlined_call_operand.vmem [shape: f32[1,32], index: 12, kind: input, shape index: {}]
  %s13 = inlined_call_operand.vmem [shape: f32[2,8,32], index: 13, kind: output, shape index: {}]
  %s14 = sld [smem:[#allocation0]]
  $region85: #{transformer_forward.4} parent=0
    _
  %s16 = ssub.s32 1, %s14
  %s17 = scalar_select 0, %s16, %s14
  loop: start=0, step=1, limit=4
  $region2: #{transformer_forward.4} parent=0 // loop_pre_header
    _
  $region3: #{transformer_forward.4} parent=0 // loop_header
    %s19 = sphi 0, %s23
    %p20 = scmp.ge.s32.totalorder %s19, 4
    %s29 = sphi 0, %s31
    %s32 = sphi 0, %s29
    %s33 = sphi 0, %s32
    %s49 = sphi 0, %s33
    %s53 = sphi 0, %s53
    %s55 = sphi 0, %s53
    %s56 = sphi 0, %s55
    %s70 = sphi 0, %s56
    %s74 = sphi 0, %s74
    %s76 = sphi 0, %s74
    %s77 = sphi 0, %s76
    %s91 = sphi 0, %s77
    %s95 = sphi 0, %s95
    %s97 = sphi 0, %s95
    %s98 = sphi 0, %s97
    %s112 = sphi 0, %s98
    %s116 = sphi 0, %s116
    %s118 = sphi 0, %s116
    %s119 = sphi 0, %s118
    %s133 = sphi 0, %s119
    %s137 = sphi 0, %s137
    %s139 = sphi 0, %s137
    %s140 = sphi 0, %s139
    %s154 = sphi 0, %s140
    %s158 = sphi 0, %s158
    %s160 = sphi 0, %s158
    %s161 = sphi 0, %s160
    %s175 = sphi 0, %s161
    %s179 = sphi 0, %s179
    %s181 = sphi 0, %s179
    %s182 = sphi 0, %s181
    %s196 = sphi 0, %s182
    %s200 = sphi 0, %s200
    %s202 = sphi 0, %s200
    %s203 = sphi 0, %s202
    %s217 = sphi 0, %s203
    %s221 = sphi 0, %s221
    %s223 = sphi 0, %s221
    %s224 = sphi 0, %s223
    %s238 = sphi 0, %s224
    %s242 = sphi 0, %s242
    %s244 = sphi 0, %s242
    %s245 = sphi 0, %s244
    %s259 = sphi 0, %s245
    %s263 = sphi 0, %s263
    %s265 = sphi 0, %s263
    %s266 = sphi 0, %s265
    %s280 = sphi 0, %s266
    %s284 = sphi 0, %s284
    %s286 = sphi 0, %s284
    %s287 = sphi 0, %s286
    %s301 = sphi 0, %s287
    %s307 = sphi 0, %s309
    %s310 = sphi 0, %s307
    %s311 = sphi 0, %s310
    %s327 = sphi 0, %s311
  $region4: #{transformer_forward.4} parent=0 // loop_header_branch
    %22 = sbr.rel (%p20) target = $region8
  $region5: #{transformer_forward.4} parent=0 // loop_body
    %s24 = ssub.s32 %s19, 1
    %s25 = ssub.s32 %s19, 2
    %s26 = sadd.s32 %s19, 1
    %s27 = ssub.s32 %s19, %s26
    %p28 = scmp.eq.s32.totalorder %s27, 0
    %s30 = sadd.s32 %s29, 1
    %s31 = scalar_select %p28, %s29, %s30
    %p34 = pneg %p28
    %p35 = scmp.eq.s32.totalorder %s19, 1
    %p36 = por %p34, %p35
    %p37 = scmp.ne.s32.totalorder %s29, %s32
    %p38 = scmp.eq.s32.totalorder %s19, 0
    %p39 = por %p37, %p38
    %p40 = scmp.ne.s32.totalorder %s29, %s32
    %p41 = scmp.eq.s32.totalorder %s24, 1
    %p42 = por %p40, %p41
    %p43 = scmp.ne.s32.totalorder %s32, %s33
    %p44 = scmp.eq.s32.totalorder %s24, 0
    %p45 = por %p43, %p44
    %p46 = scmp.ne.s32.totalorder %s32, %s33
    %p47 = scmp.eq.s32.totalorder %s25, 1
    %p48 = por %p46, %p47
    %p50 = scmp.ne.s32.totalorder %s33, %s49
    %p51 = scmp.eq.s32.totalorder %s25, 0
    %p52 = por %p50, %p51
    %s54 = sadd.s32 %s53, 1
    %p57 = scmp.eq.s32.totalorder %s19, 1
    %p58 = scmp.ne.s32.totalorder %s53, %s55
    %p59 = scmp.eq.s32.totalorder %s19, 0
    %p60 = por %p58, %p59
    %p61 = scmp.ne.s32.totalorder %s53, %s55
    %p62 = scmp.eq.s32.totalorder %s24, 1
    %p63 = por %p61, %p62
    %p64 = scmp.ne.s32.totalorder %s55, %s56
    %p65 = scmp.eq.s32.totalorder %s24, 0
    %p66 = por %p64, %p65
    %p67 = scmp.ne.s32.totalorder %s55, %s56
    %p68 = scmp.eq.s32.totalorder %s25, 1
    %p69 = por %p67, %p68
    %p71 = scmp.ne.s32.totalorder %s56, %s70
    %p72 = scmp.eq.s32.totalorder %s25, 0
    %p73 = por %p71, %p72
    %s75 = sadd.s32 %s74, 1
    %p78 = scmp.eq.s32.totalorder %s19, 1
    %p79 = scmp.ne.s32.totalorder %s74, %s76
    %p80 = scmp.eq.s32.totalorder %s19, 0
    %p81 = por %p79, %p80
    %p82 = scmp.ne.s32.totalorder %s74, %s76
    %p83 = scmp.eq.s32.totalorder %s24, 1
    %p84 = por %p82, %p83
    %p85 = scmp.ne.s32.totalorder %s76, %s77
    %p86 = scmp.eq.s32.totalorder %s24, 0
    %p87 = por %p85, %p86
    %p88 = scmp.ne.s32.totalorder %s76, %s77
    %p89 = scmp.eq.s32.totalorder %s25, 1
    %p90 = por %p88, %p89
    %p92 = scmp.ne.s32.totalorder %s77, %s91
    %p93 = scmp.eq.s32.totalorder %s25, 0
    %p94 = por %p92, %p93
    %s96 = sadd.s32 %s95, 1
    %p99 = scmp.eq.s32.totalorder %s19, 1
    %p100 = scmp.ne.s32.totalorder %s95, %s97
    %p101 = scmp.eq.s32.totalorder %s19, 0
    %p102 = por %p100, %p101
    %p103 = scmp.ne.s32.totalorder %s95, %s97
    %p104 = scmp.eq.s32.totalorder %s24, 1
    %p105 = por %p103, %p104
    %p106 = scmp.ne.s32.totalorder %s97, %s98
    %p107 = scmp.eq.s32.totalorder %s24, 0
    %p108 = por %p106, %p107
    %p109 = scmp.ne.s32.totalorder %s97, %s98
    %p110 = scmp.eq.s32.totalorder %s25, 1
    %p111 = por %p109, %p110
    %p113 = scmp.ne.s32.totalorder %s98, %s112
    %p114 = scmp.eq.s32.totalorder %s25, 0
    %p115 = por %p113, %p114
    %s117 = sadd.s32 %s116, 1
    %p120 = scmp.eq.s32.totalorder %s19, 1
    %p121 = scmp.ne.s32.totalorder %s116, %s118
    %p122 = scmp.eq.s32.totalorder %s19, 0
    %p123 = por %p121, %p122
    %p124 = scmp.ne.s32.totalorder %s116, %s118
    %p125 = scmp.eq.s32.totalorder %s24, 1
    %p126 = por %p124, %p125
    %p127 = scmp.ne.s32.totalorder %s118, %s119
    %p128 = scmp.eq.s32.totalorder %s24, 0
    %p129 = por %p127, %p128
    %p130 = scmp.ne.s32.totalorder %s118, %s119
    %p131 = scmp.eq.s32.totalorder %s25, 1
    %p132 = por %p130, %p131
    %p134 = scmp.ne.s32.totalorder %s119, %s133
    %p135 = scmp.eq.s32.totalorder %s25, 0
    %p136 = por %p134, %p135
    %s138 = sadd.s32 %s137, 1
    %p141 = scmp.eq.s32.totalorder %s19, 1
    %p142 = scmp.ne.s32.totalorder %s137, %s139
    %p143 = scmp.eq.s32.totalorder %s19, 0
    %p144 = por %p142, %p143
    %p145 = scmp.ne.s32.totalorder %s137, %s139
    %p146 = scmp.eq.s32.totalorder %s24, 1
    %p147 = por %p145, %p146
    %p148 = scmp.ne.s32.totalorder %s139, %s140
    %p149 = scmp.eq.s32.totalorder %s24, 0
    %p150 = por %p148, %p149
    %p151 = scmp.ne.s32.totalorder %s139, %s140
    %p152 = scmp.eq.s32.totalorder %s25, 1
    %p153 = por %p151, %p152
    %p155 = scmp.ne.s32.totalorder %s140, %s154
    %p156 = scmp.eq.s32.totalorder %s25, 0
    %p157 = por %p155, %p156
    %s159 = sadd.s32 %s158, 1
    %p162 = scmp.eq.s32.totalorder %s19, 1
    %p163 = scmp.ne.s32.totalorder %s158, %s160
    %p164 = scmp.eq.s32.totalorder %s19, 0
    %p165 = por %p163, %p164
    %p166 = scmp.ne.s32.totalorder %s158, %s160
    %p167 = scmp.eq.s32.totalorder %s24, 1
    %p168 = por %p166, %p167
    %p169 = scmp.ne.s32.totalorder %s160, %s161
    %p170 = scmp.eq.s32.totalorder %s24, 0
    %p171 = por %p169, %p170
    %p172 = scmp.ne.s32.totalorder %s160, %s161
    %p173 = scmp.eq.s32.totalorder %s25, 1
    %p174 = por %p172, %p173
    %p176 = scmp.ne.s32.totalorder %s161, %s175
    %p177 = scmp.eq.s32.totalorder %s25, 0
    %p178 = por %p176, %p177
    %s180 = sadd.s32 %s179, 1
    %p183 = scmp.eq.s32.totalorder %s19, 1
    %p184 = scmp.ne.s32.totalorder %s179, %s181
    %p185 = scmp.eq.s32.totalorder %s19, 0
    %p186 = por %p184, %p185
    %p187 = scmp.ne.s32.totalorder %s179, %s181
    %p188 = scmp.eq.s32.totalorder %s24, 1
    %p189 = por %p187, %p188
    %p190 = scmp.ne.s32.totalorder %s181, %s182
    %p191 = scmp.eq.s32.totalorder %s24, 0
    %p192 = por %p190, %p191
    %p193 = scmp.ne.s32.totalorder %s181, %s182
    %p194 = scmp.eq.s32.totalorder %s25, 1
    %p195 = por %p193, %p194
    %p197 = scmp.ne.s32.totalorder %s182, %s196
    %p198 = scmp.eq.s32.totalorder %s25, 0
    %p199 = por %p197, %p198
    %s201 = sadd.s32 %s200, 1
    %p204 = scmp.eq.s32.totalorder %s19, 1
    %p205 = scmp.ne.s32.totalorder %s200, %s202
    %p206 = scmp.eq.s32.totalorder %s19, 0
    %p207 = por %p205, %p206
    %p208 = scmp.ne.s32.totalorder %s200, %s202
    %p209 = scmp.eq.s32.totalorder %s24, 1
    %p210 = por %p208, %p209
    %p211 = scmp.ne.s32.totalorder %s202, %s203
    %p212 = scmp.eq.s32.totalorder %s24, 0
    %p213 = por %p211, %p212
    %p214 = scmp.ne.s32.totalorder %s202, %s203
    %p215 = scmp.eq.s32.totalorder %s25, 1
    %p216 = por %p214, %p215
    %p218 = scmp.ne.s32.totalorder %s203, %s217
    %p219 = scmp.eq.s32.totalorder %s25, 0
    %p220 = por %p218, %p219
    %s222 = sadd.s32 %s221, 1
    %p225 = scmp.eq.s32.totalorder %s19, 1
    %p226 = scmp.ne.s32.totalorder %s221, %s223
    %p227 = scmp.eq.s32.totalorder %s19, 0
    %p228 = por %p226, %p227
    %p229 = scmp.ne.s32.totalorder %s221, %s223
    %p230 = scmp.eq.s32.totalorder %s24, 1
    %p231 = por %p229, %p230
    %p232 = scmp.ne.s32.totalorder %s223, %s224
    %p233 = scmp.eq.s32.totalorder %s24, 0
    %p234 = por %p232, %p233
    %p235 = scmp.ne.s32.totalorder %s223, %s224
    %p236 = scmp.eq.s32.totalorder %s25, 1
    %p237 = por %p235, %p236
    %p239 = scmp.ne.s32.totalorder %s224, %s238
    %p240 = scmp.eq.s32.totalorder %s25, 0
    %p241 = por %p239, %p240
    %s243 = sadd.s32 %s242, 1
    %p246 = scmp.eq.s32.totalorder %s19, 1
    %p247 = scmp.ne.s32.totalorder %s242, %s244
    %p248 = scmp.eq.s32.totalorder %s19, 0
    %p249 = por %p247, %p248
    %p250 = scmp.ne.s32.totalorder %s242, %s244
    %p251 = scmp.eq.s32.totalorder %s24, 1
    %p252 = por %p250, %p251
    %p253 = scmp.ne.s32.totalorder %s244, %s245
    %p254 = scmp.eq.s32.totalorder %s24, 0
    %p255 = por %p253, %p254
    %p256 = scmp.ne.s32.totalorder %s244, %s245
    %p257 = scmp.eq.s32.totalorder %s25, 1
    %p258 = por %p256, %p257
    %p260 = scmp.ne.s32.totalorder %s245, %s259
    %p261 = scmp.eq.s32.totalorder %s25, 0
    %p262 = por %p260, %p261
    %s264 = sadd.s32 %s263, 1
    %p267 = scmp.eq.s32.totalorder %s19, 1
    %p268 = scmp.ne.s32.totalorder %s263, %s265
    %p269 = scmp.eq.s32.totalorder %s19, 0
    %p270 = por %p268, %p269
    %p271 = scmp.ne.s32.totalorder %s263, %s265
    %p272 = scmp.eq.s32.totalorder %s24, 1
    %p273 = por %p271, %p272
    %p274 = scmp.ne.s32.totalorder %s265, %s266
    %p275 = scmp.eq.s32.totalorder %s24, 0
    %p276 = por %p274, %p275
    %p277 = scmp.ne.s32.totalorder %s265, %s266
    %p278 = scmp.eq.s32.totalorder %s25, 1
    %p279 = por %p277, %p278
    %p281 = scmp.ne.s32.totalorder %s266, %s280
    %p282 = scmp.eq.s32.totalorder %s25, 0
    %p283 = por %p281, %p282
    %s285 = sadd.s32 %s284, 1
    %p288 = scmp.eq.s32.totalorder %s19, 1
    %p289 = scmp.ne.s32.totalorder %s284, %s286
    %p290 = scmp.eq.s32.totalorder %s19, 0
    %p291 = por %p289, %p290
    %p292 = scmp.ne.s32.totalorder %s284, %s286
    %p293 = scmp.eq.s32.totalorder %s24, 1
    %p294 = por %p292, %p293
    %p295 = scmp.ne.s32.totalorder %s286, %s287
    %p296 = scmp.eq.s32.totalorder %s24, 0
    %p297 = por %p295, %p296
    %p298 = scmp.ne.s32.totalorder %s286, %s287
    %p299 = scmp.eq.s32.totalorder %s25, 1
    %p300 = por %p298, %p299
    %p302 = scmp.ne.s32.totalorder %s287, %s301
    %p303 = scmp.eq.s32.totalorder %s25, 0
    %p304 = por %p302, %p303
    %s305 = ssub.s32 %s19, %s26
    %p306 = scmp.eq.s32.totalorder %s305, 0
    %s308 = sadd.s32 %s307, 1
    %s309 = scalar_select %p306, %s307, %s308
    %p312 = pneg %p306
    %p313 = scmp.eq.s32.totalorder %s19, 1
    %p314 = por %p312, %p313
    %p315 = scmp.ne.s32.totalorder %s307, %s310
    %p316 = scmp.eq.s32.totalorder %s19, 0
    %p317 = por %p315, %p316
    %p318 = scmp.ne.s32.totalorder %s307, %s310
    %p319 = scmp.eq.s32.totalorder %s24, 1
    %p320 = por %p318, %p319
    %p321 = scmp.ne.s32.totalorder %s310, %s311
    %p322 = scmp.eq.s32.totalorder %s24, 0
    %p323 = por %p321, %p322
    %p324 = scmp.ne.s32.totalorder %s310, %s311
    %p325 = scmp.eq.s32.totalorder %s25, 1
    %p326 = por %p324, %p325
    %p328 = scmp.ne.s32.totalorder %s311, %s327
    %p329 = scmp.eq.s32.totalorder %s25, 0
    %p330 = por %p328, %p329
    %p331 = scmp.le.s32.totalorder 1, %s19
    %p332 = scmp.lt.s32.totalorder %s19, 3
    %p333 = pnand %p331, %p332
    %p334 = pneg %p333
    // Predicated region
    $region9: #{transformer_forward.4} parent=5 // pred_check
      _
    $region10: #{transformer_forward.4} parent=5 // pred_check_branch
      %336 = sbr.rel (%p333) target = $region12
    $region11: #{transformer_forward.4} parent=5 // pred_region
      %s337 = ssub.s32 %s19, 1
      // Predicated region
      $region13: #{transformer_forward.4} parent=11 // pred_check
        %p338 = pneg %p66
      $region14: #{transformer_forward.4} parent=11 // pred_check_branch
        %340 = sbr.rel (%p338) target = $region16
      $region15: #{transformer_forward.4} parent=11 // pred_region
        _
      $region16: #{transformer_forward.4} parent=11 // pred_fallthru
        _
      // Predicated region
      $region17: #{transformer_forward.4} parent=11 // pred_check
        %p341 = pneg %p87
      $region18: #{transformer_forward.4} parent=11 // pred_check_branch
        %343 = sbr.rel (%p341) target = $region20
      $region19: #{transformer_forward.4} parent=11 // pred_region
        _
      $region20: #{transformer_forward.4} parent=11 // pred_fallthru
        _
      // Predicated region
      $region21: #{transformer_forward.4} parent=11 // pred_check
        %p344 = pneg %p108
      $region22: #{transformer_forward.4} parent=11 // pred_check_branch
        %346 = sbr.rel (%p344) target = $region24
      $region23: #{transformer_forward.4} parent=11 // pred_region
        _
      $region24: #{transformer_forward.4} parent=11 // pred_fallthru
        _
      // Predicated region
      $region25: #{transformer_forward.4} parent=11 // pred_check
        %p347 = pneg %p129
      $region26: #{transformer_forward.4} parent=11 // pred_check_branch
        %349 = sbr.rel (%p347) target = $region28
      $region27: #{transformer_forward.4} parent=11 // pred_region
        _
      $region28: #{transformer_forward.4} parent=11 // pred_fallthru
        _
      // Predicated region
      $region29: #{transformer_forward.4} parent=11 // pred_check
        %p350 = pneg %p150
      $region30: #{transformer_forward.4} parent=11 // pred_check_branch
        %352 = sbr.rel (%p350) target = $region32
      $region31: #{transformer_forward.4} parent=11 // pred_region
        _
      $region32: #{transformer_forward.4} parent=11 // pred_fallthru
        _
      // Predicated region
      $region33: #{transformer_forward.4} parent=11 // pred_check
        %p353 = pneg %p171
      $region34: #{transformer_forward.4} parent=11 // pred_check_branch
        %355 = sbr.rel (%p353) target = $region36
      $region35: #{transformer_forward.4} parent=11 // pred_region
        _
      $region36: #{transformer_forward.4} parent=11 // pred_fallthru
        _
      // Predicated region
      $region37: #{transformer_forward.4} parent=11 // pred_check
        %p356 = pneg %p192
      $region38: #{transformer_forward.4} parent=11 // pred_check_branch
        %358 = sbr.rel (%p356) target = $region40
      $region39: #{transformer_forward.4} parent=11 // pred_region
        _
      $region40: #{transformer_forward.4} parent=11 // pred_fallthru
        _
      // Predicated region
      $region41: #{transformer_forward.4} parent=11 // pred_check
        %p359 = pneg %p213
      $region42: #{transformer_forward.4} parent=11 // pred_check_branch
        %361 = sbr.rel (%p359) target = $region44
      $region43: #{transformer_forward.4} parent=11 // pred_region
        _
      $region44: #{transformer_forward.4} parent=11 // pred_fallthru
        _
      // Predicated region
      $region45: #{transformer_forward.4} parent=11 // pred_check
        %p362 = pneg %p234
      $region46: #{transformer_forward.4} parent=11 // pred_check_branch
        %364 = sbr.rel (%p362) target = $region48
      $region47: #{transformer_forward.4} parent=11 // pred_region
        _
      $region48: #{transformer_forward.4} parent=11 // pred_fallthru
        _
      // Predicated region
      $region49: #{transformer_forward.4} parent=11 // pred_check
        %p365 = pneg %p255
      $region50: #{transformer_forward.4} parent=11 // pred_check_branch
        %367 = sbr.rel (%p365) target = $region52
      $region51: #{transformer_forward.4} parent=11 // pred_region
        _
      $region52: #{transformer_forward.4} parent=11 // pred_fallthru
        _
      // Predicated region
      $region53: #{transformer_forward.4} parent=11 // pred_check
        %p368 = pneg %p276
      $region54: #{transformer_forward.4} parent=11 // pred_check_branch
        %370 = sbr.rel (%p368) target = $region56
      $region55: #{transformer_forward.4} parent=11 // pred_region
        _
      $region56: #{transformer_forward.4} parent=11 // pred_fallthru
        _
      // Predicated region
      $region57: #{transformer_forward.4} parent=11 // pred_check
        %p371 = pneg %p297
      $region58: #{transformer_forward.4} parent=11 // pred_check_branch
        %373 = sbr.rel (%p371) target = $region60
      $region59: #{transformer_forward.4} parent=11 // pred_region
        _
      $region60: #{transformer_forward.4} parent=11 // pred_fallthru
        _
    $region12: #{transformer_forward.4} parent=5 // pred_fallthru
      _
    %p374 = scmp.lt.s32.totalorder %s19, 2
    // Predicated region
    $region61: #{transformer_forward.4} parent=5 // pred_check
      %p375 = pneg %p374
    $region62: #{transformer_forward.4} parent=5 // pred_check_branch
      %377 = sbr.rel (%p375) target = $region64
    $region63: #{transformer_forward.4} parent=5 // pred_region
      // Predicated region
      $region65: #{transformer_forward.4} parent=63 // pred_check
        %p378 = pneg %p39
      $region66: #{transformer_forward.4} parent=63 // pred_check_branch
        %380 = sbr.rel (%p378) target = $region68
      $region67: #{transformer_forward.4} parent=63 // pred_region
        %p381 = scmp.lt.s32.totalorder %s19, 1
        %s382 = scalar_select %p381, %s19, 1
        %s383 = smul.addr %s382, 8
        %s384 = scalar_lea.vmem %s0, %s383
      $region68: #{transformer_forward.4} parent=63 // pred_fallthru
        _
    $region64: #{transformer_forward.4} parent=5 // pred_fallthru
      _
    %p385 = scmp.le.s32.totalorder 1, %s19
    %p386 = scmp.lt.s32.totalorder %s19, 3
    %p387 = pnand %p385, %p386
    %p388 = pneg %p387
    // Predicated region
    $region69: #{transformer_forward.4} parent=5 // pred_check
      _
    $region70: #{transformer_forward.4} parent=5 // pred_check_branch
      %390 = sbr.rel (%p387) target = $region72
    $region71: #{transformer_forward.4} parent=5 // pred_region
      %s391 = ssub.s32 %s19, 1
      %p392 = scmp.lt.s32.totalorder %s24, 1
      %s393 = scalar_select %p392, %s24, 1
      %s394 = smul.addr %s393, 8
      %s395 = scalar_lea.vmem %s0, %s394
      %p396 = pneg %p45
      %p397 = pneg %p42
      %p398 = pneg %p66
      %p399 = pneg %p63
      %p400 = pneg %p87
      %p401 = pneg %p84
      %p402 = pneg %p108
      %p403 = pneg %p105
      %p404 = pneg %p129
      %p405 = pneg %p126
      %p406 = pneg %p150
      %p407 = pneg %p147
      %p408 = pneg %p171
      %p409 = pneg %p168
      %p410 = pneg %p192
      %p411 = pneg %p189
      %p412 = pneg %p213
      %p413 = pneg %p210
      %p414 = pneg %p234
      %p415 = pneg %p231
      %p416 = pneg %p255
      %p417 = pneg %p252
      %p418 = pneg %p276
      %p419 = pneg %p273
      %p420 = pneg %p297
      %p421 = pneg %p294
      %p422 = pneg %p323
      %p423 = pneg %p320
      %p424 = scmp.lt.s32.totalorder %s24, 1
      %s425 = scalar_select %p424, %s24, 1
      %s426 = smul.addr %s425, 8
      %s427 = scalar_lea.vmem %s13, %s426
      %p428 = scmp.lt.s32.totalorder %s24, 1
      %s429 = scalar_select %p428, %s24, 1
      %s430 = smul.addr %s429, 8
      %s431 = scalar_lea.vmem %s0, %s430
      %p432 = scmp.lt.s32.totalorder %s24, 1
      %s433 = scalar_select %p432, %s24, 1
      %s434 = smul.addr %s433, 8
      %s435 = scalar_lea.vmem %s13, %s434
      %v437 = vld [vmem:[%s431] sm:$0xff]
      %v438 = vpack.c.bf16 %v437, %v437
      %v439 = vld [vmem:[%s1] sm:$0xf]
      %v440 = vld [vmem:[%s1 + $0x4] sm:$0xf]
      %v441 = vld [vmem:[%s1 + $0x8] sm:$0xf]
      %v442 = vld [vmem:[%s1 + $0xc] sm:$0xf]
      %v443 = vld [vmem:[%s2] sm:$0x1]
      %v445 = vlaneseq
      %v446 = vshrl.u32 %v445, 7
      %v447 = vsub.s32 0, %v446
      %v448 = vrot.slane %v443, %v447
      %v454 = vunpack.c.l.b16 %v439
      %v455 = vunpack.c.l.b16 %v440
      %v456 = vunpack.c.l.b16 %v441
      %v457 = vunpack.c.l.b16 %v442
      %v458 = vpack.c.b16 %v455, %v454
      %v459 = vpack.c.b16 %v457, %v456
      %vm462 = vcmask 261120
      %v464 = vsel %vm462, %v438, 0
      %466 = vmatprep.subr.bf16.mxu0 0
      %467 = vmatpush1.bf16.msra.mxu0 %v458
      %468 = vmatprep.subr.bf16.mxu0 0
      %469 = vmatpush1.bf16.msra.mxu0 %v459
      %470 = vmatprep.subr.bf16.mxu0 0
      %471 = vmatpush1.bf16.msra.mxu0 0
      %472 = vmatprep.subr.bf16.mxu0 0
      %473 = vmatpush1.bf16.msra.mxu0 0
      %474 = vmatprep.subr.bf16.mxu0 0
      %475 = vmatpush1.bf16.msra.mxu0 0
      %476 = vmatprep.subr.bf16.mxu0 0
      %477 = vmatpush1.bf16.msra.mxu0 0
      %478 = vmatprep.subr.bf16.mxu0 0
      %479 = vmatpush1.bf16.msra.mxu0 0
      %480 = vmatprep.subr.bf16.mxu0 0
      %481 = vmatpush1.bf16.msra.mxu0 0
      %482 = vmatprep.subr.bf16.mxu0 0
      %483 = vmatpush1.bf16.msra.mxu0 0
      %484 = vmatprep.subr.bf16.mxu0 0
      %485 = vmatpush1.bf16.msra.mxu0 0
      %486 = vmatprep.subr.bf16.mxu0 0
      %487 = vmatpush1.bf16.msra.mxu0 0
      %488 = vmatprep.subr.bf16.mxu0 0
      %489 = vmatpush1.bf16.msra.mxu0 0
      %490 = vmatprep.subr.bf16.mxu0 0
      %491 = vmatpush1.bf16.msra.mxu0 0
      %492 = vmatprep.subr.bf16.mxu0 0
      %493 = vmatpush1.bf16.msra.mxu0 0
      %494 = vmatprep.subr.bf16.mxu0 0
      %495 = vmatpush1.bf16.msra.mxu0 0
      %496 = vmatprep.subr.bf16.mxu0 0
      %497 = vmatpush1.bf16.msra.mxu0 0
      %498 = vmatprep.mubr.bf16.mxu0 0
      %499 = vmatmul.mubr.bf16.gmra.mrb[0].mxu0 %v464
      %v500 = vpop.f32.mrb[0].mxu0
      %v501 = vadd.f32 %v448, %v500
      %v502 = vpop.f32.mrb[0].mxu0
      %v503 = vpop.f32.mrb[0].mxu0
      %v504 = vpop.f32.mrb[0].mxu0
      %505 = vdwg.mxu0
      %v506 = vpack.c.bf16 %v501, %v501
      %508 = vrot.lane.b32.xlu0 %v506, 96
      %v509 = vpop.permute.xlu0 %508
      %vm510 = vcmask 64512
      %v512 = vsel %vm510, %v506, 0
      %v515 = vsel %vm510, %v509, 0
      %517 = vmatprep.subr.bf16.mxu0 0
      %518 = vmatpush1.bf16.xpose.msra.mxu0 %v515
      %519 = vmatprep.subr.bf16.mxu0 0
      %520 = vmatpush1.bf16.xpose.msra.mxu0 0
      %521 = vmatprep.subr.bf16.mxu0 0
      %522 = vmatpush1.bf16.xpose.msra.mxu0 0
      %523 = vmatprep.subr.bf16.mxu0 0
      %524 = vmatpush1.bf16.xpose.msra.mxu0 0
      %525 = vmatprep.subr.bf16.mxu0 0
      %526 = vmatpush1.bf16.xpose.msra.mxu0 0
      %527 = vmatprep.subr.bf16.mxu0 0
      %528 = vmatpush1.bf16.xpose.msra.mxu0 0
      %529 = vmatprep.subr.bf16.mxu0 0
      %530 = vmatpush1.bf16.xpose.msra.mxu0 0
      %531 = vmatprep.subr.bf16.mxu0 0
      %532 = vmatpush1.bf16.xpose.msra.mxu0 0
      %533 = vmatprep.subr.bf16.mxu0 0
      %534 = vmatpush1.bf16.xpose.msra.mxu0 0
      %535 = vmatprep.subr.bf16.mxu0 0
      %536 = vmatpush1.bf16.xpose.msra.mxu0 0
      %537 = vmatprep.subr.bf16.mxu0 0
      %538 = vmatpush1.bf16.xpose.msra.mxu0 0
      %539 = vmatprep.subr.bf16.mxu0 0
      %540 = vmatpush1.bf16.xpose.msra.mxu0 0
      %541 = vmatprep.subr.bf16.mxu0 0
      %542 = vmatpush1.bf16.xpose.msra.mxu0 0
      %543 = vmatprep.subr.bf16.mxu0 0
      %544 = vmatpush1.bf16.xpose.msra.mxu0 0
      %545 = vmatprep.subr.bf16.mxu0 0
      %546 = vmatpush1.bf16.xpose.msra.mxu0 0
      %547 = vmatprep.subr.bf16.mxu0 0
      %548 = vmatpush1.bf16.xpose.msra.mxu0 0
      %549 = vmatprep.mubr.bf16.mxu0 0
      %550 = vmatmul.mubr.bf16.gmra.mrb[0].mxu0 %v512
      %v551 = vpop.f32.mrb[0].mxu0
      %v552 = vadd.f32 0.0, %v551
      %v553 = vpop.f32.mrb[0].mxu0
      %v554 = vpop.f32.mrb[0].mxu0
      %v555 = vpop.f32.mrb[0].mxu0
      %556 = vdwg.mxu0
      %v557 = vmul.f32 %v552, 0.35355338
      %v558 = vsel %vm510, %v557, -inf
      %559 = vmax.xlane.f32.xlu0 %v558
      %v560 = vpop.xlane.xlu0 %559
      %v561 = vsub.f32 %v557, %v560
      %v562 = vmul.f32 %v561, 1.442695
      %v563 = vpow.pop %v562
      %v564 = vsel %vm510, %v563, 0.0
      %565 = vadd.xlane.f32.xlu0 %v564
      %v566 = vpop.xlane.xlu0 %565
      %v567 = vrcp.pop %v566
      %v568 = vmul.f32 %v563, %v567
      %v569 = vpack.c.bf16 %v568, %v568
      %570 = vrot.lane.b32.xlu0 %v506, 64
      %v571 = vpop.permute.xlu0 %570
      %v573 = vsel %vm510, %v569, 0
      %vm575 = vcmask 1043456
      %v577 = vsel %vm575, %v571, 0
      %579 = vmatprep.subr.bf16.mxu0 0
      %580 = vmatpush1.bf16.msra.mxu0 %v577
      %581 = vmatprep.subr.bf16.mxu0 0
      %582 = vmatpush1.bf16.msra.mxu0 0
      %583 = vmatprep.subr.bf16.mxu0 0
      %584 = vmatpush1.bf16.msra.mxu0 0
      %585 = vmatprep.subr.bf16.mxu0 0
      %586 = vmatpush1.bf16.msra.mxu0 0
      %587 = vmatprep.subr.bf16.mxu0 0
      %588 = vmatpush1.bf16.msra.mxu0 0
      %589 = vmatprep.subr.bf16.mxu0 0
      %590 = vmatpush1.bf16.msra.mxu0 0
      %591 = vmatprep.subr.bf16.mxu0 0
      %592 = vmatpush1.bf16.msra.mxu0 0
      %593 = vmatprep.subr.bf16.mxu0 0
      %594 = vmatpush1.bf16.msra.mxu0 0
      %595 = vmatprep.subr.bf16.mxu0 0
      %596 = vmatpush1.bf16.msra.mxu0 0
      %597 = vmatprep.subr.bf16.mxu0 0
      %598 = vmatpush1.bf16.msra.mxu0 0
      %599 = vmatprep.subr.bf16.mxu0 0
      %600 = vmatpush1.bf16.msra.mxu0 0
      %601 = vmatprep.subr.bf16.mxu0 0
      %602 = vmatpush1.bf16.msra.mxu0 0
      %603 = vmatprep.subr.bf16.mxu0 0
      %604 = vmatpush1.bf16.msra.mxu0 0
      %605 = vmatprep.subr.bf16.mxu0 0
      %606 = vmatpush1.bf16.msra.mxu0 0
      %607 = vmatprep.subr.bf16.mxu0 0
      %608 = vmatpush1.bf16.msra.mxu0 0
      %609 = vmatprep.subr.bf16.mxu0 0
      %610 = vmatpush1.bf16.msra.mxu0 0
      %611 = vmatprep.mubr.bf16.mxu0 0
      %612 = vmatmul.mubr.bf16.gmra.mrb[0].mxu0 %v573
      %v613 = vpop.f32.mrb[0].mxu0
      %v614 = vadd.f32 0.0, %v613
      %v615 = vpop.f32.mrb[0].mxu0
      %v616 = vpop.f32.mrb[0].mxu0
      %v617 = vpop.f32.mrb[0].mxu0
      %618 = vdwg.mxu0
      %619 = vrot.lane.b32.xlu0 %v506, 120
      %v620 = vpop.permute.xlu0 %619
      %621 = vrot.lane.b32.xlu0 %v506, 88
      %v622 = vpop.permute.xlu0 %621
      %v624 = vsel %vm510, %v620, 0
      %v627 = vsel %vm510, %v622, 0
      %629 = vmatprep.subr.bf16.mxu0 0
      %630 = vmatpush1.bf16.xpose.msra.mxu0 %v627
      %631 = vmatprep.subr.bf16.mxu0 0
      %632 = vmatpush1.bf16.xpose.msra.mxu0 0
      %633 = vmatprep.subr.bf16.mxu0 0
      %634 = vmatpush1.bf16.xpose.msra.mxu0 0
      %635 = vmatprep.subr.bf16.mxu0 0
      %636 = vmatpush1.bf16.xpose.msra.mxu0 0
      %637 = vmatprep.subr.bf16.mxu0 0
      %638 = vmatpush1.bf16.xpose.msra.mxu0 0
      %639 = vmatprep.subr.bf16.mxu0 0
      %640 = vmatpush1.bf16.xpose.msra.mxu0 0
      %641 = vmatprep.subr.bf16.mxu0 0
      %642 = vmatpush1.bf16.xpose.msra.mxu0 0
      %643 = vmatprep.subr.bf16.mxu0 0
      %644 = vmatpush1.bf16.xpose.msra.mxu0 0
      %645 = vmatprep.subr.bf16.mxu0 0
      %646 = vmatpush1.bf16.xpose.msra.mxu0 0
      %647 = vmatprep.subr.bf16.mxu0 0
      %648 = vmatpush1.bf16.xpose.msra.mxu0 0
      %649 = vmatprep.subr.bf16.mxu0 0
      %650 = vmatpush1.bf16.xpose.msra.mxu0 0
      %651 = vmatprep.subr.bf16.mxu0 0
      %652 = vmatpush1.bf16.xpose.msra.mxu0 0
      %653 = vmatprep.subr.bf16.mxu0 0
      %654 = vmatpush1.bf16.xpose.msra.mxu0 0
      %655 = vmatprep.subr.bf16.mxu0 0
      %656 = vmatpush1.bf16.xpose.msra.mxu0 0
      %657 = vmatprep.subr.bf16.mxu0 0
      %658 = vmatpush1.bf16.xpose.msra.mxu0 0
      %659 = vmatprep.subr.bf16.mxu0 0
      %660 = vmatpush1.bf16.xpose.msra.mxu0 0
      %661 = vmatprep.mubr.bf16.mxu0 0
      %662 = vmatmul.mubr.bf16.gmra.mrb[0].mxu0 %v624
      %v663 = vpop.f32.mrb[0].mxu0
      %v664 = vadd.f32 0.0, %v663
      %v665 = vpop.f32.mrb[0].mxu0
      %v666 = vpop.f32.mrb[0].mxu0
      %v667 = vpop.f32.mrb[0].mxu0
      %668 = vdwg.mxu0
      %v669 = vmul.f32 %v664, 0.35355338
      %v670 = vsel %vm510, %v669, -inf
      %671 = vmax.xlane.f32.xlu0 %v670
      %v672 = vpop.xlane.xlu0 %671
      %v673 = vsub.f32 %v669, %v672
      %v674 = vmul.f32 %v673, 1.442695
      %v675 = vpow.pop %v674
      %v676 = vsel %vm510, %v675, 0.0
      %677 = vadd.xlane.f32.xlu0 %v676
      %v678 = vpop.xlane.xlu0 %677
      %v679 = vrcp.pop %v678
      %v680 = vmul.f32 %v675, %v679
      %v681 = vpack.c.bf16 %v680, %v680
      %682 = vrot.lane.b32.xlu0 %v506, 56
      %v683 = vpop.permute.xlu0 %682
      %v685 = vsel %vm510, %v681, 0
      %v688 = vsel %vm575, %v683, 0
      %690 = vmatprep.subr.bf16.mxu0 0
      %691 = vmatpush1.bf16.msra.mxu0 %v688
      %692 = vmatprep.subr.bf16.mxu0 0
      %693 = vmatpush1.bf16.msra.mxu0 0
      %694 = vmatprep.subr.bf16.mxu0 0
      %695 = vmatpush1.bf16.msra.mxu0 0
      %696 = vmatprep.subr.bf16.mxu0 0
      %697 = vmatpush1.bf16.msra.mxu0 0
      %698 = vmatprep.subr.bf16.mxu0 0
      %699 = vmatpush1.bf16.msra.mxu0 0
      %700 = vmatprep.subr.bf16.mxu0 0
      %701 = vmatpush1.bf16.msra.mxu0 0
      %702 = vmatprep.subr.bf16.mxu0 0
      %703 = vmatpush1.bf16.msra.mxu0 0
      %704 = vmatprep.subr.bf16.mxu0 0
      %705 = vmatpush1.bf16.msra.mxu0 0
      %706 = vmatprep.subr.bf16.mxu0 0
      %707 = vmatpush1.bf16.msra.mxu0 0
      %708 = vmatprep.subr.bf16.mxu0 0
      %709 = vmatpush1.bf16.msra.mxu0 0
      %710 = vmatprep.subr.bf16.mxu0 0
      %711 = vmatpush1.bf16.msra.mxu0 0
      %712 = vmatprep.subr.bf16.mxu0 0
      %713 = vmatpush1.bf16.msra.mxu0 0
      %714 = vmatprep.subr.bf16.mxu0 0
      %715 = vmatpush1.bf16.msra.mxu0 0
      %716 = vmatprep.subr.bf16.mxu0 0
      %717 = vmatpush1.bf16.msra.mxu0 0
      %718 = vmatprep.subr.bf16.mxu0 0
      %719 = vmatpush1.bf16.msra.mxu0 0
      %720 = vmatprep.subr.bf16.mxu0 0
      %721 = vmatpush1.bf16.msra.mxu0 0
      %722 = vmatprep.mubr.bf16.mxu0 0
      %723 = vmatmul.mubr.bf16.gmra.mrb[0].mxu0 %v685
      %v724 = vpop.f32.mrb[0].mxu0
      %v725 = vadd.f32 0.0, %v724
      %v726 = vpop.f32.mrb[0].mxu0
      %v727 = vpop.f32.mrb[0].mxu0
      %v728 = vpop.f32.mrb[0].mxu0
      %729 = vdwg.mxu0
      %730 = vrot.lane.b32.xlu0 %v506, 112
      %v731 = vpop.permute.xlu0 %730
      %732 = vrot.lane.b32.xlu0 %v506, 80
      %v733 = vpop.permute.xlu0 %732
      %v735 = vsel %vm510, %v731, 0
      %v738 = vsel %vm510, %v733, 0
      %740 = vmatprep.subr.bf16.mxu0 0
      %741 = vmatpush1.bf16.xpose.msra.mxu0 %v738
      %742 = vmatprep.subr.bf16.mxu0 0
      %743 = vmatpush1.bf16.xpose.msra.mxu0 0
      %744 = vmatprep.subr.bf16.mxu0 0
      %745 = vmatpush1.bf16.xpose.msra.mxu0 0
      %746 = vmatprep.subr.bf16.mxu0 0
      %747 = vmatpush1.bf16.xpose.msra.mxu0 0
      %748 = vmatprep.subr.bf16.mxu0 0
      %749 = vmatpush1.bf16.xpose.msra.mxu0 0
      %750 = vmatprep.subr.bf16.mxu0 0
      %751 = vmatpush1.bf16.xpose.msra.mxu0 0
      %752 = vmatprep.subr.bf16.mxu0 0
      %753 = vmatpush1.bf16.xpose.msra.mxu0 0
      %754 = vmatprep.subr.bf16.mxu0 0
      %755 = vmatpush1.bf16.xpose.msra.mxu0 0
      %756 = vmatprep.subr.bf16.mxu0 0
      %757 = vmatpush1.bf16.xpose.msra.mxu0 0
      %758 = vmatprep.subr.bf16.mxu0 0
      %759 = vmatpush1.bf16.xpose.msra.mxu0 0
      %760 = vmatprep.subr.bf16.mxu0 0
      %761 = vmatpush1.bf16.xpose.msra.mxu0 0
      %762 = vmatprep.subr.bf16.mxu0 0
      %763 = vmatpush1.bf16.xpose.msra.mxu0 0
      %764 = vmatprep.subr.bf16.mxu0 0
      %765 = vmatpush1.bf16.xpose.msra.mxu0 0
      %766 = vmatprep.subr.bf16.mxu0 0
      %767 = vmatpush1.bf16.xpose.msra.mxu0 0
      %768 = vmatprep.subr.bf16.mxu0 0
      %769 = vmatpush1.bf16.xpose.msra.mxu0 0
      %770 = vmatprep.subr.bf16.mxu0 0
      %771 = vmatpush1.bf16.xpose.msra.mxu0 0
      %772 = vmatprep.mubr.bf16.mxu0 0
      %773 = vmatmul.mubr.bf16.gmra.mrb[0].mxu0 %v735
      %v774 = vpop.f32.mrb[0].mxu0
      %v775 = vadd.f32 0.0, %v774
      %v776 = vpop.f32.mrb[0].mxu0
      %v777 = vpop.f32.mrb[0].mxu0
      %v778 = vpop.f32.mrb[0].mxu0
      %779 = vdwg.mxu0
      %v780 = vmul.f32 %v775, 0.35355338
      %v781 = vsel %vm510, %v780, -inf
      %782 = vmax.xlane.f32.xlu0 %v781
      %v783 = vpop.xlane.xlu0 %782
      %v784 = vsub.f32 %v780, %v783
      %v785 = vmul.f32 %v784, 1.442695
      %v786 = vpow.pop %v785
      %v787 = vsel %vm510, %v786, 0.0
      %788 = vadd.xlane.f32.xlu0 %v787
      %v789 = vpop.xlane.xlu0 %788
      %v790 = vrcp.pop %v789
      %v791 = vmul.f32 %v786, %v790
      %v792 = vpack.c.bf16 %v791, %v791
      %793 = vrot.lane.b32.xlu0 %v506, 48
      %v794 = vpop.permute.xlu0 %793
      %v796 = vsel %vm510, %v792, 0
      %v799 = vsel %vm575, %v794, 0
      %801 = vmatprep.subr.bf16.mxu0 0
      %802 = vmatpush1.bf16.msra.mxu0 %v799
      %803 = vmatprep.subr.bf16.mxu0 0
      %804 = vmatpush1.bf16.msra.mxu0 0
      %805 = vmatprep.subr.bf16.mxu0 0
      %806 = vmatpush1.bf16.msra.mxu0 0
      %807 = vmatprep.subr.bf16.mxu0 0
      %808 = vmatpush1.bf16.msra.mxu0 0
      %809 = vmatprep.subr.bf16.mxu0 0
      %810 = vmatpush1.bf16.msra.mxu0 0
      %811 = vmatprep.subr.bf16.mxu0 0
      %812 = vmatpush1.bf16.msra.mxu0 0
      %813 = vmatprep.subr.bf16.mxu0 0
      %814 = vmatpush1.bf16.msra.mxu0 0
      %815 = vmatprep.subr.bf16.mxu0 0
      %816 = vmatpush1.bf16.msra.mxu0 0
      %817 = vmatprep.subr.bf16.mxu0 0
      %818 = vmatpush1.bf16.msra.mxu0 0
      %819 = vmatprep.subr.bf16.mxu0 0
      %820 = vmatpush1.bf16.msra.mxu0 0
      %821 = vmatprep.subr.bf16.mxu0 0
      %822 = vmatpush1.bf16.msra.mxu0 0
      %823 = vmatprep.subr.bf16.mxu0 0
      %824 = vmatpush1.bf16.msra.mxu0 0
      %825 = vmatprep.subr.bf16.mxu0 0
      %826 = vmatpush1.bf16.msra.mxu0 0
      %827 = vmatprep.subr.bf16.mxu0 0
      %828 = vmatpush1.bf16.msra.mxu0 0
      %829 = vmatprep.subr.bf16.mxu0 0
      %830 = vmatpush1.bf16.msra.mxu0 0
      %831 = vmatprep.subr.bf16.mxu0 0
      %832 = vmatpush1.bf16.msra.mxu0 0
      %833 = vmatprep.mubr.bf16.mxu0 0
      %834 = vmatmul.mubr.bf16.gmra.mrb[0].mxu0 %v796
      %v835 = vpop.f32.mrb[0].mxu0
      %v836 = vadd.f32 0.0, %v835
      %v837 = vpop.f32.mrb[0].mxu0
      %v838 = vpop.f32.mrb[0].mxu0
      %v839 = vpop.f32.mrb[0].mxu0
      %840 = vdwg.mxu0
      %841 = vrot.lane.b32.xlu0 %v506, 104
      %v842 = vpop.permute.xlu0 %841
      %843 = vrot.lane.b32.xlu0 %v506, 72
      %v844 = vpop.permute.xlu0 %843
      %v846 = vsel %vm510, %v842, 0
      %v849 = vsel %vm510, %v844, 0
      %851 = vmatprep.subr.bf16.mxu0 0
      %852 = vmatpush1.bf16.xpose.msra.mxu0 %v849
      %853 = vmatprep.subr.bf16.mxu0 0
      %854 = vmatpush1.bf16.xpose.msra.mxu0 0
      %855 = vmatprep.subr.bf16.mxu0 0
      %856 = vmatpush1.bf16.xpose.msra.mxu0 0
      %857 = vmatprep.subr.bf16.mxu0 0
      %858 = vmatpush1.bf16.xpose.msra.mxu0 0
      %859 = vmatprep.subr.bf16.mxu0 0
      %860 = vmatpush1.bf16.xpose.msra.mxu0 0
      %861 = vmatprep.subr.bf16.mxu0 0
      %862 = vmatpush1.bf16.xpose.msra.mxu0 0
      %863 = vmatprep.subr.bf16.mxu0 0
      %864 = vmatpush1.bf16.xpose.msra.mxu0 0
      %865 = vmatprep.subr.bf16.mxu0 0
      %866 = vmatpush1.bf16.xpose.msra.mxu0 0
      %867 = vmatprep.subr.bf16.mxu0 0
      %868 = vmatpush1.bf16.xpose.msra.mxu0 0
      %869 = vmatprep.subr.bf16.mxu0 0
      %870 = vmatpush1.bf16.xpose.msra.mxu0 0
      %871 = vmatprep.subr.bf16.mxu0 0
      %872 = vmatpush1.bf16.xpose.msra.mxu0 0
      %873 = vmatprep.subr.bf16.mxu0 0
      %874 = vmatpush1.bf16.xpose.msra.mxu0 0
      %875 = vmatprep.subr.bf16.mxu0 0
      %876 = vmatpush1.bf16.xpose.msra.mxu0 0
      %877 = vmatprep.subr.bf16.mxu0 0
      %878 = vmatpush1.bf16.xpose.msra.mxu0 0
      %879 = vmatprep.subr.bf16.mxu0 0
      %880 = vmatpush1.bf16.xpose.msra.mxu0 0
      %881 = vmatprep.subr.bf16.mxu0 0
      %882 = vmatpush1.bf16.xpose.msra.mxu0 0
      %883 = vmatprep.mubr.bf16.mxu0 0
      %884 = vmatmul.mubr.bf16.gmra.mrb[0].mxu0 %v846
      %v885 = vpop.f32.mrb[0].mxu0
      %v886 = vadd.f32 0.0, %v885
      %v887 = vpop.f32.mrb[0].mxu0
      %v888 = vpop.f32.mrb[0].mxu0
      %v889 = vpop.f32.mrb[0].mxu0
      %890 = vdwg.mxu0
      %v891 = vmul.f32 %v886, 0.35355338
      %v892 = vsel %vm510, %v891, -inf
      %893 = vmax.xlane.f32.xlu0 %v892
      %v894 = vpop.xlane.xlu0 %893
      %v895 = vsub.f32 %v891, %v894
      %v896 = vmul.f32 %v895, 1.442695
      %v897 = vpow.pop %v896
      %v898 = vsel %vm510, %v897, 0.0
      %899 = vadd.xlane.f32.xlu0 %v898
      %v900 = vpop.xlane.xlu0 %899
      %v901 = vrcp.pop %v900
      %v902 = vmul.f32 %v897, %v901
      %v903 = vpack.c.bf16 %v902, %v902
      %904 = vrot.lane.b32.xlu0 %v506, 40
      %v905 = vpop.permute.xlu0 %904
      %v907 = vsel %vm510, %v903, 0
      %v910 = vsel %vm575, %v905, 0
      %912 = vmatprep.subr.bf16.mxu0 0
      %913 = vmatpush1.bf16.msra.mxu0 %v910
      %914 = vmatprep.subr.bf16.mxu0 0
      %915 = vmatpush1.bf16.msra.mxu0 0
      %916 = vmatprep.subr.bf16.mxu0 0
      %917 = vmatpush1.bf16.msra.mxu0 0
      %918 = vmatprep.subr.bf16.mxu0 0
      %919 = vmatpush1.bf16.msra.mxu0 0
      %920 = vmatprep.subr.bf16.mxu0 0
      %921 = vmatpush1.bf16.msra.mxu0 0
      %922 = vmatprep.subr.bf16.mxu0 0
      %923 = vmatpush1.bf16.msra.mxu0 0
      %924 = vmatprep.subr.bf16.mxu0 0
      %925 = vmatpush1.bf16.msra.mxu0 0
      %926 = vmatprep.subr.bf16.mxu0 0
      %927 = vmatpush1.bf16.msra.mxu0 0
      %928 = vmatprep.subr.bf16.mxu0 0
      %929 = vmatpush1.bf16.msra.mxu0 0
      %930 = vmatprep.subr.bf16.mxu0 0
      %931 = vmatpush1.bf16.msra.mxu0 0
      %932 = vmatprep.subr.bf16.mxu0 0
      %933 = vmatpush1.bf16.msra.mxu0 0
      %934 = vmatprep.subr.bf16.mxu0 0
      %935 = vmatpush1.bf16.msra.mxu0 0
      %936 = vmatprep.subr.bf16.mxu0 0
      %937 = vmatpush1.bf16.msra.mxu0 0
      %938 = vmatprep.subr.bf16.mxu0 0
      %939 = vmatpush1.bf16.msra.mxu0 0
      %940 = vmatprep.subr.bf16.mxu0 0
      %941 = vmatpush1.bf16.msra.mxu0 0
      %942 = vmatprep.subr.bf16.mxu0 0
      %943 = vmatpush1.bf16.msra.mxu0 0
      %944 = vmatprep.mubr.bf16.mxu0 0
      %945 = vmatmul.mubr.bf16.gmra.mrb[0].mxu0 %v907
      %v946 = vpop.f32.mrb[0].mxu0
      %v947 = vadd.f32 0.0, %v946
      %v948 = vpop.f32.mrb[0].mxu0
      %v949 = vpop.f32.mrb[0].mxu0
      %v950 = vpop.f32.mrb[0].mxu0
      %951 = vdwg.mxu0
      %953 = vrot.lane.b32.xlu0 %v725, 8
      %v954 = vpop.permute.xlu0 %953
      %957 = vrot.lane.b32.xlu0 %v836, 16
      %v958 = vpop.permute.xlu0 %957
      %961 = vrot.lane.b32.xlu0 %v947, 24
      %v962 = vpop.permute.xlu0 %961
      %v964 = vsel %vm510, %v614, %v954
      %vm965 = vcmask 130048
      %v966 = vsel %vm965, %v964, %v958
      %vm967 = vcmask 195584
      %v968 = vsel %vm967, %v966, %v962
      %v969 = vpack.c.bf16 %v968, %v968
      %v970 = vld [vmem:[%s3] sm:$0xf]
      %v971 = vld [vmem:[%s3 + $0x4] sm:$0xf]
      %v972 = vld [vmem:[%s3 + $0x8] sm:$0xf]
      %v973 = vld [vmem:[%s3 + $0xc] sm:$0xf]
      %v974 = vld [vmem:[%s4] sm:$0x1]
      %v976 = vlaneseq
      %v977 = vshrl.u32 %v976, 7
      %v978 = vsub.s32 0, %v977
      %v979 = vrot.slane %v974, %v978
      %v985 = vunpack.c.l.b16 %v970
      %v986 = vunpack.c.l.b16 %v971
      %v987 = vunpack.c.l.b16 %v972
      %v988 = vunpack.c.l.b16 %v973
      %v989 = vpack.c.b16 %v986, %v985
      %v990 = vpack.c.b16 %v988, %v987
      %v994 = vsel %vm462, %v969, 0
      %996 = vmatprep.subr.bf16.mxu0 0
      %997 = vmatpush1.bf16.msra.mxu0 %v989
      %998 = vmatprep.subr.bf16.mxu0 0
      %999 = vmatpush1.bf16.msra.mxu0 %v990
      %1000 = vmatprep.subr.bf16.mxu0 0
      %1001 = vmatpush1.bf16.msra.mxu0 0
      %1002 = vmatprep.subr.bf16.mxu0 0
      %1003 = vmatpush1.bf16.msra.mxu0 0
      %1004 = vmatprep.subr.bf16.mxu0 0
      %1005 = vmatpush1.bf16.msra.mxu0 0
      %1006 = vmatprep.subr.bf16.mxu0 0
      %1007 = vmatpush1.bf16.msra.mxu0 0
      %1008 = vmatprep.subr.bf16.mxu0 0
      %1009 = vmatpush1.bf16.msra.mxu0 0
      %1010 = vmatprep.subr.bf16.mxu0 0
      %1011 = vmatpush1.bf16.msra.mxu0 0
      %1012 = vmatprep.subr.bf16.mxu0 0
      %1013 = vmatpush1.bf16.msra.mxu0 0
      %1014 = vmatprep.subr.bf16.mxu0 0
      %1015 = vmatpush1.bf16.msra.mxu0 0
      %1016 = vmatprep.subr.bf16.mxu0 0
      %1017 = vmatpush1.bf16.msra.mxu0 0
      %1018 = vmatprep.subr.bf16.mxu0 0
      %1019 = vmatpush1.bf16.msra.mxu0 0
      %1020 = vmatprep.subr.bf16.mxu0 0
      %1021 = vmatpush1.bf16.msra.mxu0 0
      %1022 = vmatprep.subr.bf16.mxu0 0
      %1023 = vmatpush1.bf16.msra.mxu0 0
      %1024 = vmatprep.subr.bf16.mxu0 0
      %1025 = vmatpush1.bf16.msra.mxu0 0
      %1026 = vmatprep.subr.bf16.mxu0 0
      %1027 = vmatpush1.bf16.msra.mxu0 0
      %1028 = vmatprep.mubr.bf16.mxu0 0
      %1029 = vmatmul.mubr.bf16.gmra.mrb[0].mxu0 %v994
      %v1030 = vpop.f32.mrb[0].mxu0
      %v1031 = vadd.f32 %v979, %v1030
      %v1032 = vpop.f32.mrb[0].mxu0
      %v1033 = vpop.f32.mrb[0].mxu0
      %v1034 = vpop.f32.mrb[0].mxu0
      %1035 = vdwg.mxu0
      %v1036 = vadd.f32 %v437, %v1031
      %v1037 = vld [vmem:[%s5] sm:$0x1]
      %v1038 = vld [vmem:[%s6] sm:$0x1]
      %v1039 = vsel %vm462, %v1036, 0.0
      %1040 = vadd.xlane.f32.xlu0 %v1039
      %v1041 = vpop.xlane.xlu0 %1040
      %v1042 = vrcp.pop 32.0
      %v1043 = vmul.f32 %v1041, %v1042
      %v1044 = vsub.f32 %v1036, %v1043
      %v1045 = vmul.f32 %v1044, %v1044
      %v1046 = vsel %vm462, %v1045, 0.0
      %1047 = vadd.xlane.f32.xlu0 %v1046
      %v1048 = vpop.xlane.xlu0 %1047
      %v1049 = vmul.f32 %v1048, 0.032258064
      %v1050 = vrsqrt.pop %v1049
      %v1051 = vmul.f32 %v1049, %v1050
      %vm1052 = vcmp.eq.f32.partialorder %v1049, inf
      %v1053 = vsel %vm1052, %v1049, %v1051
      %vm1054 = vcmp.eq.f32.partialorder %v1049, 0.0
      %v1055 = vand.u32 %v1049, 2147483648
      %v1056 = vsel %vm1054, %v1055, %v1053
      %v1058 = vlaneseq
      %v1059 = vshrl.u32 %v1058, 7
      %v1060 = vsub.s32 0, %v1059
      %v1061 = vrot.slane %v1037, %v1060
      %v1063 = vmul.f32 %v1061, %v1044
      %v1064 = vadd.f32 %v1056, 1e-06
      %v1065 = vrcp.pop %v1064
      %v1066 = vmul.f32 %v1063, %v1065
      %v1068 = vlaneseq
      %v1069 = vshrl.u32 %v1068, 7
      %v1070 = vsub.s32 0, %v1069
      %v1071 = vrot.slane %v1038, %v1070
      %v1073 = vadd.f32 %v1066, %v1071
      %v1074 = vpack.c.bf16 %v1073, %v1073
      %v1075 = vld [vmem:[%s7] sm:$0xf]
      %v1076 = vld [vmem:[%s7 + $0x4] sm:$0xf]
      %v1077 = vld [vmem:[%s7 + $0x8] sm:$0xf]
      %v1078 = vld [vmem:[%s7 + $0xc] sm:$0xf]
      %v1079 = vld [vmem:[%s8] sm:$0x1]
      %v1081 = vlaneseq
      %v1082 = vshrl.u32 %v1081, 7
      %v1083 = vsub.s32 0, %v1082
      %v1084 = vrot.slane %v1079, %v1083
      %v1090 = vunpack.c.l.b16 %v1075
      %v1091 = vunpack.c.l.b16 %v1076
      %v1092 = vunpack.c.l.b16 %v1077
      %v1093 = vunpack.c.l.b16 %v1078
      %v1094 = vpack.c.b16 %v1091, %v1090
      %v1095 = vpack.c.b16 %v1093, %v1092
      %v1099 = vsel %vm462, %v1074, 0
      %1101 = vmatprep.subr.bf16.mxu0 0
      %1102 = vmatpush1.bf16.msra.mxu0 %v1094
      %1103 = vmatprep.subr.bf16.mxu0 0
      %1104 = vmatpush1.bf16.msra.mxu0 %v1095
      %1105 = vmatprep.subr.bf16.mxu0 0
      %1106 = vmatpush1.bf16.msra.mxu0 0
      %1107 = vmatprep.subr.bf16.mxu0 0
      %1108 = vmatpush1.bf16.msra.mxu0 0
      %1109 = vmatprep.subr.bf16.mxu0 0
      %1110 = vmatpush1.bf16.msra.mxu0 0
      %1111 = vmatprep.subr.bf16.mxu0 0
      %1112 = vmatpush1.bf16.msra.mxu0 0
      %1113 = vmatprep.subr.bf16.mxu0 0
      %1114 = vmatpush1.bf16.msra.mxu0 0
      %1115 = vmatprep.subr.bf16.mxu0 0
      %1116 = vmatpush1.bf16.msra.mxu0 0
      %1117 = vmatprep.subr.bf16.mxu0 0
      %1118 = vmatpush1.bf16.msra.mxu0 0
      %1119 = vmatprep.subr.bf16.mxu0 0
      %1120 = vmatpush1.bf16.msra.mxu0 0
      %1121 = vmatprep.subr.bf16.mxu0 0
      %1122 = vmatpush1.bf16.msra.mxu0 0
      %1123 = vmatprep.subr.bf16.mxu0 0
      %1124 = vmatpush1.bf16.msra.mxu0 0
      %1125 = vmatprep.subr.bf16.mxu0 0
      %1126 = vmatpush1.bf16.msra.mxu0 0
      %1127 = vmatprep.subr.bf16.mxu0 0
      %1128 = vmatpush1.bf16.msra.mxu0 0
      %1129 = vmatprep.subr.bf16.mxu0 0
      %1130 = vmatpush1.bf16.msra.mxu0 0
      %1131 = vmatprep.subr.bf16.mxu0 0
      %1132 = vmatpush1.bf16.msra.mxu0 0
      %1133 = vmatprep.mubr.bf16.mxu0 0
      %1134 = vmatmul.mubr.bf16.gmra.mrb[0].mxu0 %v1099
      %v1135 = vpop.f32.mrb[0].mxu0
      %v1136 = vadd.f32 %v1084, %v1135
      %v1137 = vpop.f32.mrb[0].mxu0
      %v1138 = vpop.f32.mrb[0].mxu0
      %v1139 = vpop.f32.mrb[0].mxu0
      %1140 = vdwg.mxu0
      %v1141 = vmax.f32 %v1136, 0.0
      %v1142 = vpack.c.bf16 %v1141, %v1141
      %v1143 = vld [vmem:[%s9] sm:$0xf]
      %v1144 = vld [vmem:[%s9 + $0x4] sm:$0xf]
      %v1145 = vld [vmem:[%s9 + $0x8] sm:$0xf]
      %v1146 = vld [vmem:[%s9 + $0xc] sm:$0xf]
      %v1147 = vld [vmem:[%s9 + $0x10] sm:$0xf]
      %v1148 = vld [vmem:[%s9 + $0x14] sm:$0xf]
      %v1149 = vld [vmem:[%s9 + $0x18] sm:$0xf]
      %v1150 = vld [vmem:[%s9 + $0x1c] sm:$0xf]
      %v1151 = vld [vmem:[%s10] sm:$0x1]
      %v1153 = vlaneseq
      %v1154 = vshrl.u32 %v1153, 7
      %v1155 = vsub.s32 0, %v1154
      %v1156 = vrot.slane %v1151, %v1155
      %v1166 = vunpack.c.l.b16 %v1143
      %v1167 = vunpack.c.l.b16 %v1144
      %v1168 = vunpack.c.l.b16 %v1145
      %v1169 = vunpack.c.l.b16 %v1146
      %v1170 = vunpack.c.l.b16 %v1147
      %v1171 = vunpack.c.l.b16 %v1148
      %v1172 = vunpack.c.l.b16 %v1149
      %v1173 = vunpack.c.l.b16 %v1150
      %v1174 = vpack.c.b16 %v1167, %v1166
      %v1175 = vpack.c.b16 %v1169, %v1168
      %v1176 = vpack.c.b16 %v1171, %v1170
      %v1177 = vpack.c.b16 %v1173, %v1172
      %vm1182 = vcmask 523264
      %v1184 = vsel %vm1182, %v1142, 0
      %1186 = vmatprep.subr.bf16.mxu0 0
      %1187 = vmatpush1.bf16.msra.mxu0 %v1174
      %1188 = vmatprep.subr.bf16.mxu0 0
      %1189 = vmatpush1.bf16.msra.mxu0 %v1175
      %1190 = vmatprep.subr.bf16.mxu0 0
      %1191 = vmatpush1.bf16.msra.mxu0 %v1176
      %1192 = vmatprep.subr.bf16.mxu0 0
      %1193 = vmatpush1.bf16.msra.mxu0 %v1177
      %1194 = vmatprep.subr.bf16.mxu0 0
      %1195 = vmatpush1.bf16.msra.mxu0 0
      %1196 = vmatprep.subr.bf16.mxu0 0
      %1197 = vmatpush1.bf16.msra.mxu0 0
      %1198 = vmatprep.subr.bf16.mxu0 0
      %1199 = vmatpush1.bf16.msra.mxu0 0
      %1200 = vmatprep.subr.bf16.mxu0 0
      %1201 = vmatpush1.bf16.msra.mxu0 0
      %1202 = vmatprep.subr.bf16.mxu0 0
      %1203 = vmatpush1.bf16.msra.mxu0 0
      %1204 = vmatprep.subr.bf16.mxu0 0
      %1205 = vmatpush1.bf16.msra.mxu0 0
      %1206 = vmatprep.subr.bf16.mxu0 0
      %1207 = vmatpush1.bf16.msra.mxu0 0
      %1208 = vmatprep.subr.bf16.mxu0 0
      %1209 = vmatpush1.bf16.msra.mxu0 0
      %1210 = vmatprep.subr.bf16.mxu0 0
      %1211 = vmatpush1.bf16.msra.mxu0 0
      %1212 = vmatprep.subr.bf16.mxu0 0
      %1213 = vmatpush1.bf16.msra.mxu0 0
      %1214 = vmatprep.subr.bf16.mxu0 0
      %1215 = vmatpush1.bf16.msra.mxu0 0
      %1216 = vmatprep.subr.bf16.mxu0 0
      %1217 = vmatpush1.bf16.msra.mxu0 0
      %1218 = vmatprep.mubr.bf16.mxu0 0
      %1219 = vmatmul.mubr.bf16.gmra.mrb[0].mxu0 %v1184
      %v1220 = vpop.f32.mrb[0].mxu0
      %v1221 = vadd.f32 %v1156, %v1220
      %v1222 = vpop.f32.mrb[0].mxu0
      %v1223 = vpop.f32.mrb[0].mxu0
      %v1224 = vpop.f32.mrb[0].mxu0
      %1225 = vdwg.mxu0
      %v1226 = vadd.f32 %v1073, %v1221
      %v1227 = vld [vmem:[%s11] sm:$0x1]
      %v1228 = vld [vmem:[%s12] sm:$0x1]
      %v1229 = vsel %vm462, %v1226, 0.0
      %1230 = vadd.xlane.f32.xlu0 %v1229
      %v1231 = vpop.xlane.xlu0 %1230
      %v1232 = vmul.f32 %v1231, %v1042
      %v1233 = vsub.f32 %v1226, %v1232
      %v1234 = vmul.f32 %v1233, %v1233
      %v1235 = vsel %vm462, %v1234, 0.0
      %1236 = vadd.xlane.f32.xlu0 %v1235
      %v1237 = vpop.xlane.xlu0 %1236
      %v1238 = vmul.f32 %v1237, 0.032258064
      %v1239 = vrsqrt.pop %v1238
      %v1240 = vmul.f32 %v1238, %v1239
      %vm1241 = vcmp.eq.f32.partialorder %v1238, inf
      %v1242 = vsel %vm1241, %v1238, %v1240
      %vm1243 = vcmp.eq.f32.partialorder %v1238, 0.0
      %v1244 = vand.u32 %v1238, 2147483648
      %v1245 = vsel %vm1243, %v1244, %v1242
      %v1247 = vlaneseq
      %v1248 = vshrl.u32 %v1247, 7
      %v1249 = vsub.s32 0, %v1248
      %v1250 = vrot.slane %v1227, %v1249
      %v1252 = vmul.f32 %v1250, %v1233
      %v1253 = vadd.f32 %v1245, 1e-06
      %v1254 = vrcp.pop %v1253
      %v1255 = vmul.f32 %v1252, %v1254
      %v1257 = vlaneseq
      %v1258 = vshrl.u32 %v1257, 7
      %v1259 = vsub.s32 0, %v1258
      %v1260 = vrot.slane %v1228, %v1259
      %v1262 = vadd.f32 %v1255, %v1260
      %1263 = vst.msk [vmem:[%s435] sm:$0xff] %vm462, %v1262
      %p1264 = scmp.lt.s32.totalorder %s24, 1
      %s1265 = scalar_select %p1264, %s24, 1
      %s1266 = smul.addr %s1265, 8
      %s1267 = scalar_lea.vmem %s13, %s1266
      // Predicated region
      $region73: #{transformer_forward.4} parent=71 // pred_check
        %p1268 = pneg %p320
      $region74: #{transformer_forward.4} parent=71 // pred_check_branch
        %1270 = sbr.rel (%p1268) target = $region76
      $region75: #{transformer_forward.4} parent=71 // pred_region
        _
      $region76: #{transformer_forward.4} parent=71 // pred_fallthru
        _
    $region72: #{transformer_forward.4} parent=5 // pred_fallthru
      _
    %p1271 = scmp.le.s32.totalorder 2, %s19
    // Predicated region
    $region77: #{transformer_forward.4} parent=5 // pred_check
      %p1272 = pneg %p1271
    $region78: #{transformer_forward.4} parent=5 // pred_check_branch
      %1274 = sbr.rel (%p1272) target = $region80
    $region79: #{transformer_forward.4} parent=5 // pred_region
      %s1275 = ssub.s32 %s19, 2
      // Predicated region
      $region81: #{transformer_forward.4} parent=79 // pred_check
        %p1276 = pneg %p326
      $region82: #{transformer_forward.4} parent=79 // pred_check_branch
        %1278 = sbr.rel (%p1276) target = $region84
      $region83: #{transformer_forward.4} parent=79 // pred_region
        %p1279 = scmp.lt.s32.totalorder %s25, 1
        %s1280 = scalar_select %p1279, %s25, 1
        %s1281 = smul.addr %s1280, 8
        %s1282 = scalar_lea.vmem %s13, %s1281
      $region84: #{transformer_forward.4} parent=79 // pred_fallthru
        _
    $region80: #{transformer_forward.4} parent=5 // pred_fallthru
      _
  $region6: #{transformer_forward.4} parent=0 // loop_footer
    %s23 = sadd.s32 1, %s19
  $region7: #{transformer_forward.4} parent=0 // loop_footer_branch
    %18 = sbr.rel target = $region3
  $region8: #{transformer_forward.4} parent=0 // loop_exit
    _

// kernel: transformer_forward.6
$region0: #{transformer_forward.6}
  #allocation0 [shape = 'u32[]', space=smem, size = 0x4, offset = 0x4, fixed_abs, tag = 'smem constant byte address 0x4 - core index']
  #allocation1 [shape = 'u32[144,128]{1,0:T(1,128)}', space=vmem, size = 0x12000, scoped, tag = 'internal scratch']
  %s0 = inlined_call_operand.vmem [shape: f32[2,8,32], index: 0, kind: input, shape index: {}]
  %s1 = inlined_call_operand.vmem [shape: f32[2,8,32], index: 1, kind: input, shape index: {}]
  %s2 = inlined_call_operand.vmem [shape: bf16[32,32], index: 2, kind: input, shape index: {}]
  %s3 = inlined_call_operand.vmem [shape: f32[1,32], index: 3, kind: input, shape index: {}]
  %s4 = inlined_call_operand.vmem [shape: bf16[32,64], index: 4, kind: input, shape index: {}]
  %s5 = inlined_call_operand.vmem [shape: f32[1,64], index: 5, kind: input, shape index: {}]
  %s6 = inlined_call_operand.vmem [shape: bf16[32,32], index: 6, kind: input, shape index: {}]
  %s7 = inlined_call_operand.vmem [shape: f32[1,32], index: 7, kind: input, shape index: {}]
  %s8 = inlined_call_operand.vmem [shape: f32[1,32], index: 8, kind: input, shape index: {}]
  %s9 = inlined_call_operand.vmem [shape: f32[1,32], index: 9, kind: input, shape index: {}]
  %s10 = inlined_call_operand.vmem [shape: f32[1,32], index: 10, kind: input, shape index: {}]
  %s11 = inlined_call_operand.vmem [shape: f32[1,32], index: 11, kind: input, shape index: {}]
  %s12 = inlined_call_operand.vmem [shape: bf16[32,64], index: 12, kind: input, shape index: {}]
  %s13 = inlined_call_operand.vmem [shape: f32[1,64], index: 13, kind: input, shape index: {}]
  %s14 = inlined_call_operand.vmem [shape: bf16[64,32], index: 14, kind: input, shape index: {}]
  %s15 = inlined_call_operand.vmem [shape: f32[1,32], index: 15, kind: input, shape index: {}]
  %s16 = inlined_call_operand.vmem [shape: f32[1,32], index: 16, kind: input, shape index: {}]
  %s17 = inlined_call_operand.vmem [shape: f32[1,32], index: 17, kind: input, shape index: {}]
  %s18 = inlined_call_operand.vmem [shape: f32[2,8,32], index: 18, kind: output, shape index: {}]
  %s19 = sld [smem:[#allocation0]]
  $region105: #{transformer_forward.6} parent=0
    _
  %s21 = ssub.s32 1, %s19
  %s22 = scalar_select 0, %s21, %s19
  loop: start=0, step=1, limit=4
  $region2: #{transformer_forward.6} parent=0 // loop_pre_header
    _
  $region3: #{transformer_forward.6} parent=0 // loop_header
    %s24 = sphi 0, %s28
    %p25 = scmp.ge.s32.totalorder %s24, 4
    %s34 = sphi 0, %s36
    %s37 = sphi 0, %s34
    %s38 = sphi 0, %s37
    %s54 = sphi 0, %s38
    %s60 = sphi 0, %s62
    %s63 = sphi 0, %s60
    %s64 = sphi 0, %s63
    %s80 = sphi 0, %s64
    %s84 = sphi 0, %s84
    %s86 = sphi 0, %s84
    %s87 = sphi 0, %s86
    %s101 = sphi 0, %s87
    %s105 = sphi 0, %s105
    %s107 = sphi 0, %s105
    %s108 = sphi 0, %s107
    %s122 = sphi 0, %s108
    %s126 = sphi 0, %s126
    %s128 = sphi 0, %s126
    %s129 = sphi 0, %s128
    %s143 = sphi 0, %s129
    %s147 = sphi 0, %s147
    %s149 = sphi 0, %s147
    %s150 = sphi 0, %s149
    %s164 = sphi 0, %s150
    %s168 = sphi 0, %s168
    %s170 = sphi 0, %s168
    %s171 = sphi 0, %s170
    %s185 = sphi 0, %s171
    %s189 = sphi 0, %s189
    %s191 = sphi 0, %s189
    %s192 = sphi 0, %s191
    %s206 = sphi 0, %s192
    %s210 = sphi 0, %s210
    %s212 = sphi 0, %s210
    %s213 = sphi 0, %s212
    %s227 = sphi 0, %s213
    %s231 = sphi 0, %s231
    %s233 = sphi 0, %s231
    %s234 = sphi 0, %s233
    %s248 = sphi 0, %s234
    %s252 = sphi 0, %s252
    %s254 = sphi 0, %s252
    %s255 = sphi 0, %s254
    %s269 = sphi 0, %s255
    %s273 = sphi 0, %s273
    %s275 = sphi 0, %s273
    %s276 = sphi 0, %s275
    %s290 = sphi 0, %s276
    %s294 = sphi 0, %s294
    %s296 = sphi 0, %s294
    %s297 = sphi 0, %s296
    %s311 = sphi 0, %s297
    %s315 = sphi 0, %s315
    %s317 = sphi 0, %s315
    %s318 = sphi 0, %s317
    %s332 = sphi 0, %s318
    %s336 = sphi 0, %s336
    %s338 = sphi 0, %s336
    %s339 = sphi 0, %s338
    %s353 = sphi 0, %s339
    %s357 = sphi 0, %s357
    %s359 = sphi 0, %s357
    %s360 = sphi 0, %s359
    %s374 = sphi 0, %s360
    %s378 = sphi 0, %s378
    %s380 = sphi 0, %s378
    %s381 = sphi 0, %s380
    %s395 = sphi 0, %s381
    %s399 = sphi 0, %s399
    %s401 = sphi 0, %s399
    %s402 = sphi 0, %s401
    %s416 = sphi 0, %s402
    %s422 = sphi 0, %s424
    %s425 = sphi 0, %s422
    %s426 = sphi 0, %s425
    %s442 = sphi 0, %s426
  $region4: #{transformer_forward.6} parent=0 // loop_header_branch
    %27 = sbr.rel (%p25) target = $region8
  $region5: #{transformer_forward.6} parent=0 // loop_body
    %s29 = ssub.s32 %s24, 1
    %s30 = ssub.s32 %s24, 2
    %s31 = sadd.s32 %s24, 1
    %s32 = ssub.s32 %s24, %s31
    %p33 = scmp.eq.s32.totalorder %s32, 0
    %s35 = sadd.s32 %s34, 1
    %s36 = scalar_select %p33, %s34, %s35
    %p39 = pneg %p33
    %p40 = scmp.eq.s32.totalorder %s24, 1
    %p41 = por %p39, %p40
    %p42 = scmp.ne.s32.totalorder %s34, %s37
    %p43 = scmp.eq.s32.totalorder %s24, 0
    %p44 = por %p42, %p43
    %p45 = scmp.ne.s32.totalorder %s34, %s37
    %p46 = scmp.eq.s32.totalorder %s29, 1
    %p47 = por %p45, %p46
    %p48 = scmp.ne.s32.totalorder %s37, %s38
    %p49 = scmp.eq.s32.totalorder %s29, 0
    %p50 = por %p48, %p49
    %p51 = scmp.ne.s32.totalorder %s37, %s38
    %p52 = scmp.eq.s32.totalorder %s30, 1
    %p53 = por %p51, %p52
    %p55 = scmp.ne.s32.totalorder %s38, %s54
    %p56 = scmp.eq.s32.totalorder %s30, 0
    %p57 = por %p55, %p56
    %s58 = ssub.s32 %s24, %s31
    %p59 = scmp.eq.s32.totalorder %s58, 0
    %s61 = sadd.s32 %s60, 1
    %s62 = scalar_select %p59, %s60, %s61
    %p65 = pneg %p59
    %p66 = scmp.eq.s32.totalorder %s24, 1
    %p67 = por %p65, %p66
    %p68 = scmp.ne.s32.totalorder %s60, %s63
    %p69 = scmp.eq.s32.totalorder %s24, 0
    %p70 = por %p68, %p69
    %p71 = scmp.ne.s32.totalorder %s60, %s63
    %p72 = scmp.eq.s32.totalorder %s29, 1
    %p73 = por %p71, %p72
    %p74 = scmp.ne.s32.totalorder %s63, %s64
    %p75 = scmp.eq.s32.totalorder %s29, 0
    %p76 = por %p74, %p75
    %p77 = scmp.ne.s32.totalorder %s63, %s64
    %p78 = scmp.eq.s32.totalorder %s30, 1
    %p79 = por %p77, %p78
    %p81 = scmp.ne.s32.totalorder %s64, %s80
    %p82 = scmp.eq.s32.totalorder %s30, 0
    %p83 = por %p81, %p82
    %s85 = sadd.s32 %s84, 1
    %p88 = scmp.eq.s32.totalorder %s24, 1
    %p89 = scmp.ne.s32.totalorder %s84, %s86
    %p90 = scmp.eq.s32.totalorder %s24, 0
    %p91 = por %p89, %p90
    %p92 = scmp.ne.s32.totalorder %s84, %s86
    %p93 = scmp.eq.s32.totalorder %s29, 1
    %p94 = por %p92, %p93
    %p95 = scmp.ne.s32.totalorder %s86, %s87
    %p96 = scmp.eq.s32.totalorder %s29, 0
    %p97 = por %p95, %p96
    %p98 = scmp.ne.s32.totalorder %s86, %s87
    %p99 = scmp.eq.s32.totalorder %s30, 1
    %p100 = por %p98, %p99
    %p102 = scmp.ne.s32.totalorder %s87, %s101
    %p103 = scmp.eq.s32.totalorder %s30, 0
    %p104 = por %p102, %p103
    %s106 = sadd.s32 %s105, 1
    %p109 = scmp.eq.s32.totalorder %s24, 1
    %p110 = scmp.ne.s32.totalorder %s105, %s107
    %p111 = scmp.eq.s32.totalorder %s24, 0
    %p112 = por %p110, %p111
    %p113 = scmp.ne.s32.totalorder %s105, %s107
    %p114 = scmp.eq.s32.totalorder %s29, 1
    %p115 = por %p113, %p114
    %p116 = scmp.ne.s32.totalorder %s107, %s108
    %p117 = scmp.eq.s32.totalorder %s29, 0
    %p118 = por %p116, %p117
    %p119 = scmp.ne.s32.totalorder %s107, %s108
    %p120 = scmp.eq.s32.totalorder %s30, 1
    %p121 = por %p119, %p120
    %p123 = scmp.ne.s32.totalorder %s108, %s122
    %p124 = scmp.eq.s32.totalorder %s30, 0
    %p125 = por %p123, %p124
    %s127 = sadd.s32 %s126, 1
    %p130 = scmp.eq.s32.totalorder %s24, 1
    %p131 = scmp.ne.s32.totalorder %s126, %s128
    %p132 = scmp.eq.s32.totalorder %s24, 0
    %p133 = por %p131, %p132
    %p134 = scmp.ne.s32.totalorder %s126, %s128
    %p135 = scmp.eq.s32.totalorder %s29, 1
    %p136 = por %p134, %p135
    %p137 = scmp.ne.s32.totalorder %s128, %s129
    %p138 = scmp.eq.s32.totalorder %s29, 0
    %p139 = por %p137, %p138
    %p140 = scmp.ne.s32.totalorder %s128, %s129
    %p141 = scmp.eq.s32.totalorder %s30, 1
    %p142 = por %p140, %p141
    %p144 = scmp.ne.s32.totalorder %s129, %s143
    %p145 = scmp.eq.s32.totalorder %s30, 0
    %p146 = por %p144, %p145
    %s148 = sadd.s32 %s147, 1
    %p151 = scmp.eq.s32.totalorder %s24, 1
    %p152 = scmp.ne.s32.totalorder %s147, %s149
    %p153 = scmp.eq.s32.totalorder %s24, 0
    %p154 = por %p152, %p153
    %p155 = scmp.ne.s32.totalorder %s147, %s149
    %p156 = scmp.eq.s32.totalorder %s29, 1
    %p157 = por %p155, %p156
    %p158 = scmp.ne.s32.totalorder %s149, %s150
    %p159 = scmp.eq.s32.totalorder %s29, 0
    %p160 = por %p158, %p159
    %p161 = scmp.ne.s32.totalorder %s149, %s150
    %p162 = scmp.eq.s32.totalorder %s30, 1
    %p163 = por %p161, %p162
    %p165 = scmp.ne.s32.totalorder %s150, %s164
    %p166 = scmp.eq.s32.totalorder %s30, 0
    %p167 = por %p165, %p166
    %s169 = sadd.s32 %s168, 1
    %p172 = scmp.eq.s32.totalorder %s24, 1
    %p173 = scmp.ne.s32.totalorder %s168, %s170
    %p174 = scmp.eq.s32.totalorder %s24, 0
    %p175 = por %p173, %p174
    %p176 = scmp.ne.s32.totalorder %s168, %s170
    %p177 = scmp.eq.s32.totalorder %s29, 1
    %p178 = por %p176, %p177
    %p179 = scmp.ne.s32.totalorder %s170, %s171
    %p180 = scmp.eq.s32.totalorder %s29, 0
    %p181 = por %p179, %p180
    %p182 = scmp.ne.s32.totalorder %s170, %s171
    %p183 = scmp.eq.s32.totalorder %s30, 1
    %p184 = por %p182, %p183
    %p186 = scmp.ne.s32.totalorder %s171, %s185
    %p187 = scmp.eq.s32.totalorder %s30, 0
    %p188 = por %p186, %p187
    %s190 = sadd.s32 %s189, 1
    %p193 = scmp.eq.s32.totalorder %s24, 1
    %p194 = scmp.ne.s32.totalorder %s189, %s191
    %p195 = scmp.eq.s32.totalorder %s24, 0
    %p196 = por %p194, %p195
    %p197 = scmp.ne.s32.totalorder %s189, %s191
    %p198 = scmp.eq.s32.totalorder %s29, 1
    %p199 = por %p197, %p198
    %p200 = scmp.ne.s32.totalorder %s191, %s192
    %p201 = scmp.eq.s32.totalorder %s29, 0
    %p202 = por %p200, %p201
    %p203 = scmp.ne.s32.totalorder %s191, %s192
    %p204 = scmp.eq.s32.totalorder %s30, 1
    %p205 = por %p203, %p204
    %p207 = scmp.ne.s32.totalorder %s192, %s206
    %p208 = scmp.eq.s32.totalorder %s30, 0
    %p209 = por %p207, %p208
    %s211 = sadd.s32 %s210, 1
    %p214 = scmp.eq.s32.totalorder %s24, 1
    %p215 = scmp.ne.s32.totalorder %s210, %s212
    %p216 = scmp.eq.s32.totalorder %s24, 0
    %p217 = por %p215, %p216
    %p218 = scmp.ne.s32.totalorder %s210, %s212
    %p219 = scmp.eq.s32.totalorder %s29, 1
    %p220 = por %p218, %p219
    %p221 = scmp.ne.s32.totalorder %s212, %s213
    %p222 = scmp.eq.s32.totalorder %s29, 0
    %p223 = por %p221, %p222
    %p224 = scmp.ne.s32.totalorder %s212, %s213
    %p225 = scmp.eq.s32.totalorder %s30, 1
    %p226 = por %p224, %p225
    %p228 = scmp.ne.s32.totalorder %s213, %s227
    %p229 = scmp.eq.s32.totalorder %s30, 0
    %p230 = por %p228, %p229
    %s232 = sadd.s32 %s231, 1
    %p235 = scmp.eq.s32.totalorder %s24, 1
    %p236 = scmp.ne.s32.totalorder %s231, %s233
    %p237 = scmp.eq.s32.totalorder %s24, 0
    %p238 = por %p236, %p237
    %p239 = scmp.ne.s32.totalorder %s231, %s233
    %p240 = scmp.eq.s32.totalorder %s29, 1
    %p241 = por %p239, %p240
    %p242 = scmp.ne.s32.totalorder %s233, %s234
    %p243 = scmp.eq.s32.totalorder %s29, 0
    %p244 = por %p242, %p243
    %p245 = scmp.ne.s32.totalorder %s233, %s234
    %p246 = scmp.eq.s32.totalorder %s30, 1
    %p247 = por %p245, %p246
    %p249 = scmp.ne.s32.totalorder %s234, %s248
    %p250 = scmp.eq.s32.totalorder %s30, 0
    %p251 = por %p249, %p250
    %s253 = sadd.s32 %s252, 1
    %p256 = scmp.eq.s32.totalorder %s24, 1
    %p257 = scmp.ne.s32.totalorder %s252, %s254
    %p258 = scmp.eq.s32.totalorder %s24, 0
    %p259 = por %p257, %p258
    %p260 = scmp.ne.s32.totalorder %s252, %s254
    %p261 = scmp.eq.s32.totalorder %s29, 1
    %p262 = por %p260, %p261
    %p263 = scmp.ne.s32.totalorder %s254, %s255
    %p264 = scmp.eq.s32.totalorder %s29, 0
    %p265 = por %p263, %p264
    %p266 = scmp.ne.s32.totalorder %s254, %s255
    %p267 = scmp.eq.s32.totalorder %s30, 1
    %p268 = por %p266, %p267
    %p270 = scmp.ne.s32.totalorder %s255, %s269
    %p271 = scmp.eq.s32.totalorder %s30, 0
    %p272 = por %p270, %p271
    %s274 = sadd.s32 %s273, 1
    %p277 = scmp.eq.s32.totalorder %s24, 1
    %p278 = scmp.ne.s32.totalorder %s273, %s275
    %p279 = scmp.eq.s32.totalorder %s24, 0
    %p280 = por %p278, %p279
    %p281 = scmp.ne.s32.totalorder %s273, %s275
    %p282 = scmp.eq.s32.totalorder %s29, 1
    %p283 = por %p281, %p282
    %p284 = scmp.ne.s32.totalorder %s275, %s276
    %p285 = scmp.eq.s32.totalorder %s29, 0
    %p286 = por %p284, %p285
    %p287 = scmp.ne.s32.totalorder %s275, %s276
    %p288 = scmp.eq.s32.totalorder %s30, 1
    %p289 = por %p287, %p288
    %p291 = scmp.ne.s32.totalorder %s276, %s290
    %p292 = scmp.eq.s32.totalorder %s30, 0
    %p293 = por %p291, %p292
    %s295 = sadd.s32 %s294, 1
    %p298 = scmp.eq.s32.totalorder %s24, 1
    %p299 = scmp.ne.s32.totalorder %s294, %s296
    %p300 = scmp.eq.s32.totalorder %s24, 0
    %p301 = por %p299, %p300
    %p302 = scmp.ne.s32.totalorder %s294, %s296
    %p303 = scmp.eq.s32.totalorder %s29, 1
    %p304 = por %p302, %p303
    %p305 = scmp.ne.s32.totalorder %s296, %s297
    %p306 = scmp.eq.s32.totalorder %s29, 0
    %p307 = por %p305, %p306
    %p308 = scmp.ne.s32.totalorder %s296, %s297
    %p309 = scmp.eq.s32.totalorder %s30, 1
    %p310 = por %p308, %p309
    %p312 = scmp.ne.s32.totalorder %s297, %s311
    %p313 = scmp.eq.s32.totalorder %s30, 0
    %p314 = por %p312, %p313
    %s316 = sadd.s32 %s315, 1
    %p319 = scmp.eq.s32.totalorder %s24, 1
    %p320 = scmp.ne.s32.totalorder %s315, %s317
    %p321 = scmp.eq.s32.totalorder %s24, 0
    %p322 = por %p320, %p321
    %p323 = scmp.ne.s32.totalorder %s315, %s317
    %p324 = scmp.eq.s32.totalorder %s29, 1
    %p325 = por %p323, %p324
    %p326 = scmp.ne.s32.totalorder %s317, %s318
    %p327 = scmp.eq.s32.totalorder %s29, 0
    %p328 = por %p326, %p327
    %p329 = scmp.ne.s32.totalorder %s317, %s318
    %p330 = scmp.eq.s32.totalorder %s30, 1
    %p331 = por %p329, %p330
    %p333 = scmp.ne.s32.totalorder %s318, %s332
    %p334 = scmp.eq.s32.totalorder %s30, 0
    %p335 = por %p333, %p334
    %s337 = sadd.s32 %s336, 1
    %p340 = scmp.eq.s32.totalorder %s24, 1
    %p341 = scmp.ne.s32.totalorder %s336, %s338
    %p342 = scmp.eq.s32.totalorder %s24, 0
    %p343 = por %p341, %p342
    %p344 = scmp.ne.s32.totalorder %s336, %s338
    %p345 = scmp.eq.s32.totalorder %s29, 1
    %p346 = por %p344, %p345
    %p347 = scmp.ne.s32.totalorder %s338, %s339
    %p348 = scmp.eq.s32.totalorder %s29, 0
    %p349 = por %p347, %p348
    %p350 = scmp.ne.s32.totalorder %s338, %s339
    %p351 = scmp.eq.s32.totalorder %s30, 1
    %p352 = por %p350, %p351
    %p354 = scmp.ne.s32.totalorder %s339, %s353
    %p355 = scmp.eq.s32.totalorder %s30, 0
    %p356 = por %p354, %p355
    %s358 = sadd.s32 %s357, 1
    %p361 = scmp.eq.s32.totalorder %s24, 1
    %p362 = scmp.ne.s32.totalorder %s357, %s359
    %p363 = scmp.eq.s32.totalorder %s24, 0
    %p364 = por %p362, %p363
    %p365 = scmp.ne.s32.totalorder %s357, %s359
    %p366 = scmp.eq.s32.totalorder %s29, 1
    %p367 = por %p365, %p366
    %p368 = scmp.ne.s32.totalorder %s359, %s360
    %p369 = scmp.eq.s32.totalorder %s29, 0
    %p370 = por %p368, %p369
    %p371 = scmp.ne.s32.totalorder %s359, %s360
    %p372 = scmp.eq.s32.totalorder %s30, 1
    %p373 = por %p371, %p372
    %p375 = scmp.ne.s32.totalorder %s360, %s374
    %p376 = scmp.eq.s32.totalorder %s30, 0
    %p377 = por %p375, %p376
    %s379 = sadd.s32 %s378, 1
    %p382 = scmp.eq.s32.totalorder %s24, 1
    %p383 = scmp.ne.s32.totalorder %s378, %s380
    %p384 = scmp.eq.s32.totalorder %s24, 0
    %p385 = por %p383, %p384
    %p386 = scmp.ne.s32.totalorder %s378, %s380
    %p387 = scmp.eq.s32.totalorder %s29, 1
    %p388 = por %p386, %p387
    %p389 = scmp.ne.s32.totalorder %s380, %s381
    %p390 = scmp.eq.s32.totalorder %s29, 0
    %p391 = por %p389, %p390
    %p392 = scmp.ne.s32.totalorder %s380, %s381
    %p393 = scmp.eq.s32.totalorder %s30, 1
    %p394 = por %p392, %p393
    %p396 = scmp.ne.s32.totalorder %s381, %s395
    %p397 = scmp.eq.s32.totalorder %s30, 0
    %p398 = por %p396, %p397
    %s400 = sadd.s32 %s399, 1
    %p403 = scmp.eq.s32.totalorder %s24, 1
    %p404 = scmp.ne.s32.totalorder %s399, %s401
    %p405 = scmp.eq.s32.totalorder %s24, 0
    %p406 = por %p404, %p405
    %p407 = scmp.ne.s32.totalorder %s399, %s401
    %p408 = scmp.eq.s32.totalorder %s29, 1
    %p409 = por %p407, %p408
    %p410 = scmp.ne.s32.totalorder %s401, %s402
    %p411 = scmp.eq.s32.totalorder %s29, 0
    %p412 = por %p410, %p411
    %p413 = scmp.ne.s32.totalorder %s401, %s402
    %p414 = scmp.eq.s32.totalorder %s30, 1
    %p415 = por %p413, %p414
    %p417 = scmp.ne.s32.totalorder %s402, %s416
    %p418 = scmp.eq.s32.totalorder %s30, 0
    %p419 = por %p417, %p418
    %s420 = ssub.s32 %s24, %s31
    %p421 = scmp.eq.s32.totalorder %s420, 0
    %s423 = sadd.s32 %s422, 1
    %s424 = scalar_select %p421, %s422, %s423
    %p427 = pneg %p421
    %p428 = scmp.eq.s32.totalorder %s24, 1
    %p429 = por %p427, %p428
    %p430 = scmp.ne.s32.totalorder %s422, %s425
    %p431 = scmp.eq.s32.totalorder %s24, 0
    %p432 = por %p430, %p431
    %p433 = scmp.ne.s32.totalorder %s422, %s425
    %p434 = scmp.eq.s32.totalorder %s29, 1
    %p435 = por %p433, %p434
    %p436 = scmp.ne.s32.totalorder %s425, %s426
    %p437 = scmp.eq.s32.totalorder %s29, 0
    %p438 = por %p436, %p437
    %p439 = scmp.ne.s32.totalorder %s425, %s426
    %p440 = scmp.eq.s32.totalorder %s30, 1
    %p441 = por %p439, %p440
    %p443 = scmp.ne.s32.totalorder %s426, %s442
    %p444 = scmp.eq.s32.totalorder %s30, 0
    %p445 = por %p443, %p444
    %p446 = scmp.le.s32.totalorder 1, %s24
    %p447 = scmp.lt.s32.totalorder %s24, 3
    %p448 = pnand %p446, %p447
    %p449 = pneg %p448
    // Predicated region
    $region9: #{transformer_forward.6} parent=5 // pred_check
      _
    $region10: #{transformer_forward.6} parent=5 // pred_check_branch
      %451 = sbr.rel (%p448) target = $region12
    $region11: #{transformer_forward.6} parent=5 // pred_region
      %s452 = ssub.s32 %s24, 1
      // Predicated region
      $region13: #{transformer_forward.6} parent=11 // pred_check
        %p453 = pneg %p97
      $region14: #{transformer_forward.6} parent=11 // pred_check_branch
        %455 = sbr.rel (%p453) target = $region16
      $region15: #{transformer_forward.6} parent=11 // pred_region
        _
      $region16: #{transformer_forward.6} parent=11 // pred_fallthru
        _
      // Predicated region
      $region17: #{transformer_forward.6} parent=11 // pred_check
        %p456 = pneg %p118
      $region18: #{transformer_forward.6} parent=11 // pred_check_branch
        %458 = sbr.rel (%p456) target = $region20
      $region19: #{transformer_forward.6} parent=11 // pred_region
        _
      $region20: #{transformer_forward.6} parent=11 // pred_fallthru
        _
      // Predicated region
      $region21: #{transformer_forward.6} parent=11 // pred_check
        %p459 = pneg %p139
      $region22: #{transformer_forward.6} parent=11 // pred_check_branch
        %461 = sbr.rel (%p459) target = $region24
      $region23: #{transformer_forward.6} parent=11 // pred_region
        _
      $region24: #{transformer_forward.6} parent=11 // pred_fallthru
        _
      // Predicated region
      $region25: #{transformer_forward.6} parent=11 // pred_check
        %p462 = pneg %p160
      $region26: #{transformer_forward.6} parent=11 // pred_check_branch
        %464 = sbr.rel (%p462) target = $region28
      $region27: #{transformer_forward.6} parent=11 // pred_region
        _
      $region28: #{transformer_forward.6} parent=11 // pred_fallthru
        _
      // Predicated region
      $region29: #{transformer_forward.6} parent=11 // pred_check
        %p465 = pneg %p181
      $region30: #{transformer_forward.6} parent=11 // pred_check_branch
        %467 = sbr.rel (%p465) target = $region32
      $region31: #{transformer_forward.6} parent=11 // pred_region
        _
      $region32: #{transformer_forward.6} parent=11 // pred_fallthru
        _
      // Predicated region
      $region33: #{transformer_forward.6} parent=11 // pred_check
        %p468 = pneg %p202
      $region34: #{transformer_forward.6} parent=11 // pred_check_branch
        %470 = sbr.rel (%p468) target = $region36
      $region35: #{transformer_forward.6} parent=11 // pred_region
        _
      $region36: #{transformer_forward.6} parent=11 // pred_fallthru
        _
      // Predicated region
      $region37: #{transformer_forward.6} parent=11 // pred_check
        %p471 = pneg %p223
      $region38: #{transformer_forward.6} parent=11 // pred_check_branch
        %473 = sbr.rel (%p471) target = $region40
      $region39: #{transformer_forward.6} parent=11 // pred_region
        _
      $region40: #{transformer_forward.6} parent=11 // pred_fallthru
        _
      // Predicated region
      $region41: #{transformer_forward.6} parent=11 // pred_check
        %p474 = pneg %p244
      $region42: #{transformer_forward.6} parent=11 // pred_check_branch
        %476 = sbr.rel (%p474) target = $region44
      $region43: #{transformer_forward.6} parent=11 // pred_region
        _
      $region44: #{transformer_forward.6} parent=11 // pred_fallthru
        _
      // Predicated region
      $region45: #{transformer_forward.6} parent=11 // pred_check
        %p477 = pneg %p265
      $region46: #{transformer_forward.6} parent=11 // pred_check_branch
        %479 = sbr.rel (%p477) target = $region48
      $region47: #{transformer_forward.6} parent=11 // pred_region
        _
      $region48: #{transformer_forward.6} parent=11 // pred_fallthru
        _
      // Predicated region
      $region49: #{transformer_forward.6} parent=11 // pred_check
        %p480 = pneg %p286
      $region50: #{transformer_forward.6} parent=11 // pred_check_branch
        %482 = sbr.rel (%p480) target = $region52
      $region51: #{transformer_forward.6} parent=11 // pred_region
        _
      $region52: #{transformer_forward.6} parent=11 // pred_fallthru
        _
      // Predicated region
      $region53: #{transformer_forward.6} parent=11 // pred_check
        %p483 = pneg %p307
      $region54: #{transformer_forward.6} parent=11 // pred_check_branch
        %485 = sbr.rel (%p483) target = $region56
      $region55: #{transformer_forward.6} parent=11 // pred_region
        _
      $region56: #{transformer_forward.6} parent=11 // pred_fallthru
        _
      // Predicated region
      $region57: #{transformer_forward.6} parent=11 // pred_check
        %p486 = pneg %p328
      $region58: #{transformer_forward.6} parent=11 // pred_check_branch
        %488 = sbr.rel (%p486) target = $region60
      $region59: #{transformer_forward.6} parent=11 // pred_region
        _
      $region60: #{transformer_forward.6} parent=11 // pred_fallthru
        _
      // Predicated region
      $region61: #{transformer_forward.6} parent=11 // pred_check
        %p489 = pneg %p349
      $region62: #{transformer_forward.6} parent=11 // pred_check_branch
        %491 = sbr.rel (%p489) target = $region64
      $region63: #{transformer_forward.6} parent=11 // pred_region
        _
      $region64: #{transformer_forward.6} parent=11 // pred_fallthru
        _
      // Predicated region
      $region65: #{transformer_forward.6} parent=11 // pred_check
        %p492 = pneg %p370
      $region66: #{transformer_forward.6} parent=11 // pred_check_branch
        %494 = sbr.rel (%p492) target = $region68
      $region67: #{transformer_forward.6} parent=11 // pred_region
        _
      $region68: #{transformer_forward.6} parent=11 // pred_fallthru
        _
      // Predicated region
      $region69: #{transformer_forward.6} parent=11 // pred_check
        %p495 = pneg %p391
      $region70: #{transformer_forward.6} parent=11 // pred_check_branch
        %497 = sbr.rel (%p495) target = $region72
      $region71: #{transformer_forward.6} parent=11 // pred_region
        _
      $region72: #{transformer_forward.6} parent=11 // pred_fallthru
        _
      // Predicated region
      $region73: #{transformer_forward.6} parent=11 // pred_check
        %p498 = pneg %p412
      $region74: #{transformer_forward.6} parent=11 // pred_check_branch
        %500 = sbr.rel (%p498) target = $region76
      $region75: #{transformer_forward.6} parent=11 // pred_region
        _
      $region76: #{transformer_forward.6} parent=11 // pred_fallthru
        _
    $region12: #{transformer_forward.6} parent=5 // pred_fallthru
      _
    %p501 = scmp.lt.s32.totalorder %s24, 2
    // Predicated region
    $region77: #{transformer_forward.6} parent=5 // pred_check
      %p502 = pneg %p501
    $region78: #{transformer_forward.6} parent=5 // pred_check_branch
      %504 = sbr.rel (%p502) target = $region80
    $region79: #{transformer_forward.6} parent=5 // pred_region
      // Predicated region
      $region81: #{transformer_forward.6} parent=79 // pred_check
        %p505 = pneg %p44
      $region82: #{transformer_forward.6} parent=79 // pred_check_branch
        %507 = sbr.rel (%p505) target = $region84
      $region83: #{transformer_forward.6} parent=79 // pred_region
        %p508 = scmp.lt.s32.totalorder %s24, 1
        %s509 = scalar_select %p508, %s24, 1
        %s510 = smul.addr %s509, 8
        %s511 = scalar_lea.vmem %s0, %s510
      $region84: #{transformer_forward.6} parent=79 // pred_fallthru
        _
      // Predicated region
      $region85: #{transformer_forward.6} parent=79 // pred_check
        %p512 = pneg %p70
      $region86: #{transformer_forward.6} parent=79 // pred_check_branch
        %514 = sbr.rel (%p512) target = $region88
      $region87: #{transformer_forward.6} parent=79 // pred_region
        %p515 = scmp.lt.s32.totalorder %s24, 1
        %s516 = scalar_select %p515, %s24, 1
        %s517 = smul.addr %s516, 8
        %s518 = scalar_lea.vmem %s1, %s517
      $region88: #{transformer_forward.6} parent=79 // pred_fallthru
        _
    $region80: #{transformer_forward.6} parent=5 // pred_fallthru
      _
    %p519 = scmp.le.s32.totalorder 1, %s24
    %p520 = scmp.lt.s32.totalorder %s24, 3
    %p521 = pnand %p519, %p520
    %p522 = pneg %p521
    // Predicated region
    $region89: #{transformer_forward.6} parent=5 // pred_check
      _
    $region90: #{transformer_forward.6} parent=5 // pred_check_branch
      %524 = sbr.rel (%p521) target = $region92
    $region91: #{transformer_forward.6} parent=5 // pred_region
      %s525 = ssub.s32 %s24, 1
      %p526 = scmp.lt.s32.totalorder %s29, 1
      %s527 = scalar_select %p526, %s29, 1
      %s528 = smul.addr %s527, 8
      %s529 = scalar_lea.vmem %s0, %s528
      %p530 = pneg %p50
      %p531 = pneg %p47
      %p532 = scmp.lt.s32.totalorder %s29, 1
      %s533 = scalar_select %p532, %s29, 1
      %s534 = smul.addr %s533, 8
      %s535 = scalar_lea.vmem %s1, %s534
      %p536 = pneg %p76
      %p537 = pneg %p73
      %p538 = pneg %p97
      %p539 = pneg %p94
      %p540 = pneg %p118
      %p541 = pneg %p115
      %p542 = pneg %p139
      %p543 = pneg %p136
      %p544 = pneg %p160
      %p545 = pneg %p157
      %p546 = pneg %p181
      %p547 = pneg %p178
      %p548 = pneg %p202
      %p549 = pneg %p199
      %p550 = pneg %p223
      %p551 = pneg %p220
      %p552 = pneg %p244
      %p553 = pneg %p241
      %p554 = pneg %p265
      %p555 = pneg %p262
      %p556 = pneg %p286
      %p557 = pneg %p283
      %p558 = pneg %p307
      %p559 = pneg %p304
      %p560 = pneg %p328
      %p561 = pneg %p325
      %p562 = pneg %p349
      %p563 = pneg %p346
      %p564 = pneg %p370
      %p565 = pneg %p367
      %p566 = pneg %p391
      %p567 = pneg %p388
      %p568 = pneg %p412
      %p569 = pneg %p409
      %p570 = pneg %p438
      %p571 = pneg %p435
      %p572 = scmp.lt.s32.totalorder %s29, 1
      %s573 = scalar_select %p572, %s29, 1
      %s574 = smul.addr %s573, 8
      %s575 = scalar_lea.vmem %s18, %s574
      %p576 = scmp.lt.s32.totalorder %s29, 1
      %s577 = scalar_select %p576, %s29, 1
      %s578 = smul.addr %s577, 8
      %s579 = scalar_lea.vmem %s0, %s578
      %p580 = scmp.lt.s32.totalorder %s29, 1
      %s581 = scalar_select %p580, %s29, 1
      %s582 = smul.addr %s581, 8
      %s583 = scalar_lea.vmem %s1, %s582
      %p584 = scmp.lt.s32.totalorder %s29, 1
      %s585 = scalar_select %p584, %s29, 1
      %s586 = smul.addr %s585, 8
      %s587 = scalar_lea.vmem %s18, %s586
      %v589 = vld [vmem:[%s579] sm:$0xff]
      %v590 = vld [vmem:[%s583] sm:$0xff]
      %v591 = vadd.f32 %v589, %v589
      %v592 = vld [vmem:[%s8] sm:$0x1]
      %v593 = vld [vmem:[%s9] sm:$0x1]
      %vm594 = vcmask 261120
      %v595 = vsel %vm594, %v591, 0.0
      %596 = vadd.xlane.f32.xlu0 %v595
      %v597 = vpop.xlane.xlu0 %596
      %v598 = vrcp.pop 32.0
      %v599 = vmul.f32 %v597, %v598
      %v600 = vsub.f32 %v591, %v599
      %v601 = vmul.f32 %v600, %v600
      %v602 = vsel %vm594, %v601, 0.0
      %603 = vadd.xlane.f32.xlu0 %v602
      %v604 = vpop.xlane.xlu0 %603
      %v605 = vmul.f32 %v604, 0.032258064
      %v606 = vrsqrt.pop %v605
      %v607 = vmul.f32 %v605, %v606
      %vm608 = vcmp.eq.f32.partialorder %v605, inf
      %v609 = vsel %vm608, %v605, %v607
      %vm610 = vcmp.eq.f32.partialorder %v605, 0.0
      %v611 = vand.u32 %v605, 2147483648
      %v612 = vsel %vm610, %v611, %v609
      %v614 = vlaneseq
      %v615 = vshrl.u32 %v614, 7
      %v616 = vsub.s32 0, %v615
      %v617 = vrot.slane %v592, %v616
      %v619 = vmul.f32 %v617, %v600
      %v620 = vadd.f32 %v612, 1e-06
      %v621 = vrcp.pop %v620
      %v622 = vmul.f32 %v619, %v621
      %v624 = vlaneseq
      %v625 = vshrl.u32 %v624, 7
      %v626 = vsub.s32 0, %v625
      %v627 = vrot.slane %v593, %v626
      %v629 = vadd.f32 %v622, %v627
      %v630 = vpack.c.bf16 %v629, %v629
      %v631 = vld [vmem:[%s2] sm:$0xf]
      %v632 = vld [vmem:[%s2 + $0x4] sm:$0xf]
      %v633 = vld [vmem:[%s2 + $0x8] sm:$0xf]
      %v634 = vld [vmem:[%s2 + $0xc] sm:$0xf]
      %v635 = vld [vmem:[%s3] sm:$0x1]
      %v637 = vlaneseq
      %v638 = vshrl.u32 %v637, 7
      %v639 = vsub.s32 0, %v638
      %v640 = vrot.slane %v635, %v639
      %v646 = vunpack.c.l.b16 %v631
      %v647 = vunpack.c.l.b16 %v632
      %v648 = vunpack.c.l.b16 %v633
      %v649 = vunpack.c.l.b16 %v634
      %v650 = vpack.c.b16 %v647, %v646
      %v651 = vpack.c.b16 %v649, %v648
      %v655 = vsel %vm594, %v630, 0
      %657 = vmatprep.subr.bf16.mxu0 0
      %658 = vmatpush1.bf16.msra.mxu0 %v650
      %659 = vmatprep.subr.bf16.mxu0 0
      %660 = vmatpush1.bf16.msra.mxu0 %v651
      %661 = vmatprep.subr.bf16.mxu0 0
      %662 = vmatpush1.bf16.msra.mxu0 0
      %663 = vmatprep.subr.bf16.mxu0 0
      %664 = vmatpush1.bf16.msra.mxu0 0
      %665 = vmatprep.subr.bf16.mxu0 0
      %666 = vmatpush1.bf16.msra.mxu0 0
      %667 = vmatprep.subr.bf16.mxu0 0
      %668 = vmatpush1.bf16.msra.mxu0 0
      %669 = vmatprep.subr.bf16.mxu0 0
      %670 = vmatpush1.bf16.msra.mxu0 0
      %671 = vmatprep.subr.bf16.mxu0 0
      %672 = vmatpush1.bf16.msra.mxu0 0
      %673 = vmatprep.subr.bf16.mxu0 0
      %674 = vmatpush1.bf16.msra.mxu0 0
      %675 = vmatprep.subr.bf16.mxu0 0
      %676 = vmatpush1.bf16.msra.mxu0 0
      %677 = vmatprep.subr.bf16.mxu0 0
      %678 = vmatpush1.bf16.msra.mxu0 0
      %679 = vmatprep.subr.bf16.mxu0 0
      %680 = vmatpush1.bf16.msra.mxu0 0
      %681 = vmatprep.subr.bf16.mxu0 0
      %682 = vmatpush1.bf16.msra.mxu0 0
      %683 = vmatprep.subr.bf16.mxu0 0
      %684 = vmatpush1.bf16.msra.mxu0 0
      %685 = vmatprep.subr.bf16.mxu0 0
      %686 = vmatpush1.bf16.msra.mxu0 0
      %687 = vmatprep.subr.bf16.mxu0 0
      %688 = vmatpush1.bf16.msra.mxu0 0
      %689 = vmatprep.mubr.bf16.mxu0 0
      %690 = vmatmul.mubr.bf16.gmra.mrb[0].mxu0 %v655
      %v691 = vpop.f32.mrb[0].mxu0
      %v692 = vadd.f32 %v640, %v691
      %v693 = vpop.f32.mrb[0].mxu0
      %v694 = vpop.f32.mrb[0].mxu0
      %v695 = vpop.f32.mrb[0].mxu0
      %696 = vdwg.mxu0
      %v697 = vpack.c.bf16 %v590, %v590
      %v698 = vld [vmem:[%s4] sm:$0xf]
      %v699 = vld [vmem:[%s4 + $0x4] sm:$0xf]
      %v700 = vld [vmem:[%s4 + $0x8] sm:$0xf]
      %v701 = vld [vmem:[%s4 + $0xc] sm:$0xf]
      %v702 = vld [vmem:[%s5] sm:$0x1]
      %v704 = vlaneseq
      %v705 = vshrl.u32 %v704, 7
      %v706 = vsub.s32 0, %v705
      %v707 = vrot.slane %v702, %v706
      %v713 = vunpack.c.l.b16 %v698
      %v714 = vunpack.c.l.b16 %v699
      %v715 = vunpack.c.l.b16 %v700
      %v716 = vunpack.c.l.b16 %v701
      %v717 = vpack.c.b16 %v714, %v713
      %v718 = vpack.c.b16 %v716, %v715
      %v722 = vsel %vm594, %v697, 0
      %724 = vmatprep.subr.bf16.mxu0 0
      %725 = vmatpush1.bf16.msra.mxu0 %v717
      %726 = vmatprep.subr.bf16.mxu0 0
      %727 = vmatpush1.bf16.msra.mxu0 %v718
      %728 = vmatprep.subr.bf16.mxu0 0
      %729 = vmatpush1.bf16.msra.mxu0 0
      %730 = vmatprep.subr.bf16.mxu0 0
      %731 = vmatpush1.bf16.msra.mxu0 0
      %732 = vmatprep.subr.bf16.mxu0 0
      %733 = vmatpush1.bf16.msra.mxu0 0
      %734 = vmatprep.subr.bf16.mxu0 0
      %735 = vmatpush1.bf16.msra.mxu0 0
      %736 = vmatprep.subr.bf16.mxu0 0
      %737 = vmatpush1.bf16.msra.mxu0 0
      %738 = vmatprep.subr.bf16.mxu0 0
      %739 = vmatpush1.bf16.msra.mxu0 0
      %740 = vmatprep.subr.bf16.mxu0 0
      %741 = vmatpush1.bf16.msra.mxu0 0
      %742 = vmatprep.subr.bf16.mxu0 0
      %743 = vmatpush1.bf16.msra.mxu0 0
      %744 = vmatprep.subr.bf16.mxu0 0
      %745 = vmatpush1.bf16.msra.mxu0 0
      %746 = vmatprep.subr.bf16.mxu0 0
      %747 = vmatpush1.bf16.msra.mxu0 0
      %748 = vmatprep.subr.bf16.mxu0 0
      %749 = vmatpush1.bf16.msra.mxu0 0
      %750 = vmatprep.subr.bf16.mxu0 0
      %751 = vmatpush1.bf16.msra.mxu0 0
      %752 = vmatprep.subr.bf16.mxu0 0
      %753 = vmatpush1.bf16.msra.mxu0 0
      %754 = vmatprep.subr.bf16.mxu0 0
      %755 = vmatpush1.bf16.msra.mxu0 0
      %756 = vmatprep.mubr.bf16.mxu0 0
      %757 = vmatmul.mubr.bf16.gmra.mrb[0].mxu0 %v722
      %v758 = vpop.f32.mrb[0].mxu0
      %v759 = vadd.f32 %v707, %v758
      %v760 = vpop.f32.mrb[0].mxu0
      %v761 = vpop.f32.mrb[0].mxu0
      %v762 = vpop.f32.mrb[0].mxu0
      %763 = vdwg.mxu0
      %v764 = vpack.c.bf16 %v692, %v692
      %v765 = vpack.c.bf16 %v759, %v759
      %vm766 = vcmask 64512
      %v768 = vsel %vm766, %v764, 0
      %v771 = vsel %vm766, %v765, 0
      %773 = vmatprep.subr.bf16.mxu0 0
      %774 = vmatpush1.bf16.xpose.msra.mxu0 %v771
      %775 = vmatprep.subr.bf16.mxu0 0
      %776 = vmatpush1.bf16.xpose.msra.mxu0 0
      %777 = vmatprep.subr.bf16.mxu0 0
      %778 = vmatpush1.bf16.xpose.msra.mxu0 0
      %779 = vmatprep.subr.bf16.mxu0 0
      %780 = vmatpush1.bf16.xpose.msra.mxu0 0
      %781 = vmatprep.subr.bf16.mxu0 0
      %782 = vmatpush1.bf16.xpose.msra.mxu0 0
      %783 = vmatprep.subr.bf16.mxu0 0
      %784 = vmatpush1.bf16.xpose.msra.mxu0 0
      %785 = vmatprep.subr.bf16.mxu0 0
      %786 = vmatpush1.bf16.xpose.msra.mxu0 0
      %787 = vmatprep.subr.bf16.mxu0 0
      %788 = vmatpush1.bf16.xpose.msra.mxu0 0
      %789 = vmatprep.subr.bf16.mxu0 0
      %790 = vmatpush1.bf16.xpose.msra.mxu0 0
      %791 = vmatprep.subr.bf16.mxu0 0
      %792 = vmatpush1.bf16.xpose.msra.mxu0 0
      %793 = vmatprep.subr.bf16.mxu0 0
      %794 = vmatpush1.bf16.xpose.msra.mxu0 0
      %795 = vmatprep.subr.bf16.mxu0 0
      %796 = vmatpush1.bf16.xpose.msra.mxu0 0
      %797 = vmatprep.subr.bf16.mxu0 0
      %798 = vmatpush1.bf16.xpose.msra.mxu0 0
      %799 = vmatprep.subr.bf16.mxu0 0
      %800 = vmatpush1.bf16.xpose.msra.mxu0 0
      %801 = vmatprep.subr.bf16.mxu0 0
      %802 = vmatpush1.bf16.xpose.msra.mxu0 0
      %803 = vmatprep.subr.bf16.mxu0 0
      %804 = vmatpush1.bf16.xpose.msra.mxu0 0
      %805 = vmatprep.mubr.bf16.mxu0 0
      %806 = vmatmul.mubr.bf16.gmra.mrb[0].mxu0 %v768
      %v807 = vpop.f32.mrb[0].mxu0
      %v808 = vadd.f32 0.0, %v807
      %v809 = vpop.f32.mrb[0].mxu0
      %v810 = vpop.f32.mrb[0].mxu0
      %v811 = vpop.f32.mrb[0].mxu0
      %812 = vdwg.mxu0
      %v813 = vmul.f32 %v808, 0.35355338
      %v814 = vsel %vm766, %v813, -inf
      %815 = vmax.xlane.f32.xlu0 %v814
      %v816 = vpop.xlane.xlu0 %815
      %v817 = vsub.f32 %v813, %v816
      %v818 = vmul.f32 %v817, 1.442695
      %v819 = vpow.pop %v818
      %v820 = vsel %vm766, %v819, 0.0
      %821 = vadd.xlane.f32.xlu0 %v820
      %v822 = vpop.xlane.xlu0 %821
      %v823 = vrcp.pop %v822
      %v824 = vmul.f32 %v819, %v823
      %v825 = vpack.c.bf16 %v824, %v824
      %827 = vrot.lane.b32.xlu0 %v765, 96
      %v828 = vpop.permute.xlu0 %827
      %v830 = vsel %vm766, %v825, 0
      %vm832 = vcmask 1043456
      %v834 = vsel %vm832, %v828, 0
      %836 = vmatprep.subr.bf16.mxu0 0
      %837 = vmatpush1.bf16.msra.mxu0 %v834
      %838 = vmatprep.subr.bf16.mxu0 0
      %839 = vmatpush1.bf16.msra.mxu0 0
      %840 = vmatprep.subr.bf16.mxu0 0
      %841 = vmatpush1.bf16.msra.mxu0 0
      %842 = vmatprep.subr.bf16.mxu0 0
      %843 = vmatpush1.bf16.msra.mxu0 0
      %844 = vmatprep.subr.bf16.mxu0 0
      %845 = vmatpush1.bf16.msra.mxu0 0
      %846 = vmatprep.subr.bf16.mxu0 0
      %847 = vmatpush1.bf16.msra.mxu0 0
      %848 = vmatprep.subr.bf16.mxu0 0
      %849 = vmatpush1.bf16.msra.mxu0 0
      %850 = vmatprep.subr.bf16.mxu0 0
      %851 = vmatpush1.bf16.msra.mxu0 0
      %852 = vmatprep.subr.bf16.mxu0 0
      %853 = vmatpush1.bf16.msra.mxu0 0
      %854 = vmatprep.subr.bf16.mxu0 0
      %855 = vmatpush1.bf16.msra.mxu0 0
      %856 = vmatprep.subr.bf16.mxu0 0
      %857 = vmatpush1.bf16.msra.mxu0 0
      %858 = vmatprep.subr.bf16.mxu0 0
      %859 = vmatpush1.bf16.msra.mxu0 0
      %860 = vmatprep.subr.bf16.mxu0 0
      %861 = vmatpush1.bf16.msra.mxu0 0
      %862 = vmatprep.subr.bf16.mxu0 0
      %863 = vmatpush1.bf16.msra.mxu0 0
      %864 = vmatprep.subr.bf16.mxu0 0
      %865 = vmatpush1.bf16.msra.mxu0 0
      %866 = vmatprep.subr.bf16.mxu0 0
      %867 = vmatpush1.bf16.msra.mxu0 0
      %868 = vmatprep.mubr.bf16.mxu0 0
      %869 = vmatmul.mubr.bf16.gmra.mrb[0].mxu0 %v830
      %v870 = vpop.f32.mrb[0].mxu0
      %v871 = vadd.f32 0.0, %v870
      %v872 = vpop.f32.mrb[0].mxu0
      %v873 = vpop.f32.mrb[0].mxu0
      %v874 = vpop.f32.mrb[0].mxu0
      %875 = vdwg.mxu0
      %877 = vrot.lane.b32.xlu0 %v764, 120
      %v878 = vpop.permute.xlu0 %877
      %879 = vrot.lane.b32.xlu0 %v765, 120
      %v880 = vpop.permute.xlu0 %879
      %v882 = vsel %vm766, %v878, 0
      %v885 = vsel %vm766, %v880, 0
      %887 = vmatprep.subr.bf16.mxu0 0
      %888 = vmatpush1.bf16.xpose.msra.mxu0 %v885
      %889 = vmatprep.subr.bf16.mxu0 0
      %890 = vmatpush1.bf16.xpose.msra.mxu0 0
      %891 = vmatprep.subr.bf16.mxu0 0
      %892 = vmatpush1.bf16.xpose.msra.mxu0 0
      %893 = vmatprep.subr.bf16.mxu0 0
      %894 = vmatpush1.bf16.xpose.msra.mxu0 0
      %895 = vmatprep.subr.bf16.mxu0 0
      %896 = vmatpush1.bf16.xpose.msra.mxu0 0
      %897 = vmatprep.subr.bf16.mxu0 0
      %898 = vmatpush1.bf16.xpose.msra.mxu0 0
      %899 = vmatprep.subr.bf16.mxu0 0
      %900 = vmatpush1.bf16.xpose.msra.mxu0 0
      %901 = vmatprep.subr.bf16.mxu0 0
      %902 = vmatpush1.bf16.xpose.msra.mxu0 0
      %903 = vmatprep.subr.bf16.mxu0 0
      %904 = vmatpush1.bf16.xpose.msra.mxu0 0
      %905 = vmatprep.subr.bf16.mxu0 0
      %906 = vmatpush1.bf16.xpose.msra.mxu0 0
      %907 = vmatprep.subr.bf16.mxu0 0
      %908 = vmatpush1.bf16.xpose.msra.mxu0 0
      %909 = vmatprep.subr.bf16.mxu0 0
      %910 = vmatpush1.bf16.xpose.msra.mxu0 0
      %911 = vmatprep.subr.bf16.mxu0 0
      %912 = vmatpush1.bf16.xpose.msra.mxu0 0
      %913 = vmatprep.subr.bf16.mxu0 0
      %914 = vmatpush1.bf16.xpose.msra.mxu0 0
      %915 = vmatprep.subr.bf16.mxu0 0
      %916 = vmatpush1.bf16.xpose.msra.mxu0 0
      %917 = vmatprep.subr.bf16.mxu0 0
      %918 = vmatpush1.bf16.xpose.msra.mxu0 0
      %919 = vmatprep.mubr.bf16.mxu0 0
      %920 = vmatmul.mubr.bf16.gmra.mrb[0].mxu0 %v882
      %v921 = vpop.f32.mrb[0].mxu0
      %v922 = vadd.f32 0.0, %v921
      %v923 = vpop.f32.mrb[0].mxu0
      %v924 = vpop.f32.mrb[0].mxu0
      %v925 = vpop.f32.mrb[0].mxu0
      %926 = vdwg.mxu0
      %v927 = vmul.f32 %v922, 0.35355338
      %v928 = vsel %vm766, %v927, -inf
      %929 = vmax.xlane.f32.xlu0 %v928
      %v930 = vpop.xlane.xlu0 %929
      %v931 = vsub.f32 %v927, %v930
      %v932 = vmul.f32 %v931, 1.442695
      %v933 = vpow.pop %v932
      %v934 = vsel %vm766, %v933, 0.0
      %935 = vadd.xlane.f32.xlu0 %v934
      %v936 = vpop.xlane.xlu0 %935
      %v937 = vrcp.pop %v936
      %v938 = vmul.f32 %v933, %v937
      %v939 = vpack.c.bf16 %v938, %v938
      %940 = vrot.lane.b32.xlu0 %v765, 88
      %v941 = vpop.permute.xlu0 %940
      %v943 = vsel %vm766, %v939, 0
      %v946 = vsel %vm832, %v941, 0
      %948 = vmatprep.subr.bf16.mxu0 0
      %949 = vmatpush1.bf16.msra.mxu0 %v946
      %950 = vmatprep.subr.bf16.mxu0 0
      %951 = vmatpush1.bf16.msra.mxu0 0
      %952 = vmatprep.subr.bf16.mxu0 0
      %953 = vmatpush1.bf16.msra.mxu0 0
      %954 = vmatprep.subr.bf16.mxu0 0
      %955 = vmatpush1.bf16.msra.mxu0 0
      %956 = vmatprep.subr.bf16.mxu0 0
      %957 = vmatpush1.bf16.msra.mxu0 0
      %958 = vmatprep.subr.bf16.mxu0 0
      %959 = vmatpush1.bf16.msra.mxu0 0
      %960 = vmatprep.subr.bf16.mxu0 0
      %961 = vmatpush1.bf16.msra.mxu0 0
      %962 = vmatprep.subr.bf16.mxu0 0
      %963 = vmatpush1.bf16.msra.mxu0 0
      %964 = vmatprep.subr.bf16.mxu0 0
      %965 = vmatpush1.bf16.msra.mxu0 0
      %966 = vmatprep.subr.bf16.mxu0 0
      %967 = vmatpush1.bf16.msra.mxu0 0
      %968 = vmatprep.subr.bf16.mxu0 0
      %969 = vmatpush1.bf16.msra.mxu0 0
      %970 = vmatprep.subr.bf16.mxu0 0
      %971 = vmatpush1.bf16.msra.mxu0 0
      %972 = vmatprep.subr.bf16.mxu0 0
      %973 = vmatpush1.bf16.msra.mxu0 0
      %974 = vmatprep.subr.bf16.mxu0 0
      %975 = vmatpush1.bf16.msra.mxu0 0
      %976 = vmatprep.subr.bf16.mxu0 0
      %977 = vmatpush1.bf16.msra.mxu0 0
      %978 = vmatprep.subr.bf16.mxu0 0
      %979 = vmatpush1.bf16.msra.mxu0 0
      %980 = vmatprep.mubr.bf16.mxu0 0
      %981 = vmatmul.mubr.bf16.gmra.mrb[0].mxu0 %v943
      %v982 = vpop.f32.mrb[0].mxu0
      %v983 = vadd.f32 0.0, %v982
      %v984 = vpop.f32.mrb[0].mxu0
      %v985 = vpop.f32.mrb[0].mxu0
      %v986 = vpop.f32.mrb[0].mxu0
      %987 = vdwg.mxu0
      %988 = vrot.lane.b32.xlu0 %v764, 112
      %v989 = vpop.permute.xlu0 %988
      %990 = vrot.lane.b32.xlu0 %v765, 112
      %v991 = vpop.permute.xlu0 %990
      %v993 = vsel %vm766, %v989, 0
      %v996 = vsel %vm766, %v991, 0
      %998 = vmatprep.subr.bf16.mxu0 0
      %999 = vmatpush1.bf16.xpose.msra.mxu0 %v996
      %1000 = vmatprep.subr.bf16.mxu0 0
      %1001 = vmatpush1.bf16.xpose.msra.mxu0 0
      %1002 = vmatprep.subr.bf16.mxu0 0
      %1003 = vmatpush1.bf16.xpose.msra.mxu0 0
      %1004 = vmatprep.subr.bf16.mxu0 0
      %1005 = vmatpush1.bf16.xpose.msra.mxu0 0
      %1006 = vmatprep.subr.bf16.mxu0 0
      %1007 = vmatpush1.bf16.xpose.msra.mxu0 0
      %1008 = vmatprep.subr.bf16.mxu0 0
      %1009 = vmatpush1.bf16.xpose.msra.mxu0 0
      %1010 = vmatprep.subr.bf16.mxu0 0
      %1011 = vmatpush1.bf16.xpose.msra.mxu0 0
      %1012 = vmatprep.subr.bf16.mxu0 0
      %1013 = vmatpush1.bf16.xpose.msra.mxu0 0
      %1014 = vmatprep.subr.bf16.mxu0 0
      %1015 = vmatpush1.bf16.xpose.msra.mxu0 0
      %1016 = vmatprep.subr.bf16.mxu0 0
      %1017 = vmatpush1.bf16.xpose.msra.mxu0 0
      %1018 = vmatprep.subr.bf16.mxu0 0
      %1019 = vmatpush1.bf16.xpose.msra.mxu0 0
      %1020 = vmatprep.subr.bf16.mxu0 0
      %1021 = vmatpush1.bf16.xpose.msra.mxu0 0
      %1022 = vmatprep.subr.bf16.mxu0 0
      %1023 = vmatpush1.bf16.xpose.msra.mxu0 0
      %1024 = vmatprep.subr.bf16.mxu0 0
      %1025 = vmatpush1.bf16.xpose.msra.mxu0 0
      %1026 = vmatprep.subr.bf16.mxu0 0
      %1027 = vmatpush1.bf16.xpose.msra.mxu0 0
      %1028 = vmatprep.subr.bf16.mxu0 0
      %1029 = vmatpush1.bf16.xpose.msra.mxu0 0
      %1030 = vmatprep.mubr.bf16.mxu0 0
      %1031 = vmatmul.mubr.bf16.gmra.mrb[0].mxu0 %v993
      %v1032 = vpop.f32.mrb[0].mxu0
      %v1033 = vadd.f32 0.0, %v1032
      %v1034 = vpop.f32.mrb[0].mxu0
      %v1035 = vpop.f32.mrb[0].mxu0
      %v1036 = vpop.f32.mrb[0].mxu0
      %1037 = vdwg.mxu0
      %v1038 = vmul.f32 %v1033, 0.35355338
      %v1039 = vsel %vm766, %v1038, -inf
      %1040 = vmax.xlane.f32.xlu0 %v1039
      %v1041 = vpop.xlane.xlu0 %1040
      %v1042 = vsub.f32 %v1038, %v1041
      %v1043 = vmul.f32 %v1042, 1.442695
      %v1044 = vpow.pop %v1043
      %v1045 = vsel %vm766, %v1044, 0.0
      %1046 = vadd.xlane.f32.xlu0 %v1045
      %v1047 = vpop.xlane.xlu0 %1046
      %v1048 = vrcp.pop %v1047
      %v1049 = vmul.f32 %v1044, %v1048
      %v1050 = vpack.c.bf16 %v1049, %v1049
      %1051 = vrot.lane.b32.xlu0 %v765, 80
      %v1052 = vpop.permute.xlu0 %1051
      %v1054 = vsel %vm766, %v1050, 0
      %v1057 = vsel %vm832, %v1052, 0
      %1059 = vmatprep.subr.bf16.mxu0 0
      %1060 = vmatpush1.bf16.msra.mxu0 %v1057
      %1061 = vmatprep.subr.bf16.mxu0 0
      %1062 = vmatpush1.bf16.msra.mxu0 0
      %1063 = vmatprep.subr.bf16.mxu0 0
      %1064 = vmatpush1.bf16.msra.mxu0 0
      %1065 = vmatprep.subr.bf16.mxu0 0
      %1066 = vmatpush1.bf16.msra.mxu0 0
      %1067 = vmatprep.subr.bf16.mxu0 0
      %1068 = vmatpush1.bf16.msra.mxu0 0
      %1069 = vmatprep.subr.bf16.mxu0 0
      %1070 = vmatpush1.bf16.msra.mxu0 0
      %1071 = vmatprep.subr.bf16.mxu0 0
      %1072 = vmatpush1.bf16.msra.mxu0 0
      %1073 = vmatprep.subr.bf16.mxu0 0
      %1074 = vmatpush1.bf16.msra.mxu0 0
      %1075 = vmatprep.subr.bf16.mxu0 0
      %1076 = vmatpush1.bf16.msra.mxu0 0
      %1077 = vmatprep.subr.bf16.mxu0 0
      %1078 = vmatpush1.bf16.msra.mxu0 0
      %1079 = vmatprep.subr.bf16.mxu0 0
      %1080 = vmatpush1.bf16.msra.mxu0 0
      %1081 = vmatprep.subr.bf16.mxu0 0
      %1082 = vmatpush1.bf16.msra.mxu0 0
      %1083 = vmatprep.subr.bf16.mxu0 0
      %1084 = vmatpush1.bf16.msra.mxu0 0
      %1085 = vmatprep.subr.bf16.mxu0 0
      %1086 = vmatpush1.bf16.msra.mxu0 0
      %1087 = vmatprep.subr.bf16.mxu0 0
      %1088 = vmatpush1.bf16.msra.mxu0 0
      %1089 = vmatprep.subr.bf16.mxu0 0
      %1090 = vmatpush1.bf16.msra.mxu0 0
      %1091 = vmatprep.mubr.bf16.mxu0 0
      %1092 = vmatmul.mubr.bf16.gmra.mrb[0].mxu0 %v1054
      %v1093 = vpop.f32.mrb[0].mxu0
      %v1094 = vadd.f32 0.0, %v1093
      %v1095 = vpop.f32.mrb[0].mxu0
      %v1096 = vpop.f32.mrb[0].mxu0
      %v1097 = vpop.f32.mrb[0].mxu0
      %1098 = vdwg.mxu0
      %1099 = vrot.lane.b32.xlu0 %v764, 104
      %v1100 = vpop.permute.xlu0 %1099
      %1101 = vrot.lane.b32.xlu0 %v765, 104
      %v1102 = vpop.permute.xlu0 %1101
      %v1104 = vsel %vm766, %v1100, 0
      %v1107 = vsel %vm766, %v1102, 0
      %1109 = vmatprep.subr.bf16.mxu0 0
      %1110 = vmatpush1.bf16.xpose.msra.mxu0 %v1107
      %1111 = vmatprep.subr.bf16.mxu0 0
      %1112 = vmatpush1.bf16.xpose.msra.mxu0 0
      %1113 = vmatprep.subr.bf16.mxu0 0
      %1114 = vmatpush1.bf16.xpose.msra.mxu0 0
      %1115 = vmatprep.subr.bf16.mxu0 0
      %1116 = vmatpush1.bf16.xpose.msra.mxu0 0
      %1117 = vmatprep.subr.bf16.mxu0 0
      %1118 = vmatpush1.bf16.xpose.msra.mxu0 0
      %1119 = vmatprep.subr.bf16.mxu0 0
      %1120 = vmatpush1.bf16.xpose.msra.mxu0 0
      %1121 = vmatprep.subr.bf16.mxu0 0
      %1122 = vmatpush1.bf16.xpose.msra.mxu0 0
      %1123 = vmatprep.subr.bf16.mxu0 0
      %1124 = vmatpush1.bf16.xpose.msra.mxu0 0
      %1125 = vmatprep.subr.bf16.mxu0 0
      %1126 = vmatpush1.bf16.xpose.msra.mxu0 0
      %1127 = vmatprep.subr.bf16.mxu0 0
      %1128 = vmatpush1.bf16.xpose.msra.mxu0 0
      %1129 = vmatprep.subr.bf16.mxu0 0
      %1130 = vmatpush1.bf16.xpose.msra.mxu0 0
      %1131 = vmatprep.subr.bf16.mxu0 0
      %1132 = vmatpush1.bf16.xpose.msra.mxu0 0
      %1133 = vmatprep.subr.bf16.mxu0 0
      %1134 = vmatpush1.bf16.xpose.msra.mxu0 0
      %1135 = vmatprep.subr.bf16.mxu0 0
      %1136 = vmatpush1.bf16.xpose.msra.mxu0 0
      %1137 = vmatprep.subr.bf16.mxu0 0
      %1138 = vmatpush1.bf16.xpose.msra.mxu0 0
      %1139 = vmatprep.subr.bf16.mxu0 0
      %1140 = vmatpush1.bf16.xpose.msra.mxu0 0
      %1141 = vmatprep.mubr.bf16.mxu0 0
      %1142 = vmatmul.mubr.bf16.gmra.mrb[0].mxu0 %v1104
      %v1143 = vpop.f32.mrb[0].mxu0
      %v1144 = vadd.f32 0.0, %v1143
      %v1145 = vpop.f32.mrb[0].mxu0
      %v1146 = vpop.f32.mrb[0].mxu0
      %v1147 = vpop.f32.mrb[0].mxu0
      %1148 = vdwg.mxu0
      %v1149 = vmul.f32 %v1144, 0.35355338
      %v1150 = vsel %vm766, %v1149, -inf
      %1151 = vmax.xlane.f32.xlu0 %v1150
      %v1152 = vpop.xlane.xlu0 %1151
      %v1153 = vsub.f32 %v1149, %v1152
      %v1154 = vmul.f32 %v1153, 1.442695
      %v1155 = vpow.pop %v1154
      %v1156 = vsel %vm766, %v1155, 0.0
      %1157 = vadd.xlane.f32.xlu0 %v1156
      %v1158 = vpop.xlane.xlu0 %1157
      %v1159 = vrcp.pop %v1158
      %v1160 = vmul.f32 %v1155, %v1159
      %v1161 = vpack.c.bf16 %v1160, %v1160
      %1162 = vrot.lane.b32.xlu0 %v765, 72
      %v1163 = vpop.permute.xlu0 %1162
      %v1165 = vsel %vm766, %v1161, 0
      %v1168 = vsel %vm832, %v1163, 0
      %1170 = vmatprep.subr.bf16.mxu0 0
      %1171 = vmatpush1.bf16.msra.mxu0 %v1168
      %1172 = vmatprep.subr.bf16.mxu0 0
      %1173 = vmatpush1.bf16.msra.mxu0 0
      %1174 = vmatprep.subr.bf16.mxu0 0
      %1175 = vmatpush1.bf16.msra.mxu0 0
      %1176 = vmatprep.subr.bf16.mxu0 0
      %1177 = vmatpush1.bf16.msra.mxu0 0
      %1178 = vmatprep.subr.bf16.mxu0 0
      %1179 = vmatpush1.bf16.msra.mxu0 0
      %1180 = vmatprep.subr.bf16.mxu0 0
      %1181 = vmatpush1.bf16.msra.mxu0 0
      %1182 = vmatprep.subr.bf16.mxu0 0
      %1183 = vmatpush1.bf16.msra.mxu0 0
      %1184 = vmatprep.subr.bf16.mxu0 0
      %1185 = vmatpush1.bf16.msra.mxu0 0
      %1186 = vmatprep.subr.bf16.mxu0 0
      %1187 = vmatpush1.bf16.msra.mxu0 0
      %1188 = vmatprep.subr.bf16.mxu0 0
      %1189 = vmatpush1.bf16.msra.mxu0 0
      %1190 = vmatprep.subr.bf16.mxu0 0
      %1191 = vmatpush1.bf16.msra.mxu0 0
      %1192 = vmatprep.subr.bf16.mxu0 0
      %1193 = vmatpush1.bf16.msra.mxu0 0
      %1194 = vmatprep.subr.bf16.mxu0 0
      %1195 = vmatpush1.bf16.msra.mxu0 0
      %1196 = vmatprep.subr.bf16.mxu0 0
      %1197 = vmatpush1.bf16.msra.mxu0 0
      %1198 = vmatprep.subr.bf16.mxu0 0
      %1199 = vmatpush1.bf16.msra.mxu0 0
      %1200 = vmatprep.subr.bf16.mxu0 0
      %1201 = vmatpush1.bf16.msra.mxu0 0
      %1202 = vmatprep.mubr.bf16.mxu0 0
      %1203 = vmatmul.mubr.bf16.gmra.mrb[0].mxu0 %v1165
      %v1204 = vpop.f32.mrb[0].mxu0
      %v1205 = vadd.f32 0.0, %v1204
      %v1206 = vpop.f32.mrb[0].mxu0
      %v1207 = vpop.f32.mrb[0].mxu0
      %v1208 = vpop.f32.mrb[0].mxu0
      %1209 = vdwg.mxu0
      %1211 = vrot.lane.b32.xlu0 %v983, 8
      %v1212 = vpop.permute.xlu0 %1211
      %1215 = vrot.lane.b32.xlu0 %v1094, 16
      %v1216 = vpop.permute.xlu0 %1215
      %1219 = vrot.lane.b32.xlu0 %v1205, 24
      %v1220 = vpop.permute.xlu0 %1219
      %v1222 = vsel %vm766, %v871, %v1212
      %vm1223 = vcmask 130048
      %v1224 = vsel %vm1223, %v1222, %v1216
      %vm1225 = vcmask 195584
      %v1226 = vsel %vm1225, %v1224, %v1220
      %v1227 = vpack.c.bf16 %v1226, %v1226
      %v1228 = vld [vmem:[%s6] sm:$0xf]
      %v1229 = vld [vmem:[%s6 + $0x4] sm:$0xf]
      %v1230 = vld [vmem:[%s6 + $0x8] sm:$0xf]
      %v1231 = vld [vmem:[%s6 + $0xc] sm:$0xf]
      %v1232 = vld [vmem:[%s7] sm:$0x1]
      %v1234 = vlaneseq
      %v1235 = vshrl.u32 %v1234, 7
      %v1236 = vsub.s32 0, %v1235
      %v1237 = vrot.slane %v1232, %v1236
      %v1243 = vunpack.c.l.b16 %v1228
      %v1244 = vunpack.c.l.b16 %v1229
      %v1245 = vunpack.c.l.b16 %v1230
      %v1246 = vunpack.c.l.b16 %v1231
      %v1247 = vpack.c.b16 %v1244, %v1243
      %v1248 = vpack.c.b16 %v1246, %v1245
      %v1252 = vsel %vm594, %v1227, 0
      %1254 = vmatprep.subr.bf16.mxu0 0
      %1255 = vmatpush1.bf16.msra.mxu0 %v1247
      %1256 = vmatprep.subr.bf16.mxu0 0
      %1257 = vmatpush1.bf16.msra.mxu0 %v1248
      %1258 = vmatprep.subr.bf16.mxu0 0
      %1259 = vmatpush1.bf16.msra.mxu0 0
      %1260 = vmatprep.subr.bf16.mxu0 0
      %1261 = vmatpush1.bf16.msra.mxu0 0
      %1262 = vmatprep.subr.bf16.mxu0 0
      %1263 = vmatpush1.bf16.msra.mxu0 0
      %1264 = vmatprep.subr.bf16.mxu0 0
      %1265 = vmatpush1.bf16.msra.mxu0 0
      %1266 = vmatprep.subr.bf16.mxu0 0
      %1267 = vmatpush1.bf16.msra.mxu0 0
      %1268 = vmatprep.subr.bf16.mxu0 0
      %1269 = vmatpush1.bf16.msra.mxu0 0
      %1270 = vmatprep.subr.bf16.mxu0 0
      %1271 = vmatpush1.bf16.msra.mxu0 0
      %1272 = vmatprep.subr.bf16.mxu0 0
      %1273 = vmatpush1.bf16.msra.mxu0 0
      %1274 = vmatprep.subr.bf16.mxu0 0
      %1275 = vmatpush1.bf16.msra.mxu0 0
      %1276 = vmatprep.subr.bf16.mxu0 0
      %1277 = vmatpush1.bf16.msra.mxu0 0
      %1278 = vmatprep.subr.bf16.mxu0 0
      %1279 = vmatpush1.bf16.msra.mxu0 0
      %1280 = vmatprep.subr.bf16.mxu0 0
      %1281 = vmatpush1.bf16.msra.mxu0 0
      %1282 = vmatprep.subr.bf16.mxu0 0
      %1283 = vmatpush1.bf16.msra.mxu0 0
      %1284 = vmatprep.subr.bf16.mxu0 0
      %1285 = vmatpush1.bf16.msra.mxu0 0
      %1286 = vmatprep.mubr.bf16.mxu0 0
      %1287 = vmatmul.mubr.bf16.gmra.mrb[0].mxu0 %v1252
      %v1288 = vpop.f32.mrb[0].mxu0
      %v1289 = vadd.f32 %v1237, %v1288
      %v1290 = vpop.f32.mrb[0].mxu0
      %v1291 = vpop.f32.mrb[0].mxu0
      %v1292 = vpop.f32.mrb[0].mxu0
      %1293 = vdwg.mxu0
      %v1294 = vadd.f32 %v629, %v1289
      %v1295 = vld [vmem:[%s10] sm:$0x1]
      %v1296 = vld [vmem:[%s11] sm:$0x1]
      %v1297 = vsel %vm594, %v1294, 0.0
      %1298 = vadd.xlane.f32.xlu0 %v1297
      %v1299 = vpop.xlane.xlu0 %1298
      %v1300 = vmul.f32 %v1299, %v598
      %v1301 = vsub.f32 %v1294, %v1300
      %v1302 = vmul.f32 %v1301, %v1301
      %v1303 = vsel %vm594, %v1302, 0.0
      %1304 = vadd.xlane.f32.xlu0 %v1303
      %v1305 = vpop.xlane.xlu0 %1304
      %v1306 = vmul.f32 %v1305, 0.032258064
      %v1307 = vrsqrt.pop %v1306
      %v1308 = vmul.f32 %v1306, %v1307
      %vm1309 = vcmp.eq.f32.partialorder %v1306, inf
      %v1310 = vsel %vm1309, %v1306, %v1308
      %vm1311 = vcmp.eq.f32.partialorder %v1306, 0.0
      %v1312 = vand.u32 %v1306, 2147483648
      %v1313 = vsel %vm1311, %v1312, %v1310
      %v1315 = vlaneseq
      %v1316 = vshrl.u32 %v1315, 7
      %v1317 = vsub.s32 0, %v1316
      %v1318 = vrot.slane %v1295, %v1317
      %v1320 = vmul.f32 %v1318, %v1301
      %v1321 = vadd.f32 %v1313, 1e-06
      %v1322 = vrcp.pop %v1321
      %v1323 = vmul.f32 %v1320, %v1322
      %v1325 = vlaneseq
      %v1326 = vshrl.u32 %v1325, 7
      %v1327 = vsub.s32 0, %v1326
      %v1328 = vrot.slane %v1296, %v1327
      %v1330 = vadd.f32 %v1323, %v1328
      %v1331 = vpack.c.bf16 %v1330, %v1330
      %v1332 = vld [vmem:[%s12] sm:$0xf]
      %v1333 = vld [vmem:[%s12 + $0x4] sm:$0xf]
      %v1334 = vld [vmem:[%s12 + $0x8] sm:$0xf]
      %v1335 = vld [vmem:[%s12 + $0xc] sm:$0xf]
      %v1336 = vld [vmem:[%s13] sm:$0x1]
      %v1338 = vlaneseq
      %v1339 = vshrl.u32 %v1338, 7
      %v1340 = vsub.s32 0, %v1339
      %v1341 = vrot.slane %v1336, %v1340
      %v1347 = vunpack.c.l.b16 %v1332
      %v1348 = vunpack.c.l.b16 %v1333
      %v1349 = vunpack.c.l.b16 %v1334
      %v1350 = vunpack.c.l.b16 %v1335
      %v1351 = vpack.c.b16 %v1348, %v1347
      %v1352 = vpack.c.b16 %v1350, %v1349
      %v1356 = vsel %vm594, %v1331, 0
      %1358 = vmatprep.subr.bf16.mxu0 0
      %1359 = vmatpush1.bf16.msra.mxu0 %v1351
      %1360 = vmatprep.subr.bf16.mxu0 0
      %1361 = vmatpush1.bf16.msra.mxu0 %v1352
      %1362 = vmatprep.subr.bf16.mxu0 0
      %1363 = vmatpush1.bf16.msra.mxu0 0
      %1364 = vmatprep.subr.bf16.mxu0 0
      %1365 = vmatpush1.bf16.msra.mxu0 0
      %1366 = vmatprep.subr.bf16.mxu0 0
      %1367 = vmatpush1.bf16.msra.mxu0 0
      %1368 = vmatprep.subr.bf16.mxu0 0
      %1369 = vmatpush1.bf16.msra.mxu0 0
      %1370 = vmatprep.subr.bf16.mxu0 0
      %1371 = vmatpush1.bf16.msra.mxu0 0
      %1372 = vmatprep.subr.bf16.mxu0 0
      %1373 = vmatpush1.bf16.msra.mxu0 0
      %1374 = vmatprep.subr.bf16.mxu0 0
      %1375 = vmatpush1.bf16.msra.mxu0 0
      %1376 = vmatprep.subr.bf16.mxu0 0
      %1377 = vmatpush1.bf16.msra.mxu0 0
      %1378 = vmatprep.subr.bf16.mxu0 0
      %1379 = vmatpush1.bf16.msra.mxu0 0
      %1380 = vmatprep.subr.bf16.mxu0 0
      %1381 = vmatpush1.bf16.msra.mxu0 0
      %1382 = vmatprep.subr.bf16.mxu0 0
      %1383 = vmatpush1.bf16.msra.mxu0 0
      %1384 = vmatprep.subr.bf16.mxu0 0
      %1385 = vmatpush1.bf16.msra.mxu0 0
      %1386 = vmatprep.subr.bf16.mxu0 0
      %1387 = vmatpush1.bf16.msra.mxu0 0
      %1388 = vmatprep.subr.bf16.mxu0 0
      %1389 = vmatpush1.bf16.msra.mxu0 0
      %1390 = vmatprep.mubr.bf16.mxu0 0
      %1391 = vmatmul.mubr.bf16.gmra.mrb[0].mxu0 %v1356
      %v1392 = vpop.f32.mrb[0].mxu0
      %v1393 = vadd.f32 %v1341, %v1392
      %v1394 = vpop.f32.mrb[0].mxu0
      %v1395 = vpop.f32.mrb[0].mxu0
      %v1396 = vpop.f32.mrb[0].mxu0
      %1397 = vdwg.mxu0
      %v1398 = vmax.f32 %v1393, 0.0
      %v1399 = vpack.c.bf16 %v1398, %v1398
      %v1400 = vld [vmem:[%s14] sm:$0xf]
      %v1401 = vld [vmem:[%s14 + $0x4] sm:$0xf]
      %v1402 = vld [vmem:[%s14 + $0x8] sm:$0xf]
      %v1403 = vld [vmem:[%s14 + $0xc] sm:$0xf]
      %v1404 = vld [vmem:[%s14 + $0x10] sm:$0xf]
      %v1405 = vld [vmem:[%s14 + $0x14] sm:$0xf]
      %v1406 = vld [vmem:[%s14 + $0x18] sm:$0xf]
      %v1407 = vld [vmem:[%s14 + $0x1c] sm:$0xf]
      %v1408 = vld [vmem:[%s15] sm:$0x1]
      %v1410 = vlaneseq
      %v1411 = vshrl.u32 %v1410, 7
      %v1412 = vsub.s32 0, %v1411
      %v1413 = vrot.slane %v1408, %v1412
      %v1423 = vunpack.c.l.b16 %v1400
      %v1424 = vunpack.c.l.b16 %v1401
      %v1425 = vunpack.c.l.b16 %v1402
      %v1426 = vunpack.c.l.b16 %v1403
      %v1427 = vunpack.c.l.b16 %v1404
      %v1428 = vunpack.c.l.b16 %v1405
      %v1429 = vunpack.c.l.b16 %v1406
      %v1430 = vunpack.c.l.b16 %v1407
      %v1431 = vpack.c.b16 %v1424, %v1423
      %v1432 = vpack.c.b16 %v1426, %v1425
      %v1433 = vpack.c.b16 %v1428, %v1427
      %v1434 = vpack.c.b16 %v1430, %v1429
      %vm1439 = vcmask 523264
      %v1441 = vsel %vm1439, %v1399, 0
      %1443 = vmatprep.subr.bf16.mxu0 0
      %1444 = vmatpush1.bf16.msra.mxu0 %v1431
      %1445 = vmatprep.subr.bf16.mxu0 0
      %1446 = vmatpush1.bf16.msra.mxu0 %v1432
      %1447 = vmatprep.subr.bf16.mxu0 0
      %1448 = vmatpush1.bf16.msra.mxu0 %v1433
      %1449 = vmatprep.subr.bf16.mxu0 0
      %1450 = vmatpush1.bf16.msra.mxu0 %v1434
      %1451 = vmatprep.subr.bf16.mxu0 0
      %1452 = vmatpush1.bf16.msra.mxu0 0
      %1453 = vmatprep.subr.bf16.mxu0 0
      %1454 = vmatpush1.bf16.msra.mxu0 0
      %1455 = vmatprep.subr.bf16.mxu0 0
      %1456 = vmatpush1.bf16.msra.mxu0 0
      %1457 = vmatprep.subr.bf16.mxu0 0
      %1458 = vmatpush1.bf16.msra.mxu0 0
      %1459 = vmatprep.subr.bf16.mxu0 0
      %1460 = vmatpush1.bf16.msra.mxu0 0
      %1461 = vmatprep.subr.bf16.mxu0 0
      %1462 = vmatpush1.bf16.msra.mxu0 0
      %1463 = vmatprep.subr.bf16.mxu0 0
      %1464 = vmatpush1.bf16.msra.mxu0 0
      %1465 = vmatprep.subr.bf16.mxu0 0
      %1466 = vmatpush1.bf16.msra.mxu0 0
      %1467 = vmatprep.subr.bf16.mxu0 0
      %1468 = vmatpush1.bf16.msra.mxu0 0
      %1469 = vmatprep.subr.bf16.mxu0 0
      %1470 = vmatpush1.bf16.msra.mxu0 0
      %1471 = vmatprep.subr.bf16.mxu0 0
      %1472 = vmatpush1.bf16.msra.mxu0 0
      %1473 = vmatprep.subr.bf16.mxu0 0
      %1474 = vmatpush1.bf16.msra.mxu0 0
      %1475 = vmatprep.mubr.bf16.mxu0 0
      %1476 = vmatmul.mubr.bf16.gmra.mrb[0].mxu0 %v1441
      %v1477 = vpop.f32.mrb[0].mxu0
      %v1478 = vadd.f32 %v1413, %v1477
      %v1479 = vpop.f32.mrb[0].mxu0
      %v1480 = vpop.f32.mrb[0].mxu0
      %v1481 = vpop.f32.mrb[0].mxu0
      %1482 = vdwg.mxu0
      %v1483 = vadd.f32 %v1330, %v1478
      %v1484 = vld [vmem:[%s16] sm:$0x1]
      %v1485 = vld [vmem:[%s17] sm:$0x1]
      %v1486 = vsel %vm594, %v1483, 0.0
      %1487 = vadd.xlane.f32.xlu0 %v1486
      %v1488 = vpop.xlane.xlu0 %1487
      %v1489 = vmul.f32 %v1488, %v598
      %v1490 = vsub.f32 %v1483, %v1489
      %v1491 = vmul.f32 %v1490, %v1490
      %v1492 = vsel %vm594, %v1491, 0.0
      %1493 = vadd.xlane.f32.xlu0 %v1492
      %v1494 = vpop.xlane.xlu0 %1493
      %v1495 = vmul.f32 %v1494, 0.032258064
      %v1496 = vrsqrt.pop %v1495
      %v1497 = vmul.f32 %v1495, %v1496
      %vm1498 = vcmp.eq.f32.partialorder %v1495, inf
      %v1499 = vsel %vm1498, %v1495, %v1497
      %vm1500 = vcmp.eq.f32.partialorder %v1495, 0.0
      %v1501 = vand.u32 %v1495, 2147483648
      %v1502 = vsel %vm1500, %v1501, %v1499
      %v1504 = vlaneseq
      %v1505 = vshrl.u32 %v1504, 7
      %v1506 = vsub.s32 0, %v1505
      %v1507 = vrot.slane %v1484, %v1506
      %v1509 = vmul.f32 %v1507, %v1490
      %v1510 = vadd.f32 %v1502, 1e-06
      %v1511 = vrcp.pop %v1510
      %v1512 = vmul.f32 %v1509, %v1511
      %v1514 = vlaneseq
      %v1515 = vshrl.u32 %v1514, 7
      %v1516 = vsub.s32 0, %v1515
      %v1517 = vrot.slane %v1485, %v1516
      %v1519 = vadd.f32 %v1512, %v1517
      %1520 = vst.msk [vmem:[%s587] sm:$0xff] %vm594, %v1519
      %p1521 = scmp.lt.s32.totalorder %s29, 1
      %s1522 = scalar_select %p1521, %s29, 1
      %s1523 = smul.addr %s1522, 8
      %s1524 = scalar_lea.vmem %s18, %s1523
      // Predicated region
      $region93: #{transformer_forward.6} parent=91 // pred_check
        %p1525 = pneg %p435
      $region94: #{transformer_forward.6} parent=91 // pred_check_branch
        %1527 = sbr.rel (%p1525) target = $region96
      $region95: #{transformer_forward.6} parent=91 // pred_region
        _
      $region96: #{transformer_forward.6} parent=91 // pred_fallthru
        _
    $region92: #{transformer_forward.6} parent=5 // pred_fallthru
      _
    %p1528 = scmp.le.s32.totalorder 2, %s24
    // Predicated region
    $region97: #{transformer_forward.6} parent=5 // pred_check
      %p1529 = pneg %p1528
    $region98: #{transformer_forward.6} parent=5 // pred_check_branch
      %1531 = sbr.rel (%p1529) target = $region100
    $region99: #{transformer_forward.6} parent=5 // pred_region
      %s1532 = ssub.s32 %s24, 2
      // Predicated region
      $region101: #{transformer_forward.6} parent=99 // pred_check
        %p1533 = pneg %p441
      $region102: #{transformer_forward.6} parent=99 // pred_check_branch
        %1535 = sbr.rel (%p1533) target = $region104
      $region103: #{transformer_forward.6} parent=99 // pred_region
        %p1536 = scmp.lt.s32.totalorder %s30, 1
        %s1537 = scalar_select %p1536, %s30, 1
        %s1538 = smul.addr %s1537, 8
        %s1539 = scalar_lea.vmem %s18, %s1538
      $region104: #{transformer_forward.6} parent=99 // pred_fallthru
        _
    $region100: #{transformer_forward.6} parent=5 // pred_fallthru
      _
  $region6: #{transformer_forward.6} parent=0 // loop_footer
    %s28 = sadd.s32 1, %s24
  $region7: #{transformer_forward.6} parent=0 // loop_footer_branch
    %23 = sbr.rel target = $region3
  $region8: #{transformer_forward.6} parent=0 // loop_exit
    _

</llo_original>
